<compile_context>
chip_gen: v5e
topology: v5e:2x2
jax: 0.10.0
libtpu: 0.0.40
codegen_flags: <defaults>
</compile_context>

<pallas_src>
from functools import partial

import jax
import jax.numpy as jnp
from jax import lax
from jax.experimental import pallas as pl
from jax.experimental.pallas import tpu as pltpu


def _rup(x, m):
    return ((x + m - 1) // m) * m


def _act(x, act):
    if act == "silu":
        return x * jax.nn.sigmoid(x)
    if act == "relu":
        return jnp.maximum(x, 0.0)
    return x


# --------------------------------------------------------------------------
# Kernel 1: single-shot matmul with fused bias + activation.
# K and N always fit one block in this model, so grid is over M only.
# A/B are bf16 (MXU native), accumulation + epilogue in f32.
# --------------------------------------------------------------------------
def _matmul_kernel(a_ref, b_ref, bias_ref, o_ref, *, act):
    r = jnp.dot(a_ref[...], b_ref[...],
                preferred_element_type=jnp.float32) + bias_ref[...]
    o_ref[...] = _act(r, act).astype(o_ref.dtype)


def pallas_matmul(a, b, bias=None, act="none", tm=256):
    M, K = a.shape
    K2, N = b.shape
    assert K == K2
    if bias is None:
        bias = jnp.zeros((N,), jnp.float32)
    a = a.astype(jnp.bfloat16)
    b = b.astype(jnp.bfloat16)
    bias2d = bias.reshape(1, N).astype(jnp.float32)

    tm = min(tm, M)
    Mp = _rup(M, tm)
    if Mp != M:  # cheap row-only padding fallback (not hit at these shapes)
        a = jnp.zeros((Mp, K), a.dtype).at[:M].set(a)

    out = pl.pallas_call(
        partial(_matmul_kernel, act=act),
        out_shape=jax.ShapeDtypeStruct((Mp, N), jnp.float32),
        grid=(Mp // tm,),
        in_specs=[
            pl.BlockSpec((tm, K), lambda i: (i, 0)),
            pl.BlockSpec((K, N), lambda i: (0, 0)),
            pl.BlockSpec((1, N), lambda i: (0, 0)),
        ],
        out_specs=pl.BlockSpec((tm, N), lambda i: (i, 0)),
        compiler_params=pltpu.CompilerParams(
            dimension_semantics=("parallel",)),
    )(a, b, bias2d)
    return out[:M] if Mp != M else out


# --------------------------------------------------------------------------
# Kernel 2: fused depthwise 3x3 conv (+bias+act) -> pointwise 1x1 conv
# (+bias+act).  Stride is folded into the tap gather (output resolution only,
# no 4x wasted work), so the kernel sees 9 aligned full blocks per batch.
# --------------------------------------------------------------------------
def _dw_pw_kernel(x_ref, dww_ref, dwb_ref, pww_ref, pwb_ref, o_ref,
                  *, dw_act, pw_act):
    Ho, Wo, Cout = o_ref.shape[1], o_ref.shape[2], o_ref.shape[3]
    C = dww_ref.shape[1]
    x = x_ref[0]                      # (9*Ho, Wo, C) f32 taps
    dw_w = dww_ref[...]               # (9, C)
    acc = jnp.zeros((Ho, Wo, C), jnp.float32)
    for t in range(9):
        acc = acc + x[t * Ho:(t + 1) * Ho] * dw_w[t]
    y = _act(acc + dwb_ref[...], dw_act)                     # (Ho, Wo, C) f32
    y = y.reshape(Ho * Wo, C).astype(jnp.bfloat16)
    r = jnp.dot(y, pww_ref[...],
                preferred_element_type=jnp.float32) + pwb_ref[...]
    o_ref[0] = _act(r, pw_act).reshape(Ho, Wo, Cout).astype(o_ref.dtype)


def _dw_taps(x, stride):
    # x: (B, H, W, C) NHWC, pad=1, 3x3 kernel -> taps at output resolution.
    B, H, W, C = x.shape
    xp = jnp.pad(x, ((0, 0), (1, 1), (1, 1), (0, 0)))
    Ho = (H - 1) // stride + 1
    Wo = (W - 1) // stride + 1
    taps = [xp[:, di:di + stride * (Ho - 1) + 1:stride,
               dj:dj + stride * (Wo - 1) + 1:stride, :]
            for di in range(3) for dj in range(3)]
    taps = jnp.stack(taps, axis=1).reshape(B, 9 * Ho, Wo, C)
    return taps, Ho, Wo


def pallas_dw_pw(x, dw_w, dw_b, pw_w, pw_b, stride=1,
                 dw_act="silu", pw_act="none"):
    B, H, W, C = x.shape
    taps, Ho, Wo = _dw_taps(x.astype(jnp.float32), stride)   # (B, 9*Ho, Wo, C)
    Cout = pw_w.shape[1]
    return pl.pallas_call(
        partial(_dw_pw_kernel, dw_act=dw_act, pw_act=pw_act),
        out_shape=jax.ShapeDtypeStruct((B, Ho, Wo, Cout), jnp.float32),
        grid=(B,),
        in_specs=[
            pl.BlockSpec((1, 9 * Ho, Wo, C), lambda b: (b, 0, 0, 0)),
            pl.BlockSpec((9, C), lambda b: (0, 0)),
            pl.BlockSpec((1, C), lambda b: (0, 0)),
            pl.BlockSpec((C, Cout), lambda b: (0, 0)),
            pl.BlockSpec((1, Cout), lambda b: (0, 0)),
        ],
        out_specs=pl.BlockSpec((1, Ho, Wo, Cout), lambda b: (b, 0, 0, 0)),
        compiler_params=pltpu.CompilerParams(
            dimension_semantics=("parallel",)),
    )(taps,
      dw_w.astype(jnp.float32),
      dw_b.reshape(1, C).astype(jnp.float32),
      pw_w.astype(jnp.bfloat16),
      pw_b.reshape(1, Cout).astype(jnp.float32))


# --------------------------------------------------------------------------
# Kernel 3: fused MobileViTV2 transformer block (one pallas_call, grid=(B,)).
# GroupNorm(1) -> separable linear self-attention -> out proj -> residual ->
# GroupNorm(1) -> FFN -> residual -> GroupNorm(1).  Whole per-batch working
# set (P*N tokens x d channels) stays resident in VMEM.
# --------------------------------------------------------------------------
def _mvit_block_kernel(x_ref, n1w, n1b, qw, qb, kw, kb, vw, vb, wo, bo,
                       n2w, n2b, w1, b1, w2, b2, n3w, n3b, o_ref, *, eps):
    P, N, d = x_ref.shape[1], x_ref.shape[2], x_ref.shape[3]
    h = x_ref[0].reshape(P * N, d)                    # (T, d) f32

    def gn(x, w_ref, b_ref):                          # GroupNorm(num_groups=1)
        mu = jnp.mean(x)
        var = jnp.mean((x - mu) ** 2)
        return (x - mu) * lax.rsqrt(var + eps) * w_ref[...] + b_ref[...]

    # --- separable linear self-attention (pre-norm) ---
    hn = gn(h, n1w, n1b)
    hb = hn.astype(jnp.bfloat16)
    q = jnp.sum(hn * qw[...], axis=-1, keepdims=True) + qb[...]             # (T, 1)
    k = jnp.dot(hb, kw[...], preferred_element_type=jnp.float32) + kb[...]  # (T, d)
    v = jnp.dot(hb, vw[...], preferred_element_type=jnp.float32) + vb[...]  # (T, d)
    q = q.reshape(P, N, 1)
    k = k.reshape(P, N, d)
    v = v.reshape(P, N, d)
    m = jnp.max(q, axis=1, keepdims=True)
    e = jnp.exp(q - m)
    scores = e / jnp.sum(e, axis=1, keepdims=True)        # softmax over N patches
    ctx = jnp.sum(k * scores, axis=1, keepdims=True)      # (P, 1, d)
    attn = (jnp.maximum(v, 0.0) * ctx).reshape(P * N, d)
    attn = jnp.dot(attn.astype(jnp.bfloat16), wo[...],
                   preferred_element_type=jnp.float32) + bo[...]
    h = h + attn

    # --- FFN (pre-norm) ---
    hn = gn(h, n2w, n2b)
    f = jnp.dot(hn.astype(jnp.bfloat16), w1[...],
                preferred_element_type=jnp.float32) + b1[...]
    f = _act(f, "silu")
    f = jnp.dot(f.astype(jnp.bfloat16), w2[...],
                preferred_element_type=jnp.float32) + b2[...]
    h = h + f

    # --- final norm ---
    h = gn(h, n3w, n3b)
    o_ref[0] = h.reshape(P, N, d).astype(o_ref.dtype)


def pallas_mvit_transformer(x, p, eps=1e-5):
    # x: (B, P, N, d) f32 tokens
    B, P, N, d = x.shape
    bf = lambda a: a.astype(jnp.bfloat16)
    row = lambda a: a.reshape(1, -1).astype(jnp.float32)
    args = [
        row(p["norm1_w"]), row(p["norm1_b"]),
        row(p["q_w"]), row(p["q_b"]),
        bf(p["k_w"]), row(p["k_b"]),
        bf(p["v_w"]), row(p["v_b"]),
        bf(p["attn_out_w"]), row(p["attn_out_b"]),
        row(p["norm2_w"]), row(p["norm2_b"]),
        bf(p["ffn1_w"]), row(p["ffn1_b"]),
        bf(p["ffn2_w"]), row(p["ffn2_b"]),
        row(p["norm3_w"]), row(p["norm3_b"]),
    ]

    def full_spec(a):
        return pl.BlockSpec(a.shape, lambda b: (0,) * a.ndim)

    in_specs = ([pl.BlockSpec((1, P, N, d), lambda b: (b, 0, 0, 0))]
                + [full_spec(a) for a in args])
    return pl.pallas_call(
        partial(_mvit_block_kernel, eps=eps),
        out_shape=jax.ShapeDtypeStruct((B, P, N, d), jnp.float32),
        grid=(B,),
        in_specs=in_specs,
        out_specs=pl.BlockSpec((1, P, N, d), lambda b: (b, 0, 0, 0)),
        compiler_params=pltpu.CompilerParams(
            dimension_semantics=("parallel",)),
    )(x.astype(jnp.float32), *args)


# --------------------------------------------------------------------------
# Glue: im2col for the 3x3 stride-2 stem conv (patch order kh, kw, cin).
# --------------------------------------------------------------------------
def im2col_3x3(x, stride):
    B, H, W, C = x.shape
    xp = jnp.pad(x, ((0, 0), (1, 1), (1, 1), (0, 0)))
    Ho = (H - 1) // stride + 1
    Wo = (W - 1) // stride + 1
    cols = [xp[:, di:di + stride * (Ho - 1) + 1:stride,
               dj:dj + stride * (Wo - 1) + 1:stride, :]
            for di in range(3) for dj in range(3)]
    return jnp.concatenate(cols, axis=-1)   # (B, Ho, Wo, 9*C)


# --------------------------------------------------------------------------
# Parameters (deterministic synthetic weights; BN folded into conv bias).
# --------------------------------------------------------------------------
C1, C2, D_VIT, HIDDEN = 16, 32, 32, 64   # hidden_size analogue = 64


def init_params(key):
    ks = iter(jax.random.split(key, 32))

    def w(shape, scale=0.05):
        return (scale * jax.random.normal(next(ks), shape)).astype(jnp.float32)

    def b(n):
        return jnp.zeros((n,), jnp.float32)

    return {
        # stem: 3x3 s2 conv, 3 -> C1 (im2col weights, taps x cin = 27)
        "stem_w": w((27, C1)), "stem_b": b(C1),
        # inverted residual (expand 2x, dw s2, project)
        "ir_exp_w": w((C1, 2 * C1)), "ir_exp_b": b(2 * C1),
        "ir_dw_w": w((9, 2 * C1)), "ir_dw_b": b(2 * C1),
        "ir_proj_w": w((2 * C1, C2)), "ir_proj_b": b(C2),
        # MobileViTV2 block: local rep (dw 3x3 + 1x1 to d)
        "local_dw_w": w((9, C2)), "local_dw_b": b(C2),
        "local_pw_w": w((C2, D_VIT)), "local_pw_b": b(D_VIT),
        # transformer layer (pre-norm, separable attention, FFN) — q/k/v split
        "norm1_w": jnp.ones((D_VIT,), jnp.float32), "norm1_b": b(D_VIT),
        "q_w": w((1, D_VIT)), "q_b": b(1),
        "k_w": w((D_VIT, D_VIT)), "k_b": b(D_VIT),
        "v_w": w((D_VIT, D_VIT)), "v_b": b(D_VIT),
        "attn_out_w": w((D_VIT, D_VIT)), "attn_out_b": b(D_VIT),
        "norm2_w": jnp.ones((D_VIT,), jnp.float32), "norm2_b": b(D_VIT),
        "ffn1_w": w((D_VIT, 2 * D_VIT)), "ffn1_b": b(2 * D_VIT),
        "ffn2_w": w((2 * D_VIT, D_VIT)), "ffn2_b": b(D_VIT),
        "norm3_w": jnp.ones((D_VIT,), jnp.float32), "norm3_b": b(D_VIT),
        # final 1x1 projection to hidden size
        "proj_w": w((D_VIT, HIDDEN)), "proj_b": b(HIDDEN),
    }


# --------------------------------------------------------------------------
# VisionTower.forward : (B, 3, H, W) NCHW -> (B, hidden, H/4, W/4) NCHW
# --------------------------------------------------------------------------
def vision_tower_forward(images, params):
    x = jnp.transpose(images.astype(jnp.float32), (0, 2, 3, 1))   # NCHW -> NHWC
    B = x.shape[0]

    # ---- stem: conv 3x3 s2 + (folded BN) + SiLU ----
    cols = im2col_3x3(x, stride=2)
    _, Ho, Wo, KC = cols.shape
    x = pallas_matmul(cols.reshape(B * Ho * Wo, KC),
                      params["stem_w"], params["stem_b"],
                      act="silu").reshape(B, Ho, Wo, C1)

    # ---- inverted residual block (expand 1x1 + SiLU, dw 3x3 s2 + SiLU, project) ----
    B_, H, W, C = x.shape
    y = pallas_matmul(x.reshape(B_ * H * W, C),
                      params["ir_exp_w"], params["ir_exp_b"],
                      act="silu").reshape(B_, H, W, 2 * C1)
    x = pallas_dw_pw(y, params["ir_dw_w"], params["ir_dw_b"],
                     params["ir_proj_w"], params["ir_proj_b"],
                     stride=2, dw_act="silu", pw_act="none")
    B_, H, W, C = x.shape                                   # (B, H/4, W/4, C2)

    # ---- MobileViTV2 block: local representation (dw 3x3 + SiLU, 1x1 -> d) ----
    z = pallas_dw_pw(x, params["local_dw_w"], params["local_dw_b"],
                     params["local_pw_w"], params["local_pw_b"],
                     stride=1, dw_act="silu", pw_act="none")  # (B, H, W, d)

    # unfold into 2x2 patches -> (B, P, N, d)
    ph = pw = 2
    nh, nw = H // ph, W // pw
    P, N = ph * pw, nh * nw
    t = z.reshape(B_, nh, ph, nw, pw, D_VIT)
    t = t.transpose(0, 2, 4, 1, 3, 5).reshape(B_, P, N, D_VIT)

    # fused transformer layer with separable linear self-attention
    h = pallas_mvit_transformer(t, params)

    # fold back to spatial map
    z = h.reshape(B_, ph, pw, nh, nw, D_VIT)
    z = z.transpose(0, 3, 1, 4, 2, 5).reshape(B_, H, W, D_VIT)

    # final 1x1 projection to hidden size
    out = pallas_matmul(z.reshape(B_ * H * W, D_VIT),
                        params["proj_w"], params["proj_b"],
                        act="none").reshape(B_, H, W, HIDDEN)

    # back to NCHW to match torch last_hidden_state (B, C, H', W')
    return jnp.transpose(out, (0, 3, 1, 2))


if __name__ == "__main__":
    key = jax.random.PRNGKey(0)
    k_img, k_par = jax.random.split(key)
    images = jax.random.normal(k_img, (2, 3, 32, 32), dtype=jnp.float32)  # (B,3,H,W)
    params = init_params(k_par)

    fwd = jax.jit(vision_tower_forward)
    feats = fwd(images, params)
    feats = jax.block_until_ready(feats)

    assert feats.shape == (2, HIDDEN, 8, 8), feats.shape
    assert bool(jnp.all(jnp.isfinite(feats)))
    print("KERNEL_OK")
</pallas_src>

<mosaic_0001>
module attributes {stable_mosaic.version = 11 : i64} {
  func.func @_matmul_kernel(%arg0: i32, %arg1: memref<256x27xbf16, #tpu.memory_space<vmem>>, %arg2: memref<27x16xbf16, #tpu.memory_space<vmem>>, %arg3: memref<1x16xf32, #tpu.memory_space<vmem>>, %arg4: memref<256x16xf32, #tpu.memory_space<vmem>>) attributes {dimension_semantics = [#tpu.dimension_semantics<parallel>], iteration_bounds = array<i64: 2>, scalar_prefetch = 0 : i64, scratch_operands = 0 : i64, tpu.core_type = #tpu.core_type<tc>, window_params = [{transform_indices = @transform_0, window_bounds = array<i64: 256, 27>}, {pipeline_mode = #tpu.pipeline_mode<synchronous>, transform_indices = @transform_1, window_bounds = array<i64: 27, 16>}, {pipeline_mode = #tpu.pipeline_mode<synchronous>, transform_indices = @transform_2, window_bounds = array<i64: 1, 16>}, {transform_indices = @transform_3, window_bounds = array<i64: 256, 16>}]} {
    %c0 = arith.constant 0 : index
    %c0_0 = arith.constant 0 : index
    %0 = vector.load %arg1[%c0, %c0_0] : memref<256x27xbf16, #tpu.memory_space<vmem>>, vector<256x27xbf16>
    %c0_1 = arith.constant 0 : index
    %c0_2 = arith.constant 0 : index
    %1 = vector.load %arg2[%c0_1, %c0_2] : memref<27x16xbf16, #tpu.memory_space<vmem>>, vector<27x16xbf16>
    %cst = arith.constant dense<0.000000e+00> : vector<256x16xf32>
    %2 = tpu.matmul %0, %1, %cst {dimension_numbers = #tpu.dot_dimension_numbers<[1], [0], [0], [1], [0, 0, 1, 1], [], []>} : vector<256x27xbf16>, vector<27x16xbf16>, vector<256x16xf32> -> vector<256x16xf32>
    %c0_3 = arith.constant 0 : index
    %c0_4 = arith.constant 0 : index
    %3 = vector.load %arg3[%c0_3, %c0_4] : memref<1x16xf32, #tpu.memory_space<vmem>>, vector<1x16xf32>
    %4 = vector.broadcast %3 : vector<1x16xf32> to vector<256x16xf32>
    %5 = arith.addf %2, %4 : vector<256x16xf32>
    %6 = arith.negf %5 : vector<256x16xf32>
    %7 = math.exp %6 : vector<256x16xf32>
    %cst_5 = arith.constant 1.000000e+00 : f32
    %8 = vector.broadcast %cst_5 : f32 to vector<256x16xf32>
    %9 = arith.addf %8, %7 : vector<256x16xf32>
    %10 = arith.divf %8, %9 : vector<256x16xf32>
    %11 = arith.mulf %5, %10 : vector<256x16xf32>
    %c0_6 = arith.constant 0 : index
    %c0_7 = arith.constant 0 : index
    %12 = vector.load %arg4[%c0_6, %c0_7] : memref<256x16xf32, #tpu.memory_space<vmem>>, vector<256x16xf32>
    tpu.vector_store %arg4[%c0_6, %c0_7], %11 {strides = array<i32>} : memref<256x16xf32, #tpu.memory_space<vmem>>, vector<256x16xf32>,
    return
  }
  func.func @transform_0(%arg0: i32) -> (i32, i32) {
    %c0_i32 = arith.constant 0 : i32
    %c0_i32_0 = arith.constant 0 : i32
    return %arg0, %c0_i32 : i32, i32
  }
  func.func @transform_1(%arg0: i32) -> (i32, i32) {
    %c0_i32 = arith.constant 0 : i32
    %c0_i32_0 = arith.constant 0 : i32
    %c0_i32_1 = arith.constant 0 : i32
    return %c0_i32, %c0_i32_0 : i32, i32
  }
  func.func @transform_2(%arg0: i32) -> (i32, i32) {
    %c0_i32 = arith.constant 0 : i32
    %c0_i32_0 = arith.constant 0 : i32
    %c0_i32_1 = arith.constant 0 : i32
    return %c0_i32, %c0_i32_0 : i32, i32
  }
  func.func @transform_3(%arg0: i32) -> (i32, i32) {
    %c0_i32 = arith.constant 0 : i32
    %c0_i32_0 = arith.constant 0 : i32
    return %arg0, %c0_i32 : i32, i32
  }
}

module attributes {stable_mosaic.version = 11 : i64} {
  func.func @_matmul_kernel(%arg0: i32, %arg1: memref<256x16xbf16, #tpu.memory_space<vmem>>, %arg2: memref<16x32xbf16, #tpu.memory_space<vmem>>, %arg3: memref<1x32xf32, #tpu.memory_space<vmem>>, %arg4: memref<256x32xf32, #tpu.memory_space<vmem>>) attributes {dimension_semantics = [#tpu.dimension_semantics<parallel>], iteration_bounds = array<i64: 2>, scalar_prefetch = 0 : i64, scratch_operands = 0 : i64, tpu.core_type = #tpu.core_type<tc>, window_params = [{transform_indices = @transform_0, window_bounds = array<i64: 256, 16>}, {pipeline_mode = #tpu.pipeline_mode<synchronous>, transform_indices = @transform_1, window_bounds = array<i64: 16, 32>}, {pipeline_mode = #tpu.pipeline_mode<synchronous>, transform_indices = @transform_2, window_bounds = array<i64: 1, 32>}, {transform_indices = @transform_3, window_bounds = array<i64: 256, 32>}]} {
    %c0 = arith.constant 0 : index
    %c0_0 = arith.constant 0 : index
    %0 = vector.load %arg1[%c0, %c0_0] : memref<256x16xbf16, #tpu.memory_space<vmem>>, vector<256x16xbf16>
    %c0_1 = arith.constant 0 : index
    %c0_2 = arith.constant 0 : index
    %1 = vector.load %arg2[%c0_1, %c0_2] : memref<16x32xbf16, #tpu.memory_space<vmem>>, vector<16x32xbf16>
    %cst = arith.constant dense<0.000000e+00> : vector<256x32xf32>
    %2 = tpu.matmul %0, %1, %cst {dimension_numbers = #tpu.dot_dimension_numbers<[1], [0], [0], [1], [0, 0, 1, 1], [], []>} : vector<256x16xbf16>, vector<16x32xbf16>, vector<256x32xf32> -> vector<256x32xf32>
    %c0_3 = arith.constant 0 : index
    %c0_4 = arith.constant 0 : index
    %3 = vector.load %arg3[%c0_3, %c0_4] : memref<1x32xf32, #tpu.memory_space<vmem>>, vector<1x32xf32>
    %4 = vector.broadcast %3 : vector<1x32xf32> to vector<256x32xf32>
    %5 = arith.addf %2, %4 : vector<256x32xf32>
    %6 = arith.negf %5 : vector<256x32xf32>
    %7 = math.exp %6 : vector<256x32xf32>
    %cst_5 = arith.constant 1.000000e+00 : f32
    %8 = vector.broadcast %cst_5 : f32 to vector<256x32xf32>
    %9 = arith.addf %8, %7 : vector<256x32xf32>
    %10 = arith.divf %8, %9 : vector<256x32xf32>
    %11 = arith.mulf %5, %10 : vector<256x32xf32>
    %c0_6 = arith.constant 0 : index
    %c0_7 = arith.constant 0 : index
    %12 = vector.load %arg4[%c0_6, %c0_7] : memref<256x32xf32, #tpu.memory_space<vmem>>, vector<256x32xf32>
    tpu.vector_store %arg4[%c0_6, %c0_7], %11 {strides = array<i32>} : memref<256x32xf32, #tpu.memory_space<vmem>>, vector<256x32xf32>,
    return
  }
  func.func @transform_0(%arg0: i32) -> (i32, i32) {
    %c0_i32 = arith.constant 0 : i32
    %c0_i32_0 = arith.constant 0 : i32
    return %arg0, %c0_i32 : i32, i32
  }
  func.func @transform_1(%arg0: i32) -> (i32, i32) {
    %c0_i32 = arith.constant 0 : i32
    %c0_i32_0 = arith.constant 0 : i32
    %c0_i32_1 = arith.constant 0 : i32
    return %c0_i32, %c0_i32_0 : i32, i32
  }
  func.func @transform_2(%arg0: i32) -> (i32, i32) {
    %c0_i32 = arith.constant 0 : i32
    %c0_i32_0 = arith.constant 0 : i32
    %c0_i32_1 = arith.constant 0 : i32
    return %c0_i32, %c0_i32_0 : i32, i32
  }
  func.func @transform_3(%arg0: i32) -> (i32, i32) {
    %c0_i32 = arith.constant 0 : i32
    %c0_i32_0 = arith.constant 0 : i32
    return %arg0, %c0_i32 : i32, i32
  }
}

module attributes {stable_mosaic.version = 11 : i64} {
  func.func @_dw_pw_kernel(%arg0: i32, %arg1: memref<1x72x8x32xf32, #tpu.memory_space<vmem>>, %arg2: memref<9x32xf32, #tpu.memory_space<vmem>>, %arg3: memref<1x32xf32, #tpu.memory_space<vmem>>, %arg4: memref<32x32xbf16, #tpu.memory_space<vmem>>, %arg5: memref<1x32xf32, #tpu.memory_space<vmem>>, %arg6: memref<1x8x8x32xf32, #tpu.memory_space<vmem>>) attributes {dimension_semantics = [#tpu.dimension_semantics<parallel>], iteration_bounds = array<i64: 2>, scalar_prefetch = 0 : i64, scratch_operands = 0 : i64, tpu.core_type = #tpu.core_type<tc>, window_params = [{transform_indices = @transform_0, window_bounds = array<i64: 1, 72, 8, 32>}, {pipeline_mode = #tpu.pipeline_mode<synchronous>, transform_indices = @transform_1, window_bounds = array<i64: 9, 32>}, {pipeline_mode = #tpu.pipeline_mode<synchronous>, transform_indices = @transform_2, window_bounds = array<i64: 1, 32>}, {pipeline_mode = #tpu.pipeline_mode<synchronous>, transform_indices = @transform_3, window_bounds = array<i64: 32, 32>}, {pipeline_mode = #tpu.pipeline_mode<synchronous>, transform_indices = @transform_4, window_bounds = array<i64: 1, 32>}, {transform_indices = @transform_5, window_bounds = array<i64: 1, 8, 8, 32>}]} {
    %c0 = arith.constant 0 : index
    %c0_0 = arith.constant 0 : index
    %c0_1 = arith.constant 0 : index
    %c0_2 = arith.constant 0 : index
    %0 = vector.load %arg1[%c0, %c0_0, %c0_1, %c0_2] : memref<1x72x8x32xf32, #tpu.memory_space<vmem>>, vector<1x72x8x32xf32>
    %1 = vector.shape_cast %0 : vector<1x72x8x32xf32> to vector<72x8x32xf32>
    %c0_3 = arith.constant 0 : index
    %c0_4 = arith.constant 0 : index
    %2 = vector.load %arg2[%c0_3, %c0_4] : memref<9x32xf32, #tpu.memory_space<vmem>>, vector<9x32xf32>
    %cst = arith.constant 0.000000e+00 : f32
    %3 = vector.broadcast %cst : f32 to vector<8x8x32xf32>
    %4 = vector.extract_strided_slice %1 {offsets = [0, 0, 0], sizes = [8, 8, 32], strides = [1, 1, 1]} : vector<72x8x32xf32> to vector<8x8x32xf32>
    %5 = vector.extract_strided_slice %2 {offsets = [0, 0], sizes = [1, 32], strides = [1, 1]} : vector<9x32xf32> to vector<1x32xf32>
    %6 = vector.shape_cast %5 : vector<1x32xf32> to vector<32xf32>
    %7 = vector.shape_cast %6 : vector<32xf32> to vector<1x1x32xf32>
    %8 = vector.broadcast %7 : vector<1x1x32xf32> to vector<8x8x32xf32>
    %9 = arith.mulf %4, %8 : vector<8x8x32xf32>
    %10 = arith.addf %3, %9 : vector<8x8x32xf32>
    %11 = vector.extract_strided_slice %1 {offsets = [8, 0, 0], sizes = [8, 8, 32], strides = [1, 1, 1]} : vector<72x8x32xf32> to vector<8x8x32xf32>
    %12 = vector.extract_strided_slice %2 {offsets = [1, 0], sizes = [1, 32], strides = [1, 1]} : vector<9x32xf32> to vector<1x32xf32>
    %13 = vector.shape_cast %12 : vector<1x32xf32> to vector<32xf32>
    %14 = vector.shape_cast %13 : vector<32xf32> to vector<1x1x32xf32>
    %15 = vector.broadcast %14 : vector<1x1x32xf32> to vector<8x8x32xf32>
    %16 = arith.mulf %11, %15 : vector<8x8x32xf32>
    %17 = arith.addf %10, %16 : vector<8x8x32xf32>
    %18 = vector.extract_strided_slice %1 {offsets = [16, 0, 0], sizes = [8, 8, 32], strides = [1, 1, 1]} : vector<72x8x32xf32> to vector<8x8x32xf32>
    %19 = vector.extract_strided_slice %2 {offsets = [2, 0], sizes = [1, 32], strides = [1, 1]} : vector<9x32xf32> to vector<1x32xf32>
    %20 = vector.shape_cast %19 : vector<1x32xf32> to vector<32xf32>
    %21 = vector.shape_cast %20 : vector<32xf32> to vector<1x1x32xf32>
    %22 = vector.broadcast %21 : vector<1x1x32xf32> to vector<8x8x32xf32>
    %23 = arith.mulf %18, %22 : vector<8x8x32xf32>
    %24 = arith.addf %17, %23 : vector<8x8x32xf32>
    %25 = vector.extract_strided_slice %1 {offsets = [24, 0, 0], sizes = [8, 8, 32], strides = [1, 1, 1]} : vector<72x8x32xf32> to vector<8x8x32xf32>
    %26 = vector.extract_strided_slice %2 {offsets = [3, 0], sizes = [1, 32], strides = [1, 1]} : vector<9x32xf32> to vector<1x32xf32>
    %27 = vector.shape_cast %26 : vector<1x32xf32> to vector<32xf32>
    %28 = vector.shape_cast %27 : vector<32xf32> to vector<1x1x32xf32>
    %29 = vector.broadcast %28 : vector<1x1x32xf32> to vector<8x8x32xf32>
    %30 = arith.mulf %25, %29 : vector<8x8x32xf32>
    %31 = arith.addf %24, %30 : vector<8x8x32xf32>
    %32 = vector.extract_strided_slice %1 {offsets = [32, 0, 0], sizes = [8, 8, 32], strides = [1, 1, 1]} : vector<72x8x32xf32> to vector<8x8x32xf32>
    %33 = vector.extract_strided_slice %2 {offsets = [4, 0], sizes = [1, 32], strides = [1, 1]} : vector<9x32xf32> to vector<1x32xf32>
    %34 = vector.shape_cast %33 : vector<1x32xf32> to vector<32xf32>
    %35 = vector.shape_cast %34 : vector<32xf32> to vector<1x1x32xf32>
    %36 = vector.broadcast %35 : vector<1x1x32xf32> to vector<8x8x32xf32>
    %37 = arith.mulf %32, %36 : vector<8x8x32xf32>
    %38 = arith.addf %31, %37 : vector<8x8x32xf32>
    %39 = vector.extract_strided_slice %1 {offsets = [40, 0, 0], sizes = [8, 8, 32], strides = [1, 1, 1]} : vector<72x8x32xf32> to vector<8x8x32xf32>
    %40 = vector.extract_strided_slice %2 {offsets = [5, 0], sizes = [1, 32], strides = [1, 1]} : vector<9x32xf32> to vector<1x32xf32>
    %41 = vector.shape_cast %40 : vector<1x32xf32> to vector<32xf32>
    %42 = vector.shape_cast %41 : vector<32xf32> to vector<1x1x32xf32>
    %43 = vector.broadcast %42 : vector<1x1x32xf32> to vector<8x8x32xf32>
    %44 = arith.mulf %39, %43 : vector<8x8x32xf32>
    %45 = arith.addf %38, %44 : vector<8x8x32xf32>
    %46 = vector.extract_strided_slice %1 {offsets = [48, 0, 0], sizes = [8, 8, 32], strides = [1, 1, 1]} : vector<72x8x32xf32> to vector<8x8x32xf32>
    %47 = vector.extract_strided_slice %2 {offsets = [6, 0], sizes = [1, 32], strides = [1, 1]} : vector<9x32xf32> to vector<1x32xf32>
    %48 = vector.shape_cast %47 : vector<1x32xf32> to vector<32xf32>
    %49 = vector.shape_cast %48 : vector<32xf32> to vector<1x1x32xf32>
    %50 = vector.broadcast %49 : vector<1x1x32xf32> to vector<8x8x32xf32>
    %51 = arith.mulf %46, %50 : vector<8x8x32xf32>
    %52 = arith.addf %45, %51 : vector<8x8x32xf32>
    %53 = vector.extract_strided_slice %1 {offsets = [56, 0, 0], sizes = [8, 8, 32], strides = [1, 1, 1]} : vector<72x8x32xf32> to vector<8x8x32xf32>
    %54 = vector.extract_strided_slice %2 {offsets = [7, 0], sizes = [1, 32], strides = [1, 1]} : vector<9x32xf32> to vector<1x32xf32>
    %55 = vector.shape_cast %54 : vector<1x32xf32> to vector<32xf32>
    %56 = vector.shape_cast %55 : vector<32xf32> to vector<1x1x32xf32>
    %57 = vector.broadcast %56 : vector<1x1x32xf32> to vector<8x8x32xf32>
    %58 = arith.mulf %53, %57 : vector<8x8x32xf32>
    %59 = arith.addf %52, %58 : vector<8x8x32xf32>
    %60 = vector.extract_strided_slice %1 {offsets = [64, 0, 0], sizes = [8, 8, 32], strides = [1, 1, 1]} : vector<72x8x32xf32> to vector<8x8x32xf32>
    %61 = vector.extract_strided_slice %2 {offsets = [8, 0], sizes = [1, 32], strides = [1, 1]} : vector<9x32xf32> to vector<1x32xf32>
    %62 = vector.shape_cast %61 : vector<1x32xf32> to vector<32xf32>
    %63 = vector.shape_cast %62 : vector<32xf32> to vector<1x1x32xf32>
    %64 = vector.broadcast %63 : vector<1x1x32xf32> to vector<8x8x32xf32>
    %65 = arith.mulf %60, %64 : vector<8x8x32xf32>
    %66 = arith.addf %59, %65 : vector<8x8x32xf32>
    %c0_5 = arith.constant 0 : index
    %c0_6 = arith.constant 0 : index
    %67 = vector.load %arg3[%c0_5, %c0_6] : memref<1x32xf32, #tpu.memory_space<vmem>>, vector<1x32xf32>
    %68 = vector.shape_cast %67 : vector<1x32xf32> to vector<1x1x32xf32>
    %69 = vector.broadcast %68 : vector<1x1x32xf32> to vector<8x8x32xf32>
    %70 = arith.addf %66, %69 : vector<8x8x32xf32>
    %71 = arith.negf %70 : vector<8x8x32xf32>
    %72 = math.exp %71 : vector<8x8x32xf32>
    %cst_7 = arith.constant 1.000000e+00 : f32
    %73 = vector.broadcast %cst_7 : f32 to vector<8x8x32xf32>
    %74 = arith.addf %73, %72 : vector<8x8x32xf32>
    %75 = arith.divf %73, %74 : vector<8x8x32xf32>
    %76 = arith.mulf %70, %75 : vector<8x8x32xf32>
    %77 = vector.shape_cast %76 : vector<8x8x32xf32> to vector<64x32xf32>
    %78 = arith.truncf %77 : vector<64x32xf32> to vector<64x32xbf16>
    %c0_8 = arith.constant 0 : index
    %c0_9 = arith.constant 0 : index
    %79 = vector.load %arg4[%c0_8, %c0_9] : memref<32x32xbf16, #tpu.memory_space<vmem>>, vector<32x32xbf16>
    %cst_10 = arith.constant dense<0.000000e+00> : vector<64x32xf32>
    %80 = tpu.matmul %78, %79, %cst_10 {dimension_numbers = #tpu.dot_dimension_numbers<[1], [0], [0], [1], [0, 0, 1, 1], [], []>} : vector<64x32xbf16>, vector<32x32xbf16>, vector<64x32xf32> -> vector<64x32xf32>
    %c0_11 = arith.constant 0 : index
    %c0_12 = arith.constant 0 : index
    %81 = vector.load %arg5[%c0_11, %c0_12] : memref<1x32xf32, #tpu.memory_space<vmem>>, vector<1x32xf32>
    %82 = vector.broadcast %81 : vector<1x32xf32> to vector<64x32xf32>
    %83 = arith.addf %80, %82 : vector<64x32xf32>
    %84 = vector.shape_cast %83 : vector<64x32xf32> to vector<8x8x32xf32>
    %c0_13 = arith.constant 0 : index
    %c0_14 = arith.constant 0 : index
    %c0_15 = arith.constant 0 : index
    %c0_16 = arith.constant 0 : index
    %85 = vector.load %arg6[%c0_13, %c0_14, %c0_15, %c0_16] : memref<1x8x8x32xf32, #tpu.memory_space<vmem>>, vector<1x8x8x32xf32>
    %86 = vector.shape_cast %85 : vector<1x8x8x32xf32> to vector<8x8x32xf32>
    %87 = vector.shape_cast %84 : vector<8x8x32xf32> to vector<1x8x8x32xf32>
    tpu.vector_store %arg6[%c0_13, %c0_14, %c0_15, %c0_16], %87 {strides = array<i32>} : memref<1x8x8x32xf32, #tpu.memory_space<vmem>>, vector<1x8x8x32xf32>,
    return
  }
  func.func @transform_0(%arg0: i32) -> (i32, i32, i32, i32) {
    %c0_i32 = arith.constant 0 : i32
    %c0_i32_0 = arith.constant 0 : i32
    %c0_i32_1 = arith.constant 0 : i32
    %c0_i32_2 = arith.constant 0 : i32
    return %arg0, %c0_i32, %c0_i32_0, %c0_i32_1 : i32, i32, i32, i32
  }
  func.func @transform_1(%arg0: i32) -> (i32, i32) {
    %c0_i32 = arith.constant 0 : i32
    %c0_i32_0 = arith.constant 0 : i32
    %c0_i32_1 = arith.constant 0 : i32
    return %c0_i32, %c0_i32_0 : i32, i32
  }
  func.func @transform_2(%arg0: i32) -> (i32, i32) {
    %c0_i32 = arith.constant 0 : i32
    %c0_i32_0 = arith.constant 0 : i32
    %c0_i32_1 = arith.constant 0 : i32
    return %c0_i32, %c0_i32_0 : i32, i32
  }
  func.func @transform_3(%arg0: i32) -> (i32, i32) {
    %c0_i32 = arith.constant 0 : i32
    %c0_i32_0 = arith.constant 0 : i32
    %c0_i32_1 = arith.constant 0 : i32
    return %c0_i32, %c0_i32_0 : i32, i32
  }
  func.func @transform_4(%arg0: i32) -> (i32, i32) {
    %c0_i32 = arith.constant 0 : i32
    %c0_i32_0 = arith.constant 0 : i32
    %c0_i32_1 = arith.constant 0 : i32
    return %c0_i32, %c0_i32_0 : i32, i32
  }
  func.func @transform_5(%arg0: i32) -> (i32, i32, i32, i32) {
    %c0_i32 = arith.constant 0 : i32
    %c0_i32_0 = arith.constant 0 : i32
    %c0_i32_1 = arith.constant 0 : i32
    %c0_i32_2 = arith.constant 0 : i32
    return %arg0, %c0_i32, %c0_i32_0, %c0_i32_1 : i32, i32, i32, i32
  }
}

module attributes {stable_mosaic.version = 11 : i64} {
  func.func @_mvit_block_kernel(%arg0: i32, %arg1: memref<1x4x16x32xf32, #tpu.memory_space<vmem>>, %arg2: memref<1x32xf32, #tpu.memory_space<vmem>>, %arg3: memref<1x32xf32, #tpu.memory_space<vmem>>, %arg4: memref<1x32xf32, #tpu.memory_space<vmem>>, %arg5: memref<1x1xf32, #tpu.memory_space<vmem>>, %arg6: memref<32x32xbf16, #tpu.memory_space<vmem>>, %arg7: memref<1x32xf32, #tpu.memory_space<vmem>>, %arg8: memref<32x32xbf16, #tpu.memory_space<vmem>>, %arg9: memref<1x32xf32, #tpu.memory_space<vmem>>, %arg10: memref<32x32xbf16, #tpu.memory_space<vmem>>, %arg11: memref<1x32xf32, #tpu.memory_space<vmem>>, %arg12: memref<1x32xf32, #tpu.memory_space<vmem>>, %arg13: memref<1x32xf32, #tpu.memory_space<vmem>>, %arg14: memref<32x64xbf16, #tpu.memory_space<vmem>>, %arg15: memref<1x64xf32, #tpu.memory_space<vmem>>, %arg16: memref<64x32xbf16, #tpu.memory_space<vmem>>, %arg17: memref<1x32xf32, #tpu.memory_space<vmem>>, %arg18: memref<1x32xf32, #tpu.memory_space<vmem>>, %arg19: memref<1x32xf32, #tpu.memory_space<vmem>>, %arg20: memref<1x4x16x32xf32, #tpu.memory_space<vmem>>) attributes {dimension_semantics = [#tpu.dimension_semantics<parallel>], iteration_bounds = array<i64: 2>, scalar_prefetch = 0 : i64, scratch_operands = 0 : i64, tpu.core_type = #tpu.core_type<tc>, window_params = [{transform_indices = @transform_0, window_bounds = array<i64: 1, 4, 16, 32>}, {pipeline_mode = #tpu.pipeline_mode<synchronous>, transform_indices = @transform_1, window_bounds = array<i64: 1, 32>}, {pipeline_mode = #tpu.pipeline_mode<synchronous>, transform_indices = @transform_2, window_bounds = array<i64: 1, 32>}, {pipeline_mode = #tpu.pipeline_mode<synchronous>, transform_indices = @transform_3, window_bounds = array<i64: 1, 32>}, {pipeline_mode = #tpu.pipeline_mode<synchronous>, transform_indices = @transform_4, window_bounds = array<i64: 1, 1>}, {pipeline_mode = #tpu.pipeline_mode<synchronous>, transform_indices = @transform_5, window_bounds = array<i64: 32, 32>}, {pipeline_mode = #tpu.pipeline_mode<synchronous>, transform_indices = @transform_6, window_bounds = array<i64: 1, 32>}, {pipeline_mode = #tpu.pipeline_mode<synchronous>, transform_indices = @transform_7, window_bounds = array<i64: 32, 32>}, {pipeline_mode = #tpu.pipeline_mode<synchronous>, transform_indices = @transform_8, window_bounds = array<i64: 1, 32>}, {pipeline_mode = #tpu.pipeline_mode<synchronous>, transform_indices = @transform_9, window_bounds = array<i64: 32, 32>}, {pipeline_mode = #tpu.pipeline_mode<synchronous>, transform_indices = @transform_10, window_bounds = array<i64: 1, 32>}, {pipeline_mode = #tpu.pipeline_mode<synchronous>, transform_indices = @transform_11, window_bounds = array<i64: 1, 32>}, {pipeline_mode = #tpu.pipeline_mode<synchronous>, transform_indices = @transform_12, window_bounds = array<i64: 1, 32>}, {pipeline_mode = #tpu.pipeline_mode<synchronous>, transform_indices = @transform_13, window_bounds = array<i64: 32, 64>}, {pipeline_mode = #tpu.pipeline_mode<synchronous>, transform_indices = @transform_14, window_bounds = array<i64: 1, 64>}, {pipeline_mode = #tpu.pipeline_mode<synchronous>, transform_indices = @transform_15, window_bounds = array<i64: 64, 32>}, {pipeline_mode = #tpu.pipeline_mode<synchronous>, transform_indices = @transform_16, window_bounds = array<i64: 1, 32>}, {pipeline_mode = #tpu.pipeline_mode<synchronous>, transform_indices = @transform_17, window_bounds = array<i64: 1, 32>}, {pipeline_mode = #tpu.pipeline_mode<synchronous>, transform_indices = @transform_18, window_bounds = array<i64: 1, 32>}, {transform_indices = @transform_19, window_bounds = array<i64: 1, 4, 16, 32>}]} {
    %c0 = arith.constant 0 : index
    %c0_0 = arith.constant 0 : index
    %c0_1 = arith.constant 0 : index
    %c0_2 = arith.constant 0 : index
    %0 = vector.load %arg1[%c0, %c0_0, %c0_1, %c0_2] : memref<1x4x16x32xf32, #tpu.memory_space<vmem>>, vector<1x4x16x32xf32>
    %1 = vector.shape_cast %0 : vector<1x4x16x32xf32> to vector<4x16x32xf32>
    %2 = vector.shape_cast %1 : vector<4x16x32xf32> to vector<64x32xf32>
    %3 = vector.shape_cast %2 : vector<64x32xf32> to vector<1x64x32xf32>
    %cst = arith.constant dense<0.000000e+00> : vector<1xf32>
    %4 = vector.multi_reduction <add>, %3, %cst [1, 2] : vector<1x64x32xf32> to vector<1xf32>
    %5 = vector.shape_cast %4 : vector<1xf32> to vector<1x1x1xf32>
    %6 = vector.extract %5[0, 0, 0] : f32 from vector<1x1x1xf32>
    %cst_3 = arith.constant 2.048000e+03 : f32
    %7 = arith.divf %6, %cst_3 : f32
    %8 = vector.broadcast %7 : f32 to vector<64x32xf32>
    %9 = arith.subf %2, %8 : vector<64x32xf32>
    %10 = arith.mulf %9, %9 : vector<64x32xf32>
    %11 = vector.shape_cast %10 : vector<64x32xf32> to vector<1x64x32xf32>
    %cst_4 = arith.constant dense<0.000000e+00> : vector<1xf32>
    %12 = vector.multi_reduction <add>, %11, %cst_4 [1, 2] : vector<1x64x32xf32> to vector<1xf32>
    %13 = vector.shape_cast %12 : vector<1xf32> to vector<1x1x1xf32>
    %14 = vector.extract %13[0, 0, 0] : f32 from vector<1x1x1xf32>
    %cst_5 = arith.constant 2.048000e+03 : f32
    %15 = arith.divf %14, %cst_5 : f32
    %16 = vector.broadcast %7 : f32 to vector<64x32xf32>
    %17 = arith.subf %2, %16 : vector<64x32xf32>
    %cst_6 = arith.constant 9.99999974E-6 : f32
    %18 = arith.addf %15, %cst_6 : f32
    %19 = math.rsqrt %18 : f32
    %20 = vector.broadcast %19 : f32 to vector<64x32xf32>
    %21 = arith.mulf %17, %20 : vector<64x32xf32>
    %c0_7 = arith.constant 0 : index
    %c0_8 = arith.constant 0 : index
    %22 = vector.load %arg2[%c0_7, %c0_8] : memref<1x32xf32, #tpu.memory_space<vmem>>, vector<1x32xf32>
    %23 = vector.broadcast %22 : vector<1x32xf32> to vector<64x32xf32>
    %24 = arith.mulf %21, %23 : vector<64x32xf32>
    %c0_9 = arith.constant 0 : index
    %c0_10 = arith.constant 0 : index
    %25 = vector.load %arg3[%c0_9, %c0_10] : memref<1x32xf32, #tpu.memory_space<vmem>>, vector<1x32xf32>
    %26 = vector.broadcast %25 : vector<1x32xf32> to vector<64x32xf32>
    %27 = arith.addf %24, %26 : vector<64x32xf32>
    %28 = arith.truncf %27 : vector<64x32xf32> to vector<64x32xbf16>
    %c0_11 = arith.constant 0 : index
    %c0_12 = arith.constant 0 : index
    %29 = vector.load %arg4[%c0_11, %c0_12] : memref<1x32xf32, #tpu.memory_space<vmem>>, vector<1x32xf32>
    %30 = vector.broadcast %29 : vector<1x32xf32> to vector<64x32xf32>
    %31 = arith.mulf %27, %30 : vector<64x32xf32>
    %cst_13 = arith.constant dense<0.000000e+00> : vector<64xf32>
    %32 = vector.multi_reduction <add>, %31, %cst_13 [1] : vector<64x32xf32> to vector<64xf32>
    %33 = vector.shape_cast %32 : vector<64xf32> to vector<64x1xf32>
    %c0_14 = arith.constant 0 : index
    %c0_15 = arith.constant 0 : index
    %34 = vector.load %arg5[%c0_14, %c0_15] : memref<1x1xf32, #tpu.memory_space<vmem>>, vector<1x1xf32>
    %35 = vector.broadcast %34 : vector<1x1xf32> to vector<64x1xf32>
    %36 = arith.addf %33, %35 : vector<64x1xf32>
    %c0_16 = arith.constant 0 : index
    %c0_17 = arith.constant 0 : index
    %37 = vector.load %arg6[%c0_16, %c0_17] : memref<32x32xbf16, #tpu.memory_space<vmem>>, vector<32x32xbf16>
    %cst_18 = arith.constant dense<0.000000e+00> : vector<64x32xf32>
    %38 = tpu.matmul %28, %37, %cst_18 {dimension_numbers = #tpu.dot_dimension_numbers<[1], [0], [0], [1], [0, 0, 1, 1], [], []>} : vector<64x32xbf16>, vector<32x32xbf16>, vector<64x32xf32> -> vector<64x32xf32>
    %c0_19 = arith.constant 0 : index
    %c0_20 = arith.constant 0 : index
    %39 = vector.load %arg7[%c0_19, %c0_20] : memref<1x32xf32, #tpu.memory_space<vmem>>, vector<1x32xf32>
    %40 = vector.broadcast %39 : vector<1x32xf32> to vector<64x32xf32>
    %41 = arith.addf %38, %40 : vector<64x32xf32>
    %c0_21 = arith.constant 0 : index
    %c0_22 = arith.constant 0 : index
    %42 = vector.load %arg8[%c0_21, %c0_22] : memref<32x32xbf16, #tpu.memory_space<vmem>>, vector<32x32xbf16>
    %cst_23 = arith.constant dense<0.000000e+00> : vector<64x32xf32>
    %43 = tpu.matmul %28, %42, %cst_23 {dimension_numbers = #tpu.dot_dimension_numbers<[1], [0], [0], [1], [0, 0, 1, 1], [], []>} : vector<64x32xbf16>, vector<32x32xbf16>, vector<64x32xf32> -> vector<64x32xf32>
    %c0_24 = arith.constant 0 : index
    %c0_25 = arith.constant 0 : index
    %44 = vector.load %arg9[%c0_24, %c0_25] : memref<1x32xf32, #tpu.memory_space<vmem>>, vector<1x32xf32>
    %45 = vector.broadcast %44 : vector<1x32xf32> to vector<64x32xf32>
    %46 = arith.addf %43, %45 : vector<64x32xf32>
    %47 = vector.shape_cast %36 : vector<64x1xf32> to vector<4x16x1xf32>
    %48 = vector.shape_cast %41 : vector<64x32xf32> to vector<4x16x32xf32>
    %49 = vector.shape_cast %46 : vector<64x32xf32> to vector<4x16x32xf32>
    %cst_26 = arith.constant dense<0xFF800000> : vector<4x1xf32>
    %50 = vector.multi_reduction <maximumf>, %47, %cst_26 [1] : vector<4x16x1xf32> to vector<4x1xf32>
    %51 = vector.shape_cast %50 : vector<4x1xf32> to vector<4x1x1xf32>
    %52 = vector.broadcast %51 : vector<4x1x1xf32> to vector<4x16x1xf32>
    %53 = arith.subf %47, %52 : vector<4x16x1xf32>
    %54 = math.exp %53 : vector<4x16x1xf32>
    %cst_27 = arith.constant dense<0.000000e+00> : vector<4x1xf32>
    %55 = vector.multi_reduction <add>, %54, %cst_27 [1] : vector<4x16x1xf32> to vector<4x1xf32>
    %56 = vector.shape_cast %55 : vector<4x1xf32> to vector<4x1x1xf32>
    %57 = vector.broadcast %56 : vector<4x1x1xf32> to vector<4x16x1xf32>
    %58 = arith.divf %54, %57 : vector<4x16x1xf32>
    %59 = vector.broadcast %58 : vector<4x16x1xf32> to vector<4x16x32xf32>
    %60 = arith.mulf %48, %59 : vector<4x16x32xf32>
    %cst_28 = arith.constant dense<0.000000e+00> : vector<4x32xf32>
    %61 = vector.multi_reduction <add>, %60, %cst_28 [1] : vector<4x16x32xf32> to vector<4x32xf32>
    %62 = vector.shape_cast %61 : vector<4x32xf32> to vector<4x1x32xf32>
    %cst_29 = arith.constant 0.000000e+00 : f32
    %63 = vector.broadcast %cst_29 : f32 to vector<4x16x32xf32>
    %64 = arith.maximumf %49, %63 : vector<4x16x32xf32>
    %65 = vector.broadcast %62 : vector<4x1x32xf32> to vector<4x16x32xf32>
    %66 = arith.mulf %64, %65 : vector<4x16x32xf32>
    %67 = vector.shape_cast %66 : vector<4x16x32xf32> to vector<64x32xf32>
    %68 = arith.truncf %67 : vector<64x32xf32> to vector<64x32xbf16>
    %c0_30 = arith.constant 0 : index
    %c0_31 = arith.constant 0 : index
    %69 = vector.load %arg10[%c0_30, %c0_31] : memref<32x32xbf16, #tpu.memory_space<vmem>>, vector<32x32xbf16>
    %cst_32 = arith.constant dense<0.000000e+00> : vector<64x32xf32>
    %70 = tpu.matmul %68, %69, %cst_32 {dimension_numbers = #tpu.dot_dimension_numbers<[1], [0], [0], [1], [0, 0, 1, 1], [], []>} : vector<64x32xbf16>, vector<32x32xbf16>, vector<64x32xf32> -> vector<64x32xf32>
    %c0_33 = arith.constant 0 : index
    %c0_34 = arith.constant 0 : index
    %71 = vector.load %arg11[%c0_33, %c0_34] : memref<1x32xf32, #tpu.memory_space<vmem>>, vector<1x32xf32>
    %72 = vector.broadcast %71 : vector<1x32xf32> to vector<64x32xf32>
    %73 = arith.addf %70, %72 : vector<64x32xf32>
    %74 = arith.addf %2, %73 : vector<64x32xf32>
    %75 = vector.shape_cast %74 : vector<64x32xf32> to vector<1x64x32xf32>
    %cst_35 = arith.constant dense<0.000000e+00> : vector<1xf32>
    %76 = vector.multi_reduction <add>, %75, %cst_35 [1, 2] : vector<1x64x32xf32> to vector<1xf32>
    %77 = vector.shape_cast %76 : vector<1xf32> to vector<1x1x1xf32>
    %78 = vector.extract %77[0, 0, 0] : f32 from vector<1x1x1xf32>
    %cst_36 = arith.constant 2.048000e+03 : f32
    %79 = arith.divf %78, %cst_36 : f32
    %80 = vector.broadcast %79 : f32 to vector<64x32xf32>
    %81 = arith.subf %74, %80 : vector<64x32xf32>
    %82 = arith.mulf %81, %81 : vector<64x32xf32>
    %83 = vector.shape_cast %82 : vector<64x32xf32> to vector<1x64x32xf32>
    %cst_37 = arith.constant dense<0.000000e+00> : vector<1xf32>
    %84 = vector.multi_reduction <add>, %83, %cst_37 [1, 2] : vector<1x64x32xf32> to vector<1xf32>
    %85 = vector.shape_cast %84 : vector<1xf32> to vector<1x1x1xf32>
    %86 = vector.extract %85[0, 0, 0] : f32 from vector<1x1x1xf32>
    %cst_38 = arith.constant 2.048000e+03 : f32
    %87 = arith.divf %86, %cst_38 : f32
    %88 = vector.broadcast %79 : f32 to vector<64x32xf32>
    %89 = arith.subf %74, %88 : vector<64x32xf32>
    %cst_39 = arith.constant 9.99999974E-6 : f32
    %90 = arith.addf %87, %cst_39 : f32
    %91 = math.rsqrt %90 : f32
    %92 = vector.broadcast %91 : f32 to vector<64x32xf32>
    %93 = arith.mulf %89, %92 : vector<64x32xf32>
    %c0_40 = arith.constant 0 : index
    %c0_41 = arith.constant 0 : index
    %94 = vector.load %arg12[%c0_40, %c0_41] : memref<1x32xf32, #tpu.memory_space<vmem>>, vector<1x32xf32>
    %95 = vector.broadcast %94 : vector<1x32xf32> to vector<64x32xf32>
    %96 = arith.mulf %93, %95 : vector<64x32xf32>
    %c0_42 = arith.constant 0 : index
    %c0_43 = arith.constant 0 : index
    %97 = vector.load %arg13[%c0_42, %c0_43] : memref<1x32xf32, #tpu.memory_space<vmem>>, vector<1x32xf32>
    %98 = vector.broadcast %97 : vector<1x32xf32> to vector<64x32xf32>
    %99 = arith.addf %96, %98 : vector<64x32xf32>
    %100 = arith.truncf %99 : vector<64x32xf32> to vector<64x32xbf16>
    %c0_44 = arith.constant 0 : index
    %c0_45 = arith.constant 0 : index
    %101 = vector.load %arg14[%c0_44, %c0_45] : memref<32x64xbf16, #tpu.memory_space<vmem>>, vector<32x64xbf16>
    %cst_46 = arith.constant dense<0.000000e+00> : vector<64x64xf32>
    %102 = tpu.matmul %100, %101, %cst_46 {dimension_numbers = #tpu.dot_dimension_numbers<[1], [0], [0], [1], [0, 0, 1, 1], [], []>} : vector<64x32xbf16>, vector<32x64xbf16>, vector<64x64xf32> -> vector<64x64xf32>
    %c0_47 = arith.constant 0 : index
    %c0_48 = arith.constant 0 : index
    %103 = vector.load %arg15[%c0_47, %c0_48] : memref<1x64xf32, #tpu.memory_space<vmem>>, vector<1x64xf32>
    %104 = vector.broadcast %103 : vector<1x64xf32> to vector<64x64xf32>
    %105 = arith.addf %102, %104 : vector<64x64xf32>
    %106 = arith.negf %105 : vector<64x64xf32>
    %107 = math.exp %106 : vector<64x64xf32>
    %cst_49 = arith.constant 1.000000e+00 : f32
    %108 = vector.broadcast %cst_49 : f32 to vector<64x64xf32>
    %109 = arith.addf %108, %107 : vector<64x64xf32>
    %110 = arith.divf %108, %109 : vector<64x64xf32>
    %111 = arith.mulf %105, %110 : vector<64x64xf32>
    %112 = arith.truncf %111 : vector<64x64xf32> to vector<64x64xbf16>
    %c0_50 = arith.constant 0 : index
    %c0_51 = arith.constant 0 : index
    %113 = vector.load %arg16[%c0_50, %c0_51] : memref<64x32xbf16, #tpu.memory_space<vmem>>, vector<64x32xbf16>
    %cst_52 = arith.constant dense<0.000000e+00> : vector<64x32xf32>
    %114 = tpu.matmul %112, %113, %cst_52 {dimension_numbers = #tpu.dot_dimension_numbers<[1], [0], [0], [1], [0, 0, 1, 1], [], []>} : vector<64x64xbf16>, vector<64x32xbf16>, vector<64x32xf32> -> vector<64x32xf32>
    %c0_53 = arith.constant 0 : index
    %c0_54 = arith.constant 0 : index
    %115 = vector.load %arg17[%c0_53, %c0_54] : memref<1x32xf32, #tpu.memory_space<vmem>>, vector<1x32xf32>
    %116 = vector.broadcast %115 : vector<1x32xf32> to vector<64x32xf32>
    %117 = arith.addf %114, %116 : vector<64x32xf32>
    %118 = arith.addf %74, %117 : vector<64x32xf32>
    %119 = vector.shape_cast %118 : vector<64x32xf32> to vector<1x64x32xf32>
    %cst_55 = arith.constant dense<0.000000e+00> : vector<1xf32>
    %120 = vector.multi_reduction <add>, %119, %cst_55 [1, 2] : vector<1x64x32xf32> to vector<1xf32>
    %121 = vector.shape_cast %120 : vector<1xf32> to vector<1x1x1xf32>
    %122 = vector.extract %121[0, 0, 0] : f32 from vector<1x1x1xf32>
    %cst_56 = arith.constant 2.048000e+03 : f32
    %123 = arith.divf %122, %cst_56 : f32
    %124 = vector.broadcast %123 : f32 to vector<64x32xf32>
    %125 = arith.subf %118, %124 : vector<64x32xf32>
    %126 = arith.mulf %125, %125 : vector<64x32xf32>
    %127 = vector.shape_cast %126 : vector<64x32xf32> to vector<1x64x32xf32>
    %cst_57 = arith.constant dense<0.000000e+00> : vector<1xf32>
    %128 = vector.multi_reduction <add>, %127, %cst_57 [1, 2] : vector<1x64x32xf32> to vector<1xf32>
    %129 = vector.shape_cast %128 : vector<1xf32> to vector<1x1x1xf32>
    %130 = vector.extract %129[0, 0, 0] : f32 from vector<1x1x1xf32>
    %cst_58 = arith.constant 2.048000e+03 : f32
    %131 = arith.divf %130, %cst_58 : f32
    %132 = vector.broadcast %123 : f32 to vector<64x32xf32>
    %133 = arith.subf %118, %132 : vector<64x32xf32>
    %cst_59 = arith.constant 9.99999974E-6 : f32
    %134 = arith.addf %131, %cst_59 : f32
    %135 = math.rsqrt %134 : f32
    %136 = vector.broadcast %135 : f32 to vector<64x32xf32>
    %137 = arith.mulf %133, %136 : vector<64x32xf32>
    %c0_60 = arith.constant 0 : index
    %c0_61 = arith.constant 0 : index
    %138 = vector.load %arg18[%c0_60, %c0_61] : memref<1x32xf32, #tpu.memory_space<vmem>>, vector<1x32xf32>
    %139 = vector.broadcast %138 : vector<1x32xf32> to vector<64x32xf32>
    %140 = arith.mulf %137, %139 : vector<64x32xf32>
    %c0_62 = arith.constant 0 : index
    %c0_63 = arith.constant 0 : index
    %141 = vector.load %arg19[%c0_62, %c0_63] : memref<1x32xf32, #tpu.memory_space<vmem>>, vector<1x32xf32>
    %142 = vector.broadcast %141 : vector<1x32xf32> to vector<64x32xf32>
    %143 = arith.addf %140, %142 : vector<64x32xf32>
    %144 = vector.shape_cast %143 : vector<64x32xf32> to vector<4x16x32xf32>
    %c0_64 = arith.constant 0 : index
    %c0_65 = arith.constant 0 : index
    %c0_66 = arith.constant 0 : index
    %c0_67 = arith.constant 0 : index
    %145 = vector.load %arg20[%c0_64, %c0_65, %c0_66, %c0_67] : memref<1x4x16x32xf32, #tpu.memory_space<vmem>>, vector<1x4x16x32xf32>
    %146 = vector.shape_cast %145 : vector<1x4x16x32xf32> to vector<4x16x32xf32>
    %147 = vector.shape_cast %144 : vector<4x16x32xf32> to vector<1x4x16x32xf32>
    tpu.vector_store %arg20[%c0_64, %c0_65, %c0_66, %c0_67], %147 {strides = array<i32>} : memref<1x4x16x32xf32, #tpu.memory_space<vmem>>, vector<1x4x16x32xf32>,
    return
  }
  func.func @transform_0(%arg0: i32) -> (i32, i32, i32, i32) {
    %c0_i32 = arith.constant 0 : i32
    %c0_i32_0 = arith.constant 0 : i32
    %c0_i32_1 = arith.constant 0 : i32
    %c0_i32_2 = arith.constant 0 : i32
    return %arg0, %c0_i32, %c0_i32_0, %c0_i32_1 : i32, i32, i32, i32
  }
  func.func @transform_1(%arg0: i32) -> (i32, i32) {
    %c0_i32 = arith.constant 0 : i32
    %c0_i32_0 = arith.constant 0 : i32
    %c0_i32_1 = arith.constant 0 : i32
    return %c0_i32, %c0_i32_0 : i32, i32
  }
  func.func @transform_2(%arg0: i32) -> (i32, i32) {
    %c0_i32 = arith.constant 0 : i32
    %c0_i32_0 = arith.constant 0 : i32
    %c0_i32_1 = arith.constant 0 : i32
    return %c0_i32, %c0_i32_0 : i32, i32
  }
  func.func @transform_3(%arg0: i32) -> (i32, i32) {
    %c0_i32 = arith.constant 0 : i32
    %c0_i32_0 = arith.constant 0 : i32
    %c0_i32_1 = arith.constant 0 : i32
    return %c0_i32, %c0_i32_0 : i32, i32
  }
  func.func @transform_4(%arg0: i32) -> (i32, i32) {
    %c0_i32 = arith.constant 0 : i32
    %c0_i32_0 = arith.constant 0 : i32
    %c0_i32_1 = arith.constant 0 : i32
    return %c0_i32, %c0_i32_0 : i32, i32
  }
  func.func @transform_5(%arg0: i32) -> (i32, i32) {
    %c0_i32 = arith.constant 0 : i32
    %c0_i32_0 = arith.constant 0 : i32
    %c0_i32_1 = arith.constant 0 : i32
    return %c0_i32, %c0_i32_0 : i32, i32
  }
  func.func @transform_6(%arg0: i32) -> (i32, i32) {
    %c0_i32 = arith.constant 0 : i32
    %c0_i32_0 = arith.constant 0 : i32
    %c0_i32_1 = arith.constant 0 : i32
    return %c0_i32, %c0_i32_0 : i32, i32
  }
  func.func @transform_7(%arg0: i32) -> (i32, i32) {
    %c0_i32 = arith.constant 0 : i32
    %c0_i32_0 = arith.constant 0 : i32
    %c0_i32_1 = arith.constant 0 : i32
    return %c0_i32, %c0_i32_0 : i32, i32
  }
  func.func @transform_8(%arg0: i32) -> (i32, i32) {
    %c0_i32 = arith.constant 0 : i32
    %c0_i32_0 = arith.constant 0 : i32
    %c0_i32_1 = arith.constant 0 : i32
    return %c0_i32, %c0_i32_0 : i32, i32
  }
  func.func @transform_9(%arg0: i32) -> (i32, i32) {
    %c0_i32 = arith.constant 0 : i32
    %c0_i32_0 = arith.constant 0 : i32
    %c0_i32_1 = arith.constant 0 : i32
    return %c0_i32, %c0_i32_0 : i32, i32
  }
  func.func @transform_10(%arg0: i32) -> (i32, i32) {
    %c0_i32 = arith.constant 0 : i32
    %c0_i32_0 = arith.constant 0 : i32
    %c0_i32_1 = arith.constant 0 : i32
    return %c0_i32, %c0_i32_0 : i32, i32
  }
  func.func @transform_11(%arg0: i32) -> (i32, i32) {
    %c0_i32 = arith.constant 0 : i32
    %c0_i32_0 = arith.constant 0 : i32
    %c0_i32_1 = arith.constant 0 : i32
    return %c0_i32, %c0_i32_0 : i32, i32
  }
  func.func @transform_12(%arg0: i32) -> (i32, i32) {
    %c0_i32 = arith.constant 0 : i32
    %c0_i32_0 = arith.constant 0 : i32
    %c0_i32_1 = arith.constant 0 : i32
    return %c0_i32, %c0_i32_0 : i32, i32
  }
  func.func @transform_13(%arg0: i32) -> (i32, i32) {
    %c0_i32 = arith.constant 0 : i32
    %c0_i32_0 = arith.constant 0 : i32
    %c0_i32_1 = arith.constant 0 : i32
    return %c0_i32, %c0_i32_0 : i32, i32
  }
  func.func @transform_14(%arg0: i32) -> (i32, i32) {
    %c0_i32 = arith.constant 0 : i32
    %c0_i32_0 = arith.constant 0 : i32
    %c0_i32_1 = arith.constant 0 : i32
    return %c0_i32, %c0_i32_0 : i32, i32
  }
  func.func @transform_15(%arg0: i32) -> (i32, i32) {
    %c0_i32 = arith.constant 0 : i32
    %c0_i32_0 = arith.constant 0 : i32
    %c0_i32_1 = arith.constant 0 : i32
    return %c0_i32, %c0_i32_0 : i32, i32
  }
  func.func @transform_16(%arg0: i32) -> (i32, i32) {
    %c0_i32 = arith.constant 0 : i32
    %c0_i32_0 = arith.constant 0 : i32
    %c0_i32_1 = arith.constant 0 : i32
    return %c0_i32, %c0_i32_0 : i32, i32
  }
  func.func @transform_17(%arg0: i32) -> (i32, i32) {
    %c0_i32 = arith.constant 0 : i32
    %c0_i32_0 = arith.constant 0 : i32
    %c0_i32_1 = arith.constant 0 : i32
    return %c0_i32, %c0_i32_0 : i32, i32
  }
  func.func @transform_18(%arg0: i32) -> (i32, i32) {
    %c0_i32 = arith.constant 0 : i32
    %c0_i32_0 = arith.constant 0 : i32
    %c0_i32_1 = arith.constant 0 : i32
    return %c0_i32, %c0_i32_0 : i32, i32
  }
  func.func @transform_19(%arg0: i32) -> (i32, i32, i32, i32) {
    %c0_i32 = arith.constant 0 : i32
    %c0_i32_0 = arith.constant 0 : i32
    %c0_i32_1 = arith.constant 0 : i32
    %c0_i32_2 = arith.constant 0 : i32
    return %arg0, %c0_i32, %c0_i32_0, %c0_i32_1 : i32, i32, i32, i32
  }
}

module attributes {stable_mosaic.version = 11 : i64} {
  func.func @_matmul_kernel(%arg0: i32, %arg1: memref<128x32xbf16, #tpu.memory_space<vmem>>, %arg2: memref<32x64xbf16, #tpu.memory_space<vmem>>, %arg3: memref<1x64xf32, #tpu.memory_space<vmem>>, %arg4: memref<128x64xf32, #tpu.memory_space<vmem>>) attributes {dimension_semantics = [#tpu.dimension_semantics<parallel>], iteration_bounds = array<i64: 1>, scalar_prefetch = 0 : i64, scratch_operands = 0 : i64, tpu.core_type = #tpu.core_type<tc>, window_params = [{transform_indices = @transform_0, window_bounds = array<i64: 128, 32>}, {pipeline_mode = #tpu.pipeline_mode<synchronous>, transform_indices = @transform_1, window_bounds = array<i64: 32, 64>}, {pipeline_mode = #tpu.pipeline_mode<synchronous>, transform_indices = @transform_2, window_bounds = array<i64: 1, 64>}, {transform_indices = @transform_3, window_bounds = array<i64: 128, 64>}]} {
    %c0 = arith.constant 0 : index
    %c0_0 = arith.constant 0 : index
    %0 = vector.load %arg1[%c0, %c0_0] : memref<128x32xbf16, #tpu.memory_space<vmem>>, vector<128x32xbf16>
    %c0_1 = arith.constant 0 : index
    %c0_2 = arith.constant 0 : index
    %1 = vector.load %arg2[%c0_1, %c0_2] : memref<32x64xbf16, #tpu.memory_space<vmem>>, vector<32x64xbf16>
    %cst = arith.constant dense<0.000000e+00> : vector<128x64xf32>
    %2 = tpu.matmul %0, %1, %cst {dimension_numbers = #tpu.dot_dimension_numbers<[1], [0], [0], [1], [0, 0, 1, 1], [], []>} : vector<128x32xbf16>, vector<32x64xbf16>, vector<128x64xf32> -> vector<128x64xf32>
    %c0_3 = arith.constant 0 : index
    %c0_4 = arith.constant 0 : index
    %3 = vector.load %arg3[%c0_3, %c0_4] : memref<1x64xf32, #tpu.memory_space<vmem>>, vector<1x64xf32>
    %4 = vector.broadcast %3 : vector<1x64xf32> to vector<128x64xf32>
    %5 = arith.addf %2, %4 : vector<128x64xf32>
    %c0_5 = arith.constant 0 : index
    %c0_6 = arith.constant 0 : index
    %6 = vector.load %arg4[%c0_5, %c0_6] : memref<128x64xf32, #tpu.memory_space<vmem>>, vector<128x64xf32>
    tpu.vector_store %arg4[%c0_5, %c0_6], %5 {strides = array<i32>} : memref<128x64xf32, #tpu.memory_space<vmem>>, vector<128x64xf32>,
    return
  }
  func.func @transform_0(%arg0: i32) -> (i32, i32) {
    %c0_i32 = arith.constant 0 : i32
    %c0_i32_0 = arith.constant 0 : i32
    return %arg0, %c0_i32 : i32, i32
  }
  func.func @transform_1(%arg0: i32) -> (i32, i32) {
    %c0_i32 = arith.constant 0 : i32
    %c0_i32_0 = arith.constant 0 : i32
    %c0_i32_1 = arith.constant 0 : i32
    return %c0_i32, %c0_i32_0 : i32, i32
  }
  func.func @transform_2(%arg0: i32) -> (i32, i32) {
    %c0_i32 = arith.constant 0 : i32
    %c0_i32_0 = arith.constant 0 : i32
    %c0_i32_1 = arith.constant 0 : i32
    return %c0_i32, %c0_i32_0 : i32, i32
  }
  func.func @transform_3(%arg0: i32) -> (i32, i32) {
    %c0_i32 = arith.constant 0 : i32
    %c0_i32_0 = arith.constant 0 : i32
    return %arg0, %c0_i32 : i32, i32
  }
}

</mosaic_0001>

<llo_original>
// kernel: vision_tower_forward.7
$region0: #{vision_tower_forward.7}
  #allocation0 [shape = 'u32[]', space=smem, size = 0x4, offset = 0x4, fixed_abs, tag = 'smem constant byte address 0x4 - core index']
  #allocation1 [shape = 'u32[72,128]{1,0:T(1,128)}', space=vmem, size = 0x9000, scoped, tag = 'internal scratch']
  %s0 = inlined_call_operand.vmem [shape: bf16[512,16], index: 0, kind: input, shape index: {}]
  %s1 = inlined_call_operand.vmem [shape: bf16[16,32], index: 1, kind: input, shape index: {}]
  %s2 = inlined_call_operand.vmem [shape: f32[1,32], index: 2, kind: input, shape index: {}]
  %s3 = inlined_call_operand.vmem [shape: f32[512,32], index: 3, kind: output, shape index: {}]
  %s4 = sld [smem:[#allocation0]]
  $region45: #{vision_tower_forward.7} parent=0
    _
  %s6 = ssub.s32 1, %s4
  %s7 = scalar_select 0, %s6, %s4
  loop: start=0, step=1, limit=4
  $region2: #{vision_tower_forward.7} parent=0 // loop_pre_header
    _
  $region3: #{vision_tower_forward.7} parent=0 // loop_header
    %s9 = sphi 0, %s13
    %p10 = scmp.ge.s32.totalorder %s9, 4
    %s19 = sphi 0, %s21
    %s22 = sphi 0, %s19
    %s23 = sphi 0, %s22
    %s39 = sphi 0, %s23
    %s43 = sphi 0, %s43
    %s45 = sphi 0, %s43
    %s46 = sphi 0, %s45
    %s60 = sphi 0, %s46
    %s64 = sphi 0, %s64
    %s66 = sphi 0, %s64
    %s67 = sphi 0, %s66
    %s81 = sphi 0, %s67
    %s87 = sphi 0, %s89
    %s90 = sphi 0, %s87
    %s91 = sphi 0, %s90
    %s107 = sphi 0, %s91
  $region4: #{vision_tower_forward.7} parent=0 // loop_header_branch
    %12 = sbr.rel (%p10) target = $region8
  $region5: #{vision_tower_forward.7} parent=0 // loop_body
    %s14 = ssub.s32 %s9, 1
    %s15 = ssub.s32 %s9, 2
    %s16 = sadd.s32 %s9, 1
    %s17 = ssub.s32 %s9, %s16
    %p18 = scmp.eq.s32.totalorder %s17, 0
    %s20 = sadd.s32 %s19, 1
    %s21 = scalar_select %p18, %s19, %s20
    %p24 = pneg %p18
    %p25 = scmp.eq.s32.totalorder %s9, 1
    %p26 = por %p24, %p25
    %p27 = scmp.ne.s32.totalorder %s19, %s22
    %p28 = scmp.eq.s32.totalorder %s9, 0
    %p29 = por %p27, %p28
    %p30 = scmp.ne.s32.totalorder %s19, %s22
    %p31 = scmp.eq.s32.totalorder %s14, 1
    %p32 = por %p30, %p31
    %p33 = scmp.ne.s32.totalorder %s22, %s23
    %p34 = scmp.eq.s32.totalorder %s14, 0
    %p35 = por %p33, %p34
    %p36 = scmp.ne.s32.totalorder %s22, %s23
    %p37 = scmp.eq.s32.totalorder %s15, 1
    %p38 = por %p36, %p37
    %p40 = scmp.ne.s32.totalorder %s23, %s39
    %p41 = scmp.eq.s32.totalorder %s15, 0
    %p42 = por %p40, %p41
    %s44 = sadd.s32 %s43, 1
    %p47 = scmp.eq.s32.totalorder %s9, 1
    %p48 = scmp.ne.s32.totalorder %s43, %s45
    %p49 = scmp.eq.s32.totalorder %s9, 0
    %p50 = por %p48, %p49
    %p51 = scmp.ne.s32.totalorder %s43, %s45
    %p52 = scmp.eq.s32.totalorder %s14, 1
    %p53 = por %p51, %p52
    %p54 = scmp.ne.s32.totalorder %s45, %s46
    %p55 = scmp.eq.s32.totalorder %s14, 0
    %p56 = por %p54, %p55
    %p57 = scmp.ne.s32.totalorder %s45, %s46
    %p58 = scmp.eq.s32.totalorder %s15, 1
    %p59 = por %p57, %p58
    %p61 = scmp.ne.s32.totalorder %s46, %s60
    %p62 = scmp.eq.s32.totalorder %s15, 0
    %p63 = por %p61, %p62
    %s65 = sadd.s32 %s64, 1
    %p68 = scmp.eq.s32.totalorder %s9, 1
    %p69 = scmp.ne.s32.totalorder %s64, %s66
    %p70 = scmp.eq.s32.totalorder %s9, 0
    %p71 = por %p69, %p70
    %p72 = scmp.ne.s32.totalorder %s64, %s66
    %p73 = scmp.eq.s32.totalorder %s14, 1
    %p74 = por %p72, %p73
    %p75 = scmp.ne.s32.totalorder %s66, %s67
    %p76 = scmp.eq.s32.totalorder %s14, 0
    %p77 = por %p75, %p76
    %p78 = scmp.ne.s32.totalorder %s66, %s67
    %p79 = scmp.eq.s32.totalorder %s15, 1
    %p80 = por %p78, %p79
    %p82 = scmp.ne.s32.totalorder %s67, %s81
    %p83 = scmp.eq.s32.totalorder %s15, 0
    %p84 = por %p82, %p83
    %s85 = ssub.s32 %s9, %s16
    %p86 = scmp.eq.s32.totalorder %s85, 0
    %s88 = sadd.s32 %s87, 1
    %s89 = scalar_select %p86, %s87, %s88
    %p92 = pneg %p86
    %p93 = scmp.eq.s32.totalorder %s9, 1
    %p94 = por %p92, %p93
    %p95 = scmp.ne.s32.totalorder %s87, %s90
    %p96 = scmp.eq.s32.totalorder %s9, 0
    %p97 = por %p95, %p96
    %p98 = scmp.ne.s32.totalorder %s87, %s90
    %p99 = scmp.eq.s32.totalorder %s14, 1
    %p100 = por %p98, %p99
    %p101 = scmp.ne.s32.totalorder %s90, %s91
    %p102 = scmp.eq.s32.totalorder %s14, 0
    %p103 = por %p101, %p102
    %p104 = scmp.ne.s32.totalorder %s90, %s91
    %p105 = scmp.eq.s32.totalorder %s15, 1
    %p106 = por %p104, %p105
    %p108 = scmp.ne.s32.totalorder %s91, %s107
    %p109 = scmp.eq.s32.totalorder %s15, 0
    %p110 = por %p108, %p109
    %p111 = scmp.le.s32.totalorder 1, %s9
    %p112 = scmp.lt.s32.totalorder %s9, 3
    %p113 = pnand %p111, %p112
    %p114 = pneg %p113
    // Predicated region
    $region9: #{vision_tower_forward.7} parent=5 // pred_check
      _
    $region10: #{vision_tower_forward.7} parent=5 // pred_check_branch
      %116 = sbr.rel (%p113) target = $region12
    $region11: #{vision_tower_forward.7} parent=5 // pred_region
      %s117 = ssub.s32 %s9, 1
      // Predicated region
      $region13: #{vision_tower_forward.7} parent=11 // pred_check
        %p118 = pneg %p56
      $region14: #{vision_tower_forward.7} parent=11 // pred_check_branch
        %120 = sbr.rel (%p118) target = $region16
      $region15: #{vision_tower_forward.7} parent=11 // pred_region
        _
      $region16: #{vision_tower_forward.7} parent=11 // pred_fallthru
        _
      // Predicated region
      $region17: #{vision_tower_forward.7} parent=11 // pred_check
        %p121 = pneg %p77
      $region18: #{vision_tower_forward.7} parent=11 // pred_check_branch
        %123 = sbr.rel (%p121) target = $region20
      $region19: #{vision_tower_forward.7} parent=11 // pred_region
        _
      $region20: #{vision_tower_forward.7} parent=11 // pred_fallthru
        _
    $region12: #{vision_tower_forward.7} parent=5 // pred_fallthru
      _
    %p124 = scmp.lt.s32.totalorder %s9, 2
    // Predicated region
    $region21: #{vision_tower_forward.7} parent=5 // pred_check
      %p125 = pneg %p124
    $region22: #{vision_tower_forward.7} parent=5 // pred_check_branch
      %127 = sbr.rel (%p125) target = $region24
    $region23: #{vision_tower_forward.7} parent=5 // pred_region
      // Predicated region
      $region25: #{vision_tower_forward.7} parent=23 // pred_check
        %p128 = pneg %p29
      $region26: #{vision_tower_forward.7} parent=23 // pred_check_branch
        %130 = sbr.rel (%p128) target = $region28
      $region27: #{vision_tower_forward.7} parent=23 // pred_region
        %s131 = smul.u32 32, %s9
        %p132 = scmp.lt.s32.totalorder %s131, 63
        %s133 = scalar_select %p132, %s131, 63
        %s134 = smul.addr %s133, 4
        %s135 = scalar_lea.vmem %s0, %s134
        %s136 = smul.u32 32, %s9
      $region28: #{vision_tower_forward.7} parent=23 // pred_fallthru
        _
    $region24: #{vision_tower_forward.7} parent=5 // pred_fallthru
      _
    %p137 = scmp.le.s32.totalorder 1, %s9
    %p138 = scmp.lt.s32.totalorder %s9, 3
    %p139 = pnand %p137, %p138
    %p140 = pneg %p139
    // Predicated region
    $region29: #{vision_tower_forward.7} parent=5 // pred_check
      _
    $region30: #{vision_tower_forward.7} parent=5 // pred_check_branch
      %142 = sbr.rel (%p139) target = $region32
    $region31: #{vision_tower_forward.7} parent=5 // pred_region
      %s143 = ssub.s32 %s9, 1
      %s144 = smul.u32 32, %s14
      %p145 = scmp.lt.s32.totalorder %s144, 63
      %s146 = scalar_select %p145, %s144, 63
      %s147 = smul.addr %s146, 4
      %s148 = scalar_lea.vmem %s0, %s147
      %p149 = pneg %p35
      %p150 = pneg %p32
      %p151 = pneg %p56
      %p152 = pneg %p53
      %p153 = pneg %p77
      %p154 = pneg %p74
      %p155 = pneg %p103
      %p156 = pneg %p100
      %s157 = smul.u32 32, %s14
      %p158 = scmp.lt.s32.totalorder %s157, 63
      %s159 = scalar_select %p158, %s157, 63
      %s160 = smul.addr %s159, 8
      %s161 = scalar_lea.vmem %s3, %s160
      %s162 = smul.u32 32, %s14
      %p163 = scmp.lt.s32.totalorder %s162, 63
      %s164 = scalar_select %p163, %s162, 63
      %s165 = smul.addr %s164, 4
      %s166 = scalar_lea.vmem %s0, %s165
      %s167 = smul.u32 32, %s14
      %s168 = smul.u32 32, %s14
      %p169 = scmp.lt.s32.totalorder %s168, 63
      %s170 = scalar_select %p169, %s168, 63
      %s171 = smul.addr %s170, 8
      %s172 = scalar_lea.vmem %s3, %s171
      %s173 = smul.u32 32, %s14
      %v175 = vld [vmem:[%s166] sm:$0xf]
      %v176 = vld [vmem:[%s166 + $0x4] sm:$0xf]
      %v177 = vld [vmem:[%s166 + $0x8] sm:$0xf]
      %v178 = vld [vmem:[%s166 + $0xc] sm:$0xf]
      %v179 = vld [vmem:[%s166 + $0x10] sm:$0xf]
      %v180 = vld [vmem:[%s166 + $0x14] sm:$0xf]
      %v181 = vld [vmem:[%s166 + $0x18] sm:$0xf]
      %v182 = vld [vmem:[%s166 + $0x1c] sm:$0xf]
      %v183 = vld [vmem:[%s166 + $0x20] sm:$0xf]
      %v184 = vld [vmem:[%s166 + $0x24] sm:$0xf]
      %v185 = vld [vmem:[%s166 + $0x28] sm:$0xf]
      %v186 = vld [vmem:[%s166 + $0x2c] sm:$0xf]
      %v187 = vld [vmem:[%s166 + $0x30] sm:$0xf]
      %v188 = vld [vmem:[%s166 + $0x34] sm:$0xf]
      %v189 = vld [vmem:[%s166 + $0x38] sm:$0xf]
      %v190 = vld [vmem:[%s166 + $0x3c] sm:$0xf]
      %v191 = vld [vmem:[%s166 + $0x40] sm:$0xf]
      %v192 = vld [vmem:[%s166 + $0x44] sm:$0xf]
      %v193 = vld [vmem:[%s166 + $0x48] sm:$0xf]
      %v194 = vld [vmem:[%s166 + $0x4c] sm:$0xf]
      %v195 = vld [vmem:[%s166 + $0x50] sm:$0xf]
      %v196 = vld [vmem:[%s166 + $0x54] sm:$0xf]
      %v197 = vld [vmem:[%s166 + $0x58] sm:$0xf]
      %v198 = vld [vmem:[%s166 + $0x5c] sm:$0xf]
      %v199 = vld [vmem:[%s166 + $0x60] sm:$0xf]
      %v200 = vld [vmem:[%s166 + $0x64] sm:$0xf]
      %v201 = vld [vmem:[%s166 + $0x68] sm:$0xf]
      %v202 = vld [vmem:[%s166 + $0x6c] sm:$0xf]
      %v203 = vld [vmem:[%s166 + $0x70] sm:$0xf]
      %v204 = vld [vmem:[%s166 + $0x74] sm:$0xf]
      %v205 = vld [vmem:[%s166 + $0x78] sm:$0xf]
      %v206 = vld [vmem:[%s166 + $0x7c] sm:$0xf]
      %v207 = vld [vmem:[%s1] sm:$0xf]
      %v208 = vld [vmem:[%s1 + $0x4] sm:$0xf]
      %v209 = vld [vmem:[%s2] sm:$0x1]
      %v211 = vperm.slane %v209, 0
      %v245 = vunpack.c.l.b16 %v175
      %v246 = vunpack.c.l.b16 %v176
      %v247 = vunpack.c.l.b16 %v177
      %v248 = vunpack.c.l.b16 %v178
      %v249 = vunpack.c.l.b16 %v179
      %v250 = vunpack.c.l.b16 %v180
      %v251 = vunpack.c.l.b16 %v181
      %v252 = vunpack.c.l.b16 %v182
      %v253 = vunpack.c.l.b16 %v183
      %v254 = vunpack.c.l.b16 %v184
      %v255 = vunpack.c.l.b16 %v185
      %v256 = vunpack.c.l.b16 %v186
      %v257 = vunpack.c.l.b16 %v187
      %v258 = vunpack.c.l.b16 %v188
      %v259 = vunpack.c.l.b16 %v189
      %v260 = vunpack.c.l.b16 %v190
      %v261 = vunpack.c.l.b16 %v191
      %v262 = vunpack.c.l.b16 %v192
      %v263 = vunpack.c.l.b16 %v193
      %v264 = vunpack.c.l.b16 %v194
      %v265 = vunpack.c.l.b16 %v195
      %v266 = vunpack.c.l.b16 %v196
      %v267 = vunpack.c.l.b16 %v197
      %v268 = vunpack.c.l.b16 %v198
      %v269 = vunpack.c.l.b16 %v199
      %v270 = vunpack.c.l.b16 %v200
      %v271 = vunpack.c.l.b16 %v201
      %v272 = vunpack.c.l.b16 %v202
      %v273 = vunpack.c.l.b16 %v203
      %v274 = vunpack.c.l.b16 %v204
      %v275 = vunpack.c.l.b16 %v205
      %v276 = vunpack.c.l.b16 %v206
      %v277 = vpack.c.b16 %v246, %v245
      %v278 = vpack.c.b16 %v248, %v247
      %v279 = vpack.c.b16 %v250, %v249
      %v280 = vpack.c.b16 %v252, %v251
      %v281 = vpack.c.b16 %v254, %v253
      %v282 = vpack.c.b16 %v256, %v255
      %v283 = vpack.c.b16 %v258, %v257
      %v284 = vpack.c.b16 %v260, %v259
      %v285 = vpack.c.b16 %v262, %v261
      %v286 = vpack.c.b16 %v264, %v263
      %v287 = vpack.c.b16 %v266, %v265
      %v288 = vpack.c.b16 %v268, %v267
      %v289 = vpack.c.b16 %v270, %v269
      %v290 = vpack.c.b16 %v272, %v271
      %v291 = vpack.c.b16 %v274, %v273
      %v292 = vpack.c.b16 %v276, %v275
      %v295 = vunpack.c.l.b16 %v207
      %v296 = vunpack.c.l.b16 %v208
      %v297 = vpack.c.b16 %v296, %v295
      %vm299 = vcmask 130048
      %v301 = vsel %vm299, %v277, 0
      %v304 = vsel %vm299, %v278, 0
      %v307 = vsel %vm299, %v279, 0
      %v310 = vsel %vm299, %v280, 0
      %v313 = vsel %vm299, %v281, 0
      %v316 = vsel %vm299, %v282, 0
      %v319 = vsel %vm299, %v283, 0
      %v322 = vsel %vm299, %v284, 0
      %v325 = vsel %vm299, %v285, 0
      %v328 = vsel %vm299, %v286, 0
      %v331 = vsel %vm299, %v287, 0
      %v334 = vsel %vm299, %v288, 0
      %v337 = vsel %vm299, %v289, 0
      %v340 = vsel %vm299, %v290, 0
      %v343 = vsel %vm299, %v291, 0
      %v346 = vsel %vm299, %v292, 0
      %348 = vmatpush.bf16.msra.mxu0 0
      %349 = vmatpush.bf16.msra.mxu0 0
      %350 = vmatpush.bf16.msra.mxu0 0
      %351 = vmatpush.bf16.msra.mxu0 0
      %352 = vmatpush.bf16.msra.mxu0 0
      %353 = vmatpush.bf16.msra.mxu0 0
      %354 = vmatpush.bf16.msra.mxu0 0
      %355 = vmatpush.bf16.msra.mxu0 %v297
      %356 = vmatmul.bf16.gmra.mxu0 %v301
      %v357 = vpop.f32.mrf.mxu0
      %v358 = vadd.f32 %v211, %v357
      %v359 = vpop.f32.mrf.mxu0
      %v360 = vadd.f32 %v211, %v359
      %361 = vmatmul.bf16.gmra.mxu0 %v304
      %v362 = vpop.f32.mrf.mxu0
      %v363 = vadd.f32 %v211, %v362
      %v364 = vpop.f32.mrf.mxu0
      %v365 = vadd.f32 %v211, %v364
      %366 = vmatmul.bf16.gmra.mxu0 %v307
      %v367 = vpop.f32.mrf.mxu0
      %v368 = vadd.f32 %v211, %v367
      %v369 = vpop.f32.mrf.mxu0
      %v370 = vadd.f32 %v211, %v369
      %371 = vmatmul.bf16.gmra.mxu0 %v310
      %v372 = vpop.f32.mrf.mxu0
      %v373 = vadd.f32 %v211, %v372
      %v374 = vpop.f32.mrf.mxu0
      %v375 = vadd.f32 %v211, %v374
      %376 = vmatmul.bf16.gmra.mxu0 %v313
      %v377 = vpop.f32.mrf.mxu0
      %v378 = vadd.f32 %v211, %v377
      %v379 = vpop.f32.mrf.mxu0
      %v380 = vadd.f32 %v211, %v379
      %381 = vmatmul.bf16.gmra.mxu0 %v316
      %v382 = vpop.f32.mrf.mxu0
      %v383 = vadd.f32 %v211, %v382
      %v384 = vpop.f32.mrf.mxu0
      %v385 = vadd.f32 %v211, %v384
      %386 = vmatmul.bf16.gmra.mxu0 %v319
      %v387 = vpop.f32.mrf.mxu0
      %v388 = vadd.f32 %v211, %v387
      %v389 = vpop.f32.mrf.mxu0
      %v390 = vadd.f32 %v211, %v389
      %391 = vmatmul.bf16.gmra.mxu0 %v322
      %v392 = vpop.f32.mrf.mxu0
      %v393 = vadd.f32 %v211, %v392
      %v394 = vpop.f32.mrf.mxu0
      %v395 = vadd.f32 %v211, %v394
      %396 = vmatmul.bf16.gmra.mxu0 %v325
      %v397 = vpop.f32.mrf.mxu0
      %v398 = vadd.f32 %v211, %v397
      %v399 = vpop.f32.mrf.mxu0
      %v400 = vadd.f32 %v211, %v399
      %401 = vmatmul.bf16.gmra.mxu0 %v328
      %v402 = vpop.f32.mrf.mxu0
      %v403 = vadd.f32 %v211, %v402
      %v404 = vpop.f32.mrf.mxu0
      %v405 = vadd.f32 %v211, %v404
      %406 = vmatmul.bf16.gmra.mxu0 %v331
      %v407 = vpop.f32.mrf.mxu0
      %v408 = vadd.f32 %v211, %v407
      %v409 = vpop.f32.mrf.mxu0
      %v410 = vadd.f32 %v211, %v409
      %411 = vmatmul.bf16.gmra.mxu0 %v334
      %v412 = vpop.f32.mrf.mxu0
      %v413 = vadd.f32 %v211, %v412
      %v414 = vpop.f32.mrf.mxu0
      %v415 = vadd.f32 %v211, %v414
      %416 = vmatmul.bf16.gmra.mxu0 %v337
      %v417 = vpop.f32.mrf.mxu0
      %v418 = vadd.f32 %v211, %v417
      %v419 = vpop.f32.mrf.mxu0
      %v420 = vadd.f32 %v211, %v419
      %421 = vmatmul.bf16.gmra.mxu0 %v340
      %v422 = vpop.f32.mrf.mxu0
      %v423 = vadd.f32 %v211, %v422
      %v424 = vpop.f32.mrf.mxu0
      %v425 = vadd.f32 %v211, %v424
      %426 = vmatmul.bf16.gmra.mxu0 %v343
      %v427 = vpop.f32.mrf.mxu0
      %v428 = vadd.f32 %v211, %v427
      %v429 = vpop.f32.mrf.mxu0
      %v430 = vadd.f32 %v211, %v429
      %431 = vmatmul.bf16.gmra.mxu0 %v346
      %v432 = vpop.f32.mrf.mxu0
      %v433 = vadd.f32 %v211, %v432
      %v434 = vpop.f32.mrf.mxu0
      %v435 = vadd.f32 %v211, %v434
      %436 = vdwg.mxu0
      %v437 = vxor.u32 %v358, 2147483648
      %v438 = vxor.u32 %v360, 2147483648
      %v439 = vxor.u32 %v363, 2147483648
      %v440 = vxor.u32 %v365, 2147483648
      %v441 = vxor.u32 %v368, 2147483648
      %v442 = vxor.u32 %v370, 2147483648
      %v443 = vxor.u32 %v373, 2147483648
      %v444 = vxor.u32 %v375, 2147483648
      %v445 = vxor.u32 %v378, 2147483648
      %v446 = vxor.u32 %v380, 2147483648
      %v447 = vxor.u32 %v383, 2147483648
      %v448 = vxor.u32 %v385, 2147483648
      %v449 = vxor.u32 %v388, 2147483648
      %v450 = vxor.u32 %v390, 2147483648
      %v451 = vxor.u32 %v393, 2147483648
      %v452 = vxor.u32 %v395, 2147483648
      %v453 = vxor.u32 %v398, 2147483648
      %v454 = vxor.u32 %v400, 2147483648
      %v455 = vxor.u32 %v403, 2147483648
      %v456 = vxor.u32 %v405, 2147483648
      %v457 = vxor.u32 %v408, 2147483648
      %v458 = vxor.u32 %v410, 2147483648
      %v459 = vxor.u32 %v413, 2147483648
      %v460 = vxor.u32 %v415, 2147483648
      %v461 = vxor.u32 %v418, 2147483648
      %v462 = vxor.u32 %v420, 2147483648
      %v463 = vxor.u32 %v423, 2147483648
      %v464 = vxor.u32 %v425, 2147483648
      %v465 = vxor.u32 %v428, 2147483648
      %v466 = vxor.u32 %v430, 2147483648
      %v467 = vxor.u32 %v433, 2147483648
      %v468 = vxor.u32 %v435, 2147483648
      %v469 = vmul.f32 %v437, 1.442695
      %v470 = vpow.pop %v469
      %v471 = vmul.f32 %v438, 1.442695
      %v472 = vpow.pop %v471
      %v473 = vmul.f32 %v439, 1.442695
      %v474 = vpow.pop %v473
      %v475 = vmul.f32 %v440, 1.442695
      %v476 = vpow.pop %v475
      %v477 = vmul.f32 %v441, 1.442695
      %v478 = vpow.pop %v477
      %v479 = vmul.f32 %v442, 1.442695
      %v480 = vpow.pop %v479
      %v481 = vmul.f32 %v443, 1.442695
      %v482 = vpow.pop %v481
      %v483 = vmul.f32 %v444, 1.442695
      %v484 = vpow.pop %v483
      %v485 = vmul.f32 %v445, 1.442695
      %v486 = vpow.pop %v485
      %v487 = vmul.f32 %v446, 1.442695
      %v488 = vpow.pop %v487
      %v489 = vmul.f32 %v447, 1.442695
      %v490 = vpow.pop %v489
      %v491 = vmul.f32 %v448, 1.442695
      %v492 = vpow.pop %v491
      %v493 = vmul.f32 %v449, 1.442695
      %v494 = vpow.pop %v493
      %v495 = vmul.f32 %v450, 1.442695
      %v496 = vpow.pop %v495
      %v497 = vmul.f32 %v451, 1.442695
      %v498 = vpow.pop %v497
      %v499 = vmul.f32 %v452, 1.442695
      %v500 = vpow.pop %v499
      %v501 = vmul.f32 %v453, 1.442695
      %v502 = vpow.pop %v501
      %v503 = vmul.f32 %v454, 1.442695
      %v504 = vpow.pop %v503
      %v505 = vmul.f32 %v455, 1.442695
      %v506 = vpow.pop %v505
      %v507 = vmul.f32 %v456, 1.442695
      %v508 = vpow.pop %v507
      %v509 = vmul.f32 %v457, 1.442695
      %v510 = vpow.pop %v509
      %v511 = vmul.f32 %v458, 1.442695
      %v512 = vpow.pop %v511
      %v513 = vmul.f32 %v459, 1.442695
      %v514 = vpow.pop %v513
      %v515 = vmul.f32 %v460, 1.442695
      %v516 = vpow.pop %v515
      %v517 = vmul.f32 %v461, 1.442695
      %v518 = vpow.pop %v517
      %v519 = vmul.f32 %v462, 1.442695
      %v520 = vpow.pop %v519
      %v521 = vmul.f32 %v463, 1.442695
      %v522 = vpow.pop %v521
      %v523 = vmul.f32 %v464, 1.442695
      %v524 = vpow.pop %v523
      %v525 = vmul.f32 %v465, 1.442695
      %v526 = vpow.pop %v525
      %v527 = vmul.f32 %v466, 1.442695
      %v528 = vpow.pop %v527
      %v529 = vmul.f32 %v467, 1.442695
      %v530 = vpow.pop %v529
      %v531 = vmul.f32 %v468, 1.442695
      %v532 = vpow.pop %v531
      %v533 = vadd.f32 %v470, 1.0
      %v534 = vadd.f32 %v472, 1.0
      %v535 = vadd.f32 %v474, 1.0
      %v536 = vadd.f32 %v476, 1.0
      %v537 = vadd.f32 %v478, 1.0
      %v538 = vadd.f32 %v480, 1.0
      %v539 = vadd.f32 %v482, 1.0
      %v540 = vadd.f32 %v484, 1.0
      %v541 = vadd.f32 %v486, 1.0
      %v542 = vadd.f32 %v488, 1.0
      %v543 = vadd.f32 %v490, 1.0
      %v544 = vadd.f32 %v492, 1.0
      %v545 = vadd.f32 %v494, 1.0
      %v546 = vadd.f32 %v496, 1.0
      %v547 = vadd.f32 %v498, 1.0
      %v548 = vadd.f32 %v500, 1.0
      %v549 = vadd.f32 %v502, 1.0
      %v550 = vadd.f32 %v504, 1.0
      %v551 = vadd.f32 %v506, 1.0
      %v552 = vadd.f32 %v508, 1.0
      %v553 = vadd.f32 %v510, 1.0
      %v554 = vadd.f32 %v512, 1.0
      %v555 = vadd.f32 %v514, 1.0
      %v556 = vadd.f32 %v516, 1.0
      %v557 = vadd.f32 %v518, 1.0
      %v558 = vadd.f32 %v520, 1.0
      %v559 = vadd.f32 %v522, 1.0
      %v560 = vadd.f32 %v524, 1.0
      %v561 = vadd.f32 %v526, 1.0
      %v562 = vadd.f32 %v528, 1.0
      %v563 = vadd.f32 %v530, 1.0
      %v564 = vadd.f32 %v532, 1.0
      %v565 = vrcp.pop %v533
      %v566 = vmul.f32 %v533, %v565
      %v567 = vsub.f32 1.0, %v566
      %v568 = vmul.f32 %v565, %v567
      %v569 = vadd.f32 %v565, %v568
      %vm570 = vweird.f32 %v533
      %vm571 = vweird.f32 %v565
      %vm572 = vmor %vm570, %vm571
      %v573 = vsel %vm572, %v565, %v569
      %v574 = vand.u32 2147483647, %v533
      %vm575 = vcmp.eq.f32.partialorder %v574, 8.507059e+37
      %v576 = vand.u32 %v533, 2147483648
      %v577 = vor.u32 1.1754944e-38, %v576
      %v578 = vsel %vm575, %v577, %v573
      %v579 = vmul.f32 1.0, %v578
      %v580 = vrcp.pop %v534
      %v581 = vmul.f32 %v534, %v580
      %v582 = vsub.f32 1.0, %v581
      %v583 = vmul.f32 %v580, %v582
      %v584 = vadd.f32 %v580, %v583
      %vm585 = vweird.f32 %v534
      %vm586 = vweird.f32 %v580
      %vm587 = vmor %vm585, %vm586
      %v588 = vsel %vm587, %v580, %v584
      %v589 = vand.u32 2147483647, %v534
      %vm590 = vcmp.eq.f32.partialorder %v589, 8.507059e+37
      %v591 = vand.u32 %v534, 2147483648
      %v592 = vor.u32 1.1754944e-38, %v591
      %v593 = vsel %vm590, %v592, %v588
      %v594 = vmul.f32 1.0, %v593
      %v595 = vrcp.pop %v535
      %v596 = vmul.f32 %v535, %v595
      %v597 = vsub.f32 1.0, %v596
      %v598 = vmul.f32 %v595, %v597
      %v599 = vadd.f32 %v595, %v598
      %vm600 = vweird.f32 %v535
      %vm601 = vweird.f32 %v595
      %vm602 = vmor %vm600, %vm601
      %v603 = vsel %vm602, %v595, %v599
      %v604 = vand.u32 2147483647, %v535
      %vm605 = vcmp.eq.f32.partialorder %v604, 8.507059e+37
      %v606 = vand.u32 %v535, 2147483648
      %v607 = vor.u32 1.1754944e-38, %v606
      %v608 = vsel %vm605, %v607, %v603
      %v609 = vmul.f32 1.0, %v608
      %v610 = vrcp.pop %v536
      %v611 = vmul.f32 %v536, %v610
      %v612 = vsub.f32 1.0, %v611
      %v613 = vmul.f32 %v610, %v612
      %v614 = vadd.f32 %v610, %v613
      %vm615 = vweird.f32 %v536
      %vm616 = vweird.f32 %v610
      %vm617 = vmor %vm615, %vm616
      %v618 = vsel %vm617, %v610, %v614
      %v619 = vand.u32 2147483647, %v536
      %vm620 = vcmp.eq.f32.partialorder %v619, 8.507059e+37
      %v621 = vand.u32 %v536, 2147483648
      %v622 = vor.u32 1.1754944e-38, %v621
      %v623 = vsel %vm620, %v622, %v618
      %v624 = vmul.f32 1.0, %v623
      %v625 = vrcp.pop %v537
      %v626 = vmul.f32 %v537, %v625
      %v627 = vsub.f32 1.0, %v626
      %v628 = vmul.f32 %v625, %v627
      %v629 = vadd.f32 %v625, %v628
      %vm630 = vweird.f32 %v537
      %vm631 = vweird.f32 %v625
      %vm632 = vmor %vm630, %vm631
      %v633 = vsel %vm632, %v625, %v629
      %v634 = vand.u32 2147483647, %v537
      %vm635 = vcmp.eq.f32.partialorder %v634, 8.507059e+37
      %v636 = vand.u32 %v537, 2147483648
      %v637 = vor.u32 1.1754944e-38, %v636
      %v638 = vsel %vm635, %v637, %v633
      %v639 = vmul.f32 1.0, %v638
      %v640 = vrcp.pop %v538
      %v641 = vmul.f32 %v538, %v640
      %v642 = vsub.f32 1.0, %v641
      %v643 = vmul.f32 %v640, %v642
      %v644 = vadd.f32 %v640, %v643
      %vm645 = vweird.f32 %v538
      %vm646 = vweird.f32 %v640
      %vm647 = vmor %vm645, %vm646
      %v648 = vsel %vm647, %v640, %v644
      %v649 = vand.u32 2147483647, %v538
      %vm650 = vcmp.eq.f32.partialorder %v649, 8.507059e+37
      %v651 = vand.u32 %v538, 2147483648
      %v652 = vor.u32 1.1754944e-38, %v651
      %v653 = vsel %vm650, %v652, %v648
      %v654 = vmul.f32 1.0, %v653
      %v655 = vrcp.pop %v539
      %v656 = vmul.f32 %v539, %v655
      %v657 = vsub.f32 1.0, %v656
      %v658 = vmul.f32 %v655, %v657
      %v659 = vadd.f32 %v655, %v658
      %vm660 = vweird.f32 %v539
      %vm661 = vweird.f32 %v655
      %vm662 = vmor %vm660, %vm661
      %v663 = vsel %vm662, %v655, %v659
      %v664 = vand.u32 2147483647, %v539
      %vm665 = vcmp.eq.f32.partialorder %v664, 8.507059e+37
      %v666 = vand.u32 %v539, 2147483648
      %v667 = vor.u32 1.1754944e-38, %v666
      %v668 = vsel %vm665, %v667, %v663
      %v669 = vmul.f32 1.0, %v668
      %v670 = vrcp.pop %v540
      %v671 = vmul.f32 %v540, %v670
      %v672 = vsub.f32 1.0, %v671
      %v673 = vmul.f32 %v670, %v672
      %v674 = vadd.f32 %v670, %v673
      %vm675 = vweird.f32 %v540
      %vm676 = vweird.f32 %v670
      %vm677 = vmor %vm675, %vm676
      %v678 = vsel %vm677, %v670, %v674
      %v679 = vand.u32 2147483647, %v540
      %vm680 = vcmp.eq.f32.partialorder %v679, 8.507059e+37
      %v681 = vand.u32 %v540, 2147483648
      %v682 = vor.u32 1.1754944e-38, %v681
      %v683 = vsel %vm680, %v682, %v678
      %v684 = vmul.f32 1.0, %v683
      %v685 = vrcp.pop %v541
      %v686 = vmul.f32 %v541, %v685
      %v687 = vsub.f32 1.0, %v686
      %v688 = vmul.f32 %v685, %v687
      %v689 = vadd.f32 %v685, %v688
      %vm690 = vweird.f32 %v541
      %vm691 = vweird.f32 %v685
      %vm692 = vmor %vm690, %vm691
      %v693 = vsel %vm692, %v685, %v689
      %v694 = vand.u32 2147483647, %v541
      %vm695 = vcmp.eq.f32.partialorder %v694, 8.507059e+37
      %v696 = vand.u32 %v541, 2147483648
      %v697 = vor.u32 1.1754944e-38, %v696
      %v698 = vsel %vm695, %v697, %v693
      %v699 = vmul.f32 1.0, %v698
      %v700 = vrcp.pop %v542
      %v701 = vmul.f32 %v542, %v700
      %v702 = vsub.f32 1.0, %v701
      %v703 = vmul.f32 %v700, %v702
      %v704 = vadd.f32 %v700, %v703
      %vm705 = vweird.f32 %v542
      %vm706 = vweird.f32 %v700
      %vm707 = vmor %vm705, %vm706
      %v708 = vsel %vm707, %v700, %v704
      %v709 = vand.u32 2147483647, %v542
      %vm710 = vcmp.eq.f32.partialorder %v709, 8.507059e+37
      %v711 = vand.u32 %v542, 2147483648
      %v712 = vor.u32 1.1754944e-38, %v711
      %v713 = vsel %vm710, %v712, %v708
      %v714 = vmul.f32 1.0, %v713
      %v715 = vrcp.pop %v543
      %v716 = vmul.f32 %v543, %v715
      %v717 = vsub.f32 1.0, %v716
      %v718 = vmul.f32 %v715, %v717
      %v719 = vadd.f32 %v715, %v718
      %vm720 = vweird.f32 %v543
      %vm721 = vweird.f32 %v715
      %vm722 = vmor %vm720, %vm721
      %v723 = vsel %vm722, %v715, %v719
      %v724 = vand.u32 2147483647, %v543
      %vm725 = vcmp.eq.f32.partialorder %v724, 8.507059e+37
      %v726 = vand.u32 %v543, 2147483648
      %v727 = vor.u32 1.1754944e-38, %v726
      %v728 = vsel %vm725, %v727, %v723
      %v729 = vmul.f32 1.0, %v728
      %v730 = vrcp.pop %v544
      %v731 = vmul.f32 %v544, %v730
      %v732 = vsub.f32 1.0, %v731
      %v733 = vmul.f32 %v730, %v732
      %v734 = vadd.f32 %v730, %v733
      %vm735 = vweird.f32 %v544
      %vm736 = vweird.f32 %v730
      %vm737 = vmor %vm735, %vm736
      %v738 = vsel %vm737, %v730, %v734
      %v739 = vand.u32 2147483647, %v544
      %vm740 = vcmp.eq.f32.partialorder %v739, 8.507059e+37
      %v741 = vand.u32 %v544, 2147483648
      %v742 = vor.u32 1.1754944e-38, %v741
      %v743 = vsel %vm740, %v742, %v738
      %v744 = vmul.f32 1.0, %v743
      %v745 = vrcp.pop %v545
      %v746 = vmul.f32 %v545, %v745
      %v747 = vsub.f32 1.0, %v746
      %v748 = vmul.f32 %v745, %v747
      %v749 = vadd.f32 %v745, %v748
      %vm750 = vweird.f32 %v545
      %vm751 = vweird.f32 %v745
      %vm752 = vmor %vm750, %vm751
      %v753 = vsel %vm752, %v745, %v749
      %v754 = vand.u32 2147483647, %v545
      %vm755 = vcmp.eq.f32.partialorder %v754, 8.507059e+37
      %v756 = vand.u32 %v545, 2147483648
      %v757 = vor.u32 1.1754944e-38, %v756
      %v758 = vsel %vm755, %v757, %v753
      %v759 = vmul.f32 1.0, %v758
      %v760 = vrcp.pop %v546
      %v761 = vmul.f32 %v546, %v760
      %v762 = vsub.f32 1.0, %v761
      %v763 = vmul.f32 %v760, %v762
      %v764 = vadd.f32 %v760, %v763
      %vm765 = vweird.f32 %v546
      %vm766 = vweird.f32 %v760
      %vm767 = vmor %vm765, %vm766
      %v768 = vsel %vm767, %v760, %v764
      %v769 = vand.u32 2147483647, %v546
      %vm770 = vcmp.eq.f32.partialorder %v769, 8.507059e+37
      %v771 = vand.u32 %v546, 2147483648
      %v772 = vor.u32 1.1754944e-38, %v771
      %v773 = vsel %vm770, %v772, %v768
      %v774 = vmul.f32 1.0, %v773
      %v775 = vrcp.pop %v547
      %v776 = vmul.f32 %v547, %v775
      %v777 = vsub.f32 1.0, %v776
      %v778 = vmul.f32 %v775, %v777
      %v779 = vadd.f32 %v775, %v778
      %vm780 = vweird.f32 %v547
      %vm781 = vweird.f32 %v775
      %vm782 = vmor %vm780, %vm781
      %v783 = vsel %vm782, %v775, %v779
      %v784 = vand.u32 2147483647, %v547
      %vm785 = vcmp.eq.f32.partialorder %v784, 8.507059e+37
      %v786 = vand.u32 %v547, 2147483648
      %v787 = vor.u32 1.1754944e-38, %v786
      %v788 = vsel %vm785, %v787, %v783
      %v789 = vmul.f32 1.0, %v788
      %v790 = vrcp.pop %v548
      %v791 = vmul.f32 %v548, %v790
      %v792 = vsub.f32 1.0, %v791
      %v793 = vmul.f32 %v790, %v792
      %v794 = vadd.f32 %v790, %v793
      %vm795 = vweird.f32 %v548
      %vm796 = vweird.f32 %v790
      %vm797 = vmor %vm795, %vm796
      %v798 = vsel %vm797, %v790, %v794
      %v799 = vand.u32 2147483647, %v548
      %vm800 = vcmp.eq.f32.partialorder %v799, 8.507059e+37
      %v801 = vand.u32 %v548, 2147483648
      %v802 = vor.u32 1.1754944e-38, %v801
      %v803 = vsel %vm800, %v802, %v798
      %v804 = vmul.f32 1.0, %v803
      %v805 = vrcp.pop %v549
      %v806 = vmul.f32 %v549, %v805
      %v807 = vsub.f32 1.0, %v806
      %v808 = vmul.f32 %v805, %v807
      %v809 = vadd.f32 %v805, %v808
      %vm810 = vweird.f32 %v549
      %vm811 = vweird.f32 %v805
      %vm812 = vmor %vm810, %vm811
      %v813 = vsel %vm812, %v805, %v809
      %v814 = vand.u32 2147483647, %v549
      %vm815 = vcmp.eq.f32.partialorder %v814, 8.507059e+37
      %v816 = vand.u32 %v549, 2147483648
      %v817 = vor.u32 1.1754944e-38, %v816
      %v818 = vsel %vm815, %v817, %v813
      %v819 = vmul.f32 1.0, %v818
      %v820 = vrcp.pop %v550
      %v821 = vmul.f32 %v550, %v820
      %v822 = vsub.f32 1.0, %v821
      %v823 = vmul.f32 %v820, %v822
      %v824 = vadd.f32 %v820, %v823
      %vm825 = vweird.f32 %v550
      %vm826 = vweird.f32 %v820
      %vm827 = vmor %vm825, %vm826
      %v828 = vsel %vm827, %v820, %v824
      %v829 = vand.u32 2147483647, %v550
      %vm830 = vcmp.eq.f32.partialorder %v829, 8.507059e+37
      %v831 = vand.u32 %v550, 2147483648
      %v832 = vor.u32 1.1754944e-38, %v831
      %v833 = vsel %vm830, %v832, %v828
      %v834 = vmul.f32 1.0, %v833
      %v835 = vrcp.pop %v551
      %v836 = vmul.f32 %v551, %v835
      %v837 = vsub.f32 1.0, %v836
      %v838 = vmul.f32 %v835, %v837
      %v839 = vadd.f32 %v835, %v838
      %vm840 = vweird.f32 %v551
      %vm841 = vweird.f32 %v835
      %vm842 = vmor %vm840, %vm841
      %v843 = vsel %vm842, %v835, %v839
      %v844 = vand.u32 2147483647, %v551
      %vm845 = vcmp.eq.f32.partialorder %v844, 8.507059e+37
      %v846 = vand.u32 %v551, 2147483648
      %v847 = vor.u32 1.1754944e-38, %v846
      %v848 = vsel %vm845, %v847, %v843
      %v849 = vmul.f32 1.0, %v848
      %v850 = vrcp.pop %v552
      %v851 = vmul.f32 %v552, %v850
      %v852 = vsub.f32 1.0, %v851
      %v853 = vmul.f32 %v850, %v852
      %v854 = vadd.f32 %v850, %v853
      %vm855 = vweird.f32 %v552
      %vm856 = vweird.f32 %v850
      %vm857 = vmor %vm855, %vm856
      %v858 = vsel %vm857, %v850, %v854
      %v859 = vand.u32 2147483647, %v552
      %vm860 = vcmp.eq.f32.partialorder %v859, 8.507059e+37
      %v861 = vand.u32 %v552, 2147483648
      %v862 = vor.u32 1.1754944e-38, %v861
      %v863 = vsel %vm860, %v862, %v858
      %v864 = vmul.f32 1.0, %v863
      %v865 = vrcp.pop %v553
      %v866 = vmul.f32 %v553, %v865
      %v867 = vsub.f32 1.0, %v866
      %v868 = vmul.f32 %v865, %v867
      %v869 = vadd.f32 %v865, %v868
      %vm870 = vweird.f32 %v553
      %vm871 = vweird.f32 %v865
      %vm872 = vmor %vm870, %vm871
      %v873 = vsel %vm872, %v865, %v869
      %v874 = vand.u32 2147483647, %v553
      %vm875 = vcmp.eq.f32.partialorder %v874, 8.507059e+37
      %v876 = vand.u32 %v553, 2147483648
      %v877 = vor.u32 1.1754944e-38, %v876
      %v878 = vsel %vm875, %v877, %v873
      %v879 = vmul.f32 1.0, %v878
      %v880 = vrcp.pop %v554
      %v881 = vmul.f32 %v554, %v880
      %v882 = vsub.f32 1.0, %v881
      %v883 = vmul.f32 %v880, %v882
      %v884 = vadd.f32 %v880, %v883
      %vm885 = vweird.f32 %v554
      %vm886 = vweird.f32 %v880
      %vm887 = vmor %vm885, %vm886
      %v888 = vsel %vm887, %v880, %v884
      %v889 = vand.u32 2147483647, %v554
      %vm890 = vcmp.eq.f32.partialorder %v889, 8.507059e+37
      %v891 = vand.u32 %v554, 2147483648
      %v892 = vor.u32 1.1754944e-38, %v891
      %v893 = vsel %vm890, %v892, %v888
      %v894 = vmul.f32 1.0, %v893
      %v895 = vrcp.pop %v555
      %v896 = vmul.f32 %v555, %v895
      %v897 = vsub.f32 1.0, %v896
      %v898 = vmul.f32 %v895, %v897
      %v899 = vadd.f32 %v895, %v898
      %vm900 = vweird.f32 %v555
      %vm901 = vweird.f32 %v895
      %vm902 = vmor %vm900, %vm901
      %v903 = vsel %vm902, %v895, %v899
      %v904 = vand.u32 2147483647, %v555
      %vm905 = vcmp.eq.f32.partialorder %v904, 8.507059e+37
      %v906 = vand.u32 %v555, 2147483648
      %v907 = vor.u32 1.1754944e-38, %v906
      %v908 = vsel %vm905, %v907, %v903
      %v909 = vmul.f32 1.0, %v908
      %v910 = vrcp.pop %v556
      %v911 = vmul.f32 %v556, %v910
      %v912 = vsub.f32 1.0, %v911
      %v913 = vmul.f32 %v910, %v912
      %v914 = vadd.f32 %v910, %v913
      %vm915 = vweird.f32 %v556
      %vm916 = vweird.f32 %v910
      %vm917 = vmor %vm915, %vm916
      %v918 = vsel %vm917, %v910, %v914
      %v919 = vand.u32 2147483647, %v556
      %vm920 = vcmp.eq.f32.partialorder %v919, 8.507059e+37
      %v921 = vand.u32 %v556, 2147483648
      %v922 = vor.u32 1.1754944e-38, %v921
      %v923 = vsel %vm920, %v922, %v918
      %v924 = vmul.f32 1.0, %v923
      %v925 = vrcp.pop %v557
      %v926 = vmul.f32 %v557, %v925
      %v927 = vsub.f32 1.0, %v926
      %v928 = vmul.f32 %v925, %v927
      %v929 = vadd.f32 %v925, %v928
      %vm930 = vweird.f32 %v557
      %vm931 = vweird.f32 %v925
      %vm932 = vmor %vm930, %vm931
      %v933 = vsel %vm932, %v925, %v929
      %v934 = vand.u32 2147483647, %v557
      %vm935 = vcmp.eq.f32.partialorder %v934, 8.507059e+37
      %v936 = vand.u32 %v557, 2147483648
      %v937 = vor.u32 1.1754944e-38, %v936
      %v938 = vsel %vm935, %v937, %v933
      %v939 = vmul.f32 1.0, %v938
      %v940 = vrcp.pop %v558
      %v941 = vmul.f32 %v558, %v940
      %v942 = vsub.f32 1.0, %v941
      %v943 = vmul.f32 %v940, %v942
      %v944 = vadd.f32 %v940, %v943
      %vm945 = vweird.f32 %v558
      %vm946 = vweird.f32 %v940
      %vm947 = vmor %vm945, %vm946
      %v948 = vsel %vm947, %v940, %v944
      %v949 = vand.u32 2147483647, %v558
      %vm950 = vcmp.eq.f32.partialorder %v949, 8.507059e+37
      %v951 = vand.u32 %v558, 2147483648
      %v952 = vor.u32 1.1754944e-38, %v951
      %v953 = vsel %vm950, %v952, %v948
      %v954 = vmul.f32 1.0, %v953
      %v955 = vrcp.pop %v559
      %v956 = vmul.f32 %v559, %v955
      %v957 = vsub.f32 1.0, %v956
      %v958 = vmul.f32 %v955, %v957
      %v959 = vadd.f32 %v955, %v958
      %vm960 = vweird.f32 %v559
      %vm961 = vweird.f32 %v955
      %vm962 = vmor %vm960, %vm961
      %v963 = vsel %vm962, %v955, %v959
      %v964 = vand.u32 2147483647, %v559
      %vm965 = vcmp.eq.f32.partialorder %v964, 8.507059e+37
      %v966 = vand.u32 %v559, 2147483648
      %v967 = vor.u32 1.1754944e-38, %v966
      %v968 = vsel %vm965, %v967, %v963
      %v969 = vmul.f32 1.0, %v968
      %v970 = vrcp.pop %v560
      %v971 = vmul.f32 %v560, %v970
      %v972 = vsub.f32 1.0, %v971
      %v973 = vmul.f32 %v970, %v972
      %v974 = vadd.f32 %v970, %v973
      %vm975 = vweird.f32 %v560
      %vm976 = vweird.f32 %v970
      %vm977 = vmor %vm975, %vm976
      %v978 = vsel %vm977, %v970, %v974
      %v979 = vand.u32 2147483647, %v560
      %vm980 = vcmp.eq.f32.partialorder %v979, 8.507059e+37
      %v981 = vand.u32 %v560, 2147483648
      %v982 = vor.u32 1.1754944e-38, %v981
      %v983 = vsel %vm980, %v982, %v978
      %v984 = vmul.f32 1.0, %v983
      %v985 = vrcp.pop %v561
      %v986 = vmul.f32 %v561, %v985
      %v987 = vsub.f32 1.0, %v986
      %v988 = vmul.f32 %v985, %v987
      %v989 = vadd.f32 %v985, %v988
      %vm990 = vweird.f32 %v561
      %vm991 = vweird.f32 %v985
      %vm992 = vmor %vm990, %vm991
      %v993 = vsel %vm992, %v985, %v989
      %v994 = vand.u32 2147483647, %v561
      %vm995 = vcmp.eq.f32.partialorder %v994, 8.507059e+37
      %v996 = vand.u32 %v561, 2147483648
      %v997 = vor.u32 1.1754944e-38, %v996
      %v998 = vsel %vm995, %v997, %v993
      %v999 = vmul.f32 1.0, %v998
      %v1000 = vrcp.pop %v562
      %v1001 = vmul.f32 %v562, %v1000
      %v1002 = vsub.f32 1.0, %v1001
      %v1003 = vmul.f32 %v1000, %v1002
      %v1004 = vadd.f32 %v1000, %v1003
      %vm1005 = vweird.f32 %v562
      %vm1006 = vweird.f32 %v1000
      %vm1007 = vmor %vm1005, %vm1006
      %v1008 = vsel %vm1007, %v1000, %v1004
      %v1009 = vand.u32 2147483647, %v562
      %vm1010 = vcmp.eq.f32.partialorder %v1009, 8.507059e+37
      %v1011 = vand.u32 %v562, 2147483648
      %v1012 = vor.u32 1.1754944e-38, %v1011
      %v1013 = vsel %vm1010, %v1012, %v1008
      %v1014 = vmul.f32 1.0, %v1013
      %v1015 = vrcp.pop %v563
      %v1016 = vmul.f32 %v563, %v1015
      %v1017 = vsub.f32 1.0, %v1016
      %v1018 = vmul.f32 %v1015, %v1017
      %v1019 = vadd.f32 %v1015, %v1018
      %vm1020 = vweird.f32 %v563
      %vm1021 = vweird.f32 %v1015
      %vm1022 = vmor %vm1020, %vm1021
      %v1023 = vsel %vm1022, %v1015, %v1019
      %v1024 = vand.u32 2147483647, %v563
      %vm1025 = vcmp.eq.f32.partialorder %v1024, 8.507059e+37
      %v1026 = vand.u32 %v563, 2147483648
      %v1027 = vor.u32 1.1754944e-38, %v1026
      %v1028 = vsel %vm1025, %v1027, %v1023
      %v1029 = vmul.f32 1.0, %v1028
      %v1030 = vrcp.pop %v564
      %v1031 = vmul.f32 %v564, %v1030
      %v1032 = vsub.f32 1.0, %v1031
      %v1033 = vmul.f32 %v1030, %v1032
      %v1034 = vadd.f32 %v1030, %v1033
      %vm1035 = vweird.f32 %v564
      %vm1036 = vweird.f32 %v1030
      %vm1037 = vmor %vm1035, %vm1036
      %v1038 = vsel %vm1037, %v1030, %v1034
      %v1039 = vand.u32 2147483647, %v564
      %vm1040 = vcmp.eq.f32.partialorder %v1039, 8.507059e+37
      %v1041 = vand.u32 %v564, 2147483648
      %v1042 = vor.u32 1.1754944e-38, %v1041
      %v1043 = vsel %vm1040, %v1042, %v1038
      %v1044 = vmul.f32 1.0, %v1043
      %v1045 = vmul.f32 %v358, %v579
      %v1046 = vmul.f32 %v360, %v594
      %v1047 = vmul.f32 %v363, %v609
      %v1048 = vmul.f32 %v365, %v624
      %v1049 = vmul.f32 %v368, %v639
      %v1050 = vmul.f32 %v370, %v654
      %v1051 = vmul.f32 %v373, %v669
      %v1052 = vmul.f32 %v375, %v684
      %v1053 = vmul.f32 %v378, %v699
      %v1054 = vmul.f32 %v380, %v714
      %v1055 = vmul.f32 %v383, %v729
      %v1056 = vmul.f32 %v385, %v744
      %v1057 = vmul.f32 %v388, %v759
      %v1058 = vmul.f32 %v390, %v774
      %v1059 = vmul.f32 %v393, %v789
      %v1060 = vmul.f32 %v395, %v804
      %v1061 = vmul.f32 %v398, %v819
      %v1062 = vmul.f32 %v400, %v834
      %v1063 = vmul.f32 %v403, %v849
      %v1064 = vmul.f32 %v405, %v864
      %v1065 = vmul.f32 %v408, %v879
      %v1066 = vmul.f32 %v410, %v894
      %v1067 = vmul.f32 %v413, %v909
      %v1068 = vmul.f32 %v415, %v924
      %v1069 = vmul.f32 %v418, %v939
      %v1070 = vmul.f32 %v420, %v954
      %v1071 = vmul.f32 %v423, %v969
      %v1072 = vmul.f32 %v425, %v984
      %v1073 = vmul.f32 %v428, %v999
      %v1074 = vmul.f32 %v430, %v1014
      %v1075 = vmul.f32 %v433, %v1029
      %v1076 = vmul.f32 %v435, %v1044
      %vm1077 = vcmask 261120
      %1078 = vst.msk [vmem:[%s172] sm:$0xff] %vm1077, %v1045
      %1079 = vst.msk [vmem:[%s172 + $0x8] sm:$0xff] %vm1077, %v1046
      %1080 = vst.msk [vmem:[%s172 + $0x10] sm:$0xff] %vm1077, %v1047
      %1081 = vst.msk [vmem:[%s172 + $0x18] sm:$0xff] %vm1077, %v1048
      %1082 = vst.msk [vmem:[%s172 + $0x20] sm:$0xff] %vm1077, %v1049
      %1083 = vst.msk [vmem:[%s172 + $0x28] sm:$0xff] %vm1077, %v1050
      %1084 = vst.msk [vmem:[%s172 + $0x30] sm:$0xff] %vm1077, %v1051
      %1085 = vst.msk [vmem:[%s172 + $0x38] sm:$0xff] %vm1077, %v1052
      %1086 = vst.msk [vmem:[%s172 + $0x40] sm:$0xff] %vm1077, %v1053
      %1087 = vst.msk [vmem:[%s172 + $0x48] sm:$0xff] %vm1077, %v1054
      %1088 = vst.msk [vmem:[%s172 + $0x50] sm:$0xff] %vm1077, %v1055
      %1089 = vst.msk [vmem:[%s172 + $0x58] sm:$0xff] %vm1077, %v1056
      %1090 = vst.msk [vmem:[%s172 + $0x60] sm:$0xff] %vm1077, %v1057
      %1091 = vst.msk [vmem:[%s172 + $0x68] sm:$0xff] %vm1077, %v1058
      %1092 = vst.msk [vmem:[%s172 + $0x70] sm:$0xff] %vm1077, %v1059
      %1093 = vst.msk [vmem:[%s172 + $0x78] sm:$0xff] %vm1077, %v1060
      %1094 = vst.msk [vmem:[%s172 + $0x80] sm:$0xff] %vm1077, %v1061
      %1095 = vst.msk [vmem:[%s172 + $0x88] sm:$0xff] %vm1077, %v1062
      %1096 = vst.msk [vmem:[%s172 + $0x90] sm:$0xff] %vm1077, %v1063
      %1097 = vst.msk [vmem:[%s172 + $0x98] sm:$0xff] %vm1077, %v1064
      %1098 = vst.msk [vmem:[%s172 + $0xa0] sm:$0xff] %vm1077, %v1065
      %1099 = vst.msk [vmem:[%s172 + $0xa8] sm:$0xff] %vm1077, %v1066
      %1100 = vst.msk [vmem:[%s172 + $0xb0] sm:$0xff] %vm1077, %v1067
      %1101 = vst.msk [vmem:[%s172 + $0xb8] sm:$0xff] %vm1077, %v1068
      %1102 = vst.msk [vmem:[%s172 + $0xc0] sm:$0xff] %vm1077, %v1069
      %1103 = vst.msk [vmem:[%s172 + $0xc8] sm:$0xff] %vm1077, %v1070
      %1104 = vst.msk [vmem:[%s172 + $0xd0] sm:$0xff] %vm1077, %v1071
      %1105 = vst.msk [vmem:[%s172 + $0xd8] sm:$0xff] %vm1077, %v1072
      %1106 = vst.msk [vmem:[%s172 + $0xe0] sm:$0xff] %vm1077, %v1073
      %1107 = vst.msk [vmem:[%s172 + $0xe8] sm:$0xff] %vm1077, %v1074
      %1108 = vst.msk [vmem:[%s172 + $0xf0] sm:$0xff] %vm1077, %v1075
      %1109 = vst.msk [vmem:[%s172 + $0xf8] sm:$0xff] %vm1077, %v1076
      %s1110 = smul.u32 32, %s14
      %p1111 = scmp.lt.s32.totalorder %s1110, 63
      %s1112 = scalar_select %p1111, %s1110, 63
      %s1113 = smul.addr %s1112, 8
      %s1114 = scalar_lea.vmem %s3, %s1113
      // Predicated region
      $region33: #{vision_tower_forward.7} parent=31 // pred_check
        %p1115 = pneg %p100
      $region34: #{vision_tower_forward.7} parent=31 // pred_check_branch
        %1117 = sbr.rel (%p1115) target = $region36
      $region35: #{vision_tower_forward.7} parent=31 // pred_region
        %s1118 = smul.u32 32, %s14
      $region36: #{vision_tower_forward.7} parent=31 // pred_fallthru
        _
    $region32: #{vision_tower_forward.7} parent=5 // pred_fallthru
      _
    %p1119 = scmp.le.s32.totalorder 2, %s9
    // Predicated region
    $region37: #{vision_tower_forward.7} parent=5 // pred_check
      %p1120 = pneg %p1119
    $region38: #{vision_tower_forward.7} parent=5 // pred_check_branch
      %1122 = sbr.rel (%p1120) target = $region40
    $region39: #{vision_tower_forward.7} parent=5 // pred_region
      %s1123 = ssub.s32 %s9, 2
      // Predicated region
      $region41: #{vision_tower_forward.7} parent=39 // pred_check
        %p1124 = pneg %p106
      $region42: #{vision_tower_forward.7} parent=39 // pred_check_branch
        %1126 = sbr.rel (%p1124) target = $region44
      $region43: #{vision_tower_forward.7} parent=39 // pred_region
        %s1127 = smul.u32 32, %s15
        %p1128 = scmp.lt.s32.totalorder %s1127, 63
        %s1129 = scalar_select %p1128, %s1127, 63
        %s1130 = smul.addr %s1129, 8
        %s1131 = scalar_lea.vmem %s3, %s1130
      $region44: #{vision_tower_forward.7} parent=39 // pred_fallthru
        _
    $region40: #{vision_tower_forward.7} parent=5 // pred_fallthru
      _
  $region6: #{vision_tower_forward.7} parent=0 // loop_footer
    %s13 = sadd.s32 1, %s9
  $region7: #{vision_tower_forward.7} parent=0 // loop_footer_branch
    %8 = sbr.rel target = $region3
  $region8: #{vision_tower_forward.7} parent=0 // loop_exit
    _

// kernel: vision_tower_forward.6
$region0: #{vision_tower_forward.6}
  #allocation0 [shape = 'u32[]', space=smem, size = 0x4, offset = 0x4, fixed_abs, tag = 'smem constant byte address 0x4 - core index']
  #allocation1 [shape = 'u32[72,128]{1,0:T(1,128)}', space=vmem, size = 0x9000, scoped, tag = 'internal scratch']
  %s0 = inlined_call_operand.vmem [shape: bf16[512,27], index: 0, kind: input, shape index: {}]
  %s1 = inlined_call_operand.vmem [shape: bf16[27,16], index: 1, kind: input, shape index: {}]
  %s2 = inlined_call_operand.vmem [shape: f32[1,16], index: 2, kind: input, shape index: {}]
  %s3 = inlined_call_operand.vmem [shape: f32[512,16], index: 3, kind: output, shape index: {}]
  %s4 = sld [smem:[#allocation0]]
  $region45: #{vision_tower_forward.6} parent=0
    _
  %s6 = ssub.s32 1, %s4
  %s7 = scalar_select 0, %s6, %s4
  loop: start=0, step=1, limit=4
  $region2: #{vision_tower_forward.6} parent=0 // loop_pre_header
    _
  $region3: #{vision_tower_forward.6} parent=0 // loop_header
    %s9 = sphi 0, %s13
    %p10 = scmp.ge.s32.totalorder %s9, 4
    %s19 = sphi 0, %s21
    %s22 = sphi 0, %s19
    %s23 = sphi 0, %s22
    %s39 = sphi 0, %s23
    %s43 = sphi 0, %s43
    %s45 = sphi 0, %s43
    %s46 = sphi 0, %s45
    %s60 = sphi 0, %s46
    %s64 = sphi 0, %s64
    %s66 = sphi 0, %s64
    %s67 = sphi 0, %s66
    %s81 = sphi 0, %s67
    %s87 = sphi 0, %s89
    %s90 = sphi 0, %s87
    %s91 = sphi 0, %s90
    %s107 = sphi 0, %s91
  $region4: #{vision_tower_forward.6} parent=0 // loop_header_branch
    %12 = sbr.rel (%p10) target = $region8
  $region5: #{vision_tower_forward.6} parent=0 // loop_body
    %s14 = ssub.s32 %s9, 1
    %s15 = ssub.s32 %s9, 2
    %s16 = sadd.s32 %s9, 1
    %s17 = ssub.s32 %s9, %s16
    %p18 = scmp.eq.s32.totalorder %s17, 0
    %s20 = sadd.s32 %s19, 1
    %s21 = scalar_select %p18, %s19, %s20
    %p24 = pneg %p18
    %p25 = scmp.eq.s32.totalorder %s9, 1
    %p26 = por %p24, %p25
    %p27 = scmp.ne.s32.totalorder %s19, %s22
    %p28 = scmp.eq.s32.totalorder %s9, 0
    %p29 = por %p27, %p28
    %p30 = scmp.ne.s32.totalorder %s19, %s22
    %p31 = scmp.eq.s32.totalorder %s14, 1
    %p32 = por %p30, %p31
    %p33 = scmp.ne.s32.totalorder %s22, %s23
    %p34 = scmp.eq.s32.totalorder %s14, 0
    %p35 = por %p33, %p34
    %p36 = scmp.ne.s32.totalorder %s22, %s23
    %p37 = scmp.eq.s32.totalorder %s15, 1
    %p38 = por %p36, %p37
    %p40 = scmp.ne.s32.totalorder %s23, %s39
    %p41 = scmp.eq.s32.totalorder %s15, 0
    %p42 = por %p40, %p41
    %s44 = sadd.s32 %s43, 1
    %p47 = scmp.eq.s32.totalorder %s9, 1
    %p48 = scmp.ne.s32.totalorder %s43, %s45
    %p49 = scmp.eq.s32.totalorder %s9, 0
    %p50 = por %p48, %p49
    %p51 = scmp.ne.s32.totalorder %s43, %s45
    %p52 = scmp.eq.s32.totalorder %s14, 1
    %p53 = por %p51, %p52
    %p54 = scmp.ne.s32.totalorder %s45, %s46
    %p55 = scmp.eq.s32.totalorder %s14, 0
    %p56 = por %p54, %p55
    %p57 = scmp.ne.s32.totalorder %s45, %s46
    %p58 = scmp.eq.s32.totalorder %s15, 1
    %p59 = por %p57, %p58
    %p61 = scmp.ne.s32.totalorder %s46, %s60
    %p62 = scmp.eq.s32.totalorder %s15, 0
    %p63 = por %p61, %p62
    %s65 = sadd.s32 %s64, 1
    %p68 = scmp.eq.s32.totalorder %s9, 1
    %p69 = scmp.ne.s32.totalorder %s64, %s66
    %p70 = scmp.eq.s32.totalorder %s9, 0
    %p71 = por %p69, %p70
    %p72 = scmp.ne.s32.totalorder %s64, %s66
    %p73 = scmp.eq.s32.totalorder %s14, 1
    %p74 = por %p72, %p73
    %p75 = scmp.ne.s32.totalorder %s66, %s67
    %p76 = scmp.eq.s32.totalorder %s14, 0
    %p77 = por %p75, %p76
    %p78 = scmp.ne.s32.totalorder %s66, %s67
    %p79 = scmp.eq.s32.totalorder %s15, 1
    %p80 = por %p78, %p79
    %p82 = scmp.ne.s32.totalorder %s67, %s81
    %p83 = scmp.eq.s32.totalorder %s15, 0
    %p84 = por %p82, %p83
    %s85 = ssub.s32 %s9, %s16
    %p86 = scmp.eq.s32.totalorder %s85, 0
    %s88 = sadd.s32 %s87, 1
    %s89 = scalar_select %p86, %s87, %s88
    %p92 = pneg %p86
    %p93 = scmp.eq.s32.totalorder %s9, 1
    %p94 = por %p92, %p93
    %p95 = scmp.ne.s32.totalorder %s87, %s90
    %p96 = scmp.eq.s32.totalorder %s9, 0
    %p97 = por %p95, %p96
    %p98 = scmp.ne.s32.totalorder %s87, %s90
    %p99 = scmp.eq.s32.totalorder %s14, 1
    %p100 = por %p98, %p99
    %p101 = scmp.ne.s32.totalorder %s90, %s91
    %p102 = scmp.eq.s32.totalorder %s14, 0
    %p103 = por %p101, %p102
    %p104 = scmp.ne.s32.totalorder %s90, %s91
    %p105 = scmp.eq.s32.totalorder %s15, 1
    %p106 = por %p104, %p105
    %p108 = scmp.ne.s32.totalorder %s91, %s107
    %p109 = scmp.eq.s32.totalorder %s15, 0
    %p110 = por %p108, %p109
    %p111 = scmp.le.s32.totalorder 1, %s9
    %p112 = scmp.lt.s32.totalorder %s9, 3
    %p113 = pnand %p111, %p112
    %p114 = pneg %p113
    // Predicated region
    $region9: #{vision_tower_forward.6} parent=5 // pred_check
      _
    $region10: #{vision_tower_forward.6} parent=5 // pred_check_branch
      %116 = sbr.rel (%p113) target = $region12
    $region11: #{vision_tower_forward.6} parent=5 // pred_region
      %s117 = ssub.s32 %s9, 1
      // Predicated region
      $region13: #{vision_tower_forward.6} parent=11 // pred_check
        %p118 = pneg %p56
      $region14: #{vision_tower_forward.6} parent=11 // pred_check_branch
        %120 = sbr.rel (%p118) target = $region16
      $region15: #{vision_tower_forward.6} parent=11 // pred_region
        _
      $region16: #{vision_tower_forward.6} parent=11 // pred_fallthru
        _
      // Predicated region
      $region17: #{vision_tower_forward.6} parent=11 // pred_check
        %p121 = pneg %p77
      $region18: #{vision_tower_forward.6} parent=11 // pred_check_branch
        %123 = sbr.rel (%p121) target = $region20
      $region19: #{vision_tower_forward.6} parent=11 // pred_region
        _
      $region20: #{vision_tower_forward.6} parent=11 // pred_fallthru
        _
    $region12: #{vision_tower_forward.6} parent=5 // pred_fallthru
      _
    %p124 = scmp.lt.s32.totalorder %s9, 2
    // Predicated region
    $region21: #{vision_tower_forward.6} parent=5 // pred_check
      %p125 = pneg %p124
    $region22: #{vision_tower_forward.6} parent=5 // pred_check_branch
      %127 = sbr.rel (%p125) target = $region24
    $region23: #{vision_tower_forward.6} parent=5 // pred_region
      // Predicated region
      $region25: #{vision_tower_forward.6} parent=23 // pred_check
        %p128 = pneg %p29
      $region26: #{vision_tower_forward.6} parent=23 // pred_check_branch
        %130 = sbr.rel (%p128) target = $region28
      $region27: #{vision_tower_forward.6} parent=23 // pred_region
        %s131 = smul.u32 32, %s9
        %p132 = scmp.lt.s32.totalorder %s131, 63
        %s133 = scalar_select %p132, %s131, 63
        %s134 = smul.addr %s133, 4
        %s135 = scalar_lea.vmem %s0, %s134
        %s136 = smul.u32 32, %s9
      $region28: #{vision_tower_forward.6} parent=23 // pred_fallthru
        _
    $region24: #{vision_tower_forward.6} parent=5 // pred_fallthru
      _
    %p137 = scmp.le.s32.totalorder 1, %s9
    %p138 = scmp.lt.s32.totalorder %s9, 3
    %p139 = pnand %p137, %p138
    %p140 = pneg %p139
    // Predicated region
    $region29: #{vision_tower_forward.6} parent=5 // pred_check
      _
    $region30: #{vision_tower_forward.6} parent=5 // pred_check_branch
      %142 = sbr.rel (%p139) target = $region32
    $region31: #{vision_tower_forward.6} parent=5 // pred_region
      %s143 = ssub.s32 %s9, 1
      %s144 = smul.u32 32, %s14
      %p145 = scmp.lt.s32.totalorder %s144, 63
      %s146 = scalar_select %p145, %s144, 63
      %s147 = smul.addr %s146, 4
      %s148 = scalar_lea.vmem %s0, %s147
      %p149 = pneg %p35
      %p150 = pneg %p32
      %p151 = pneg %p56
      %p152 = pneg %p53
      %p153 = pneg %p77
      %p154 = pneg %p74
      %p155 = pneg %p103
      %p156 = pneg %p100
      %s157 = smul.u32 32, %s14
      %p158 = scmp.lt.s32.totalorder %s157, 63
      %s159 = scalar_select %p158, %s157, 63
      %s160 = smul.addr %s159, 8
      %s161 = scalar_lea.vmem %s3, %s160
      %s162 = smul.u32 32, %s14
      %p163 = scmp.lt.s32.totalorder %s162, 63
      %s164 = scalar_select %p163, %s162, 63
      %s165 = smul.addr %s164, 4
      %s166 = scalar_lea.vmem %s0, %s165
      %s167 = smul.u32 32, %s14
      %s168 = smul.u32 32, %s14
      %p169 = scmp.lt.s32.totalorder %s168, 63
      %s170 = scalar_select %p169, %s168, 63
      %s171 = smul.addr %s170, 8
      %s172 = scalar_lea.vmem %s3, %s171
      %s173 = smul.u32 32, %s14
      %v175 = vld [vmem:[%s166] sm:$0xf]
      %v176 = vld [vmem:[%s166 + $0x4] sm:$0xf]
      %v177 = vld [vmem:[%s166 + $0x8] sm:$0xf]
      %v178 = vld [vmem:[%s166 + $0xc] sm:$0xf]
      %v179 = vld [vmem:[%s166 + $0x10] sm:$0xf]
      %v180 = vld [vmem:[%s166 + $0x14] sm:$0xf]
      %v181 = vld [vmem:[%s166 + $0x18] sm:$0xf]
      %v182 = vld [vmem:[%s166 + $0x1c] sm:$0xf]
      %v183 = vld [vmem:[%s166 + $0x20] sm:$0xf]
      %v184 = vld [vmem:[%s166 + $0x24] sm:$0xf]
      %v185 = vld [vmem:[%s166 + $0x28] sm:$0xf]
      %v186 = vld [vmem:[%s166 + $0x2c] sm:$0xf]
      %v187 = vld [vmem:[%s166 + $0x30] sm:$0xf]
      %v188 = vld [vmem:[%s166 + $0x34] sm:$0xf]
      %v189 = vld [vmem:[%s166 + $0x38] sm:$0xf]
      %v190 = vld [vmem:[%s166 + $0x3c] sm:$0xf]
      %v191 = vld [vmem:[%s166 + $0x40] sm:$0xf]
      %v192 = vld [vmem:[%s166 + $0x44] sm:$0xf]
      %v193 = vld [vmem:[%s166 + $0x48] sm:$0xf]
      %v194 = vld [vmem:[%s166 + $0x4c] sm:$0xf]
      %v195 = vld [vmem:[%s166 + $0x50] sm:$0xf]
      %v196 = vld [vmem:[%s166 + $0x54] sm:$0xf]
      %v197 = vld [vmem:[%s166 + $0x58] sm:$0xf]
      %v198 = vld [vmem:[%s166 + $0x5c] sm:$0xf]
      %v199 = vld [vmem:[%s166 + $0x60] sm:$0xf]
      %v200 = vld [vmem:[%s166 + $0x64] sm:$0xf]
      %v201 = vld [vmem:[%s166 + $0x68] sm:$0xf]
      %v202 = vld [vmem:[%s166 + $0x6c] sm:$0xf]
      %v203 = vld [vmem:[%s166 + $0x70] sm:$0xf]
      %v204 = vld [vmem:[%s166 + $0x74] sm:$0xf]
      %v205 = vld [vmem:[%s166 + $0x78] sm:$0xf]
      %v206 = vld [vmem:[%s166 + $0x7c] sm:$0xf]
      %v207 = vld [vmem:[%s1] sm:$0xf]
      %v208 = vld [vmem:[%s1 + $0x4] sm:$0xf]
      %v209 = vld [vmem:[%s1 + $0x8] sm:$0xf]
      %v210 = vld [vmem:[%s1 + $0xc] sm:$0x3]
      %v211 = vld [vmem:[%s2] sm:$0x1]
      %v213 = vperm.slane %v211, 0
      %v247 = vunpack.c.l.b16 %v175
      %v248 = vunpack.c.l.b16 %v176
      %v249 = vunpack.c.l.b16 %v177
      %v250 = vunpack.c.l.b16 %v178
      %v251 = vunpack.c.l.b16 %v179
      %v252 = vunpack.c.l.b16 %v180
      %v253 = vunpack.c.l.b16 %v181
      %v254 = vunpack.c.l.b16 %v182
      %v255 = vunpack.c.l.b16 %v183
      %v256 = vunpack.c.l.b16 %v184
      %v257 = vunpack.c.l.b16 %v185
      %v258 = vunpack.c.l.b16 %v186
      %v259 = vunpack.c.l.b16 %v187
      %v260 = vunpack.c.l.b16 %v188
      %v261 = vunpack.c.l.b16 %v189
      %v262 = vunpack.c.l.b16 %v190
      %v263 = vunpack.c.l.b16 %v191
      %v264 = vunpack.c.l.b16 %v192
      %v265 = vunpack.c.l.b16 %v193
      %v266 = vunpack.c.l.b16 %v194
      %v267 = vunpack.c.l.b16 %v195
      %v268 = vunpack.c.l.b16 %v196
      %v269 = vunpack.c.l.b16 %v197
      %v270 = vunpack.c.l.b16 %v198
      %v271 = vunpack.c.l.b16 %v199
      %v272 = vunpack.c.l.b16 %v200
      %v273 = vunpack.c.l.b16 %v201
      %v274 = vunpack.c.l.b16 %v202
      %v275 = vunpack.c.l.b16 %v203
      %v276 = vunpack.c.l.b16 %v204
      %v277 = vunpack.c.l.b16 %v205
      %v278 = vunpack.c.l.b16 %v206
      %v279 = vpack.c.b16 %v248, %v247
      %v280 = vpack.c.b16 %v250, %v249
      %v281 = vpack.c.b16 %v252, %v251
      %v282 = vpack.c.b16 %v254, %v253
      %v283 = vpack.c.b16 %v256, %v255
      %v284 = vpack.c.b16 %v258, %v257
      %v285 = vpack.c.b16 %v260, %v259
      %v286 = vpack.c.b16 %v262, %v261
      %v287 = vpack.c.b16 %v264, %v263
      %v288 = vpack.c.b16 %v266, %v265
      %v289 = vpack.c.b16 %v268, %v267
      %v290 = vpack.c.b16 %v270, %v269
      %v291 = vpack.c.b16 %v272, %v271
      %v292 = vpack.c.b16 %v274, %v273
      %v293 = vpack.c.b16 %v276, %v275
      %v294 = vpack.c.b16 %v278, %v277
      %v299 = vunpack.c.l.b16 %v207
      %v300 = vunpack.c.l.b16 %v208
      %v301 = vunpack.c.l.b16 %v209
      %v302 = vunpack.c.l.b16 %v210
      %v303 = vpack.c.b16 %v300, %v299
      %v304 = vpack.c.b16 %v302, %v301
      %vm306 = vcmask 220160
      %v308 = vsel %vm306, %v279, 0
      %v311 = vsel %vm306, %v280, 0
      %v314 = vsel %vm306, %v281, 0
      %v317 = vsel %vm306, %v282, 0
      %v320 = vsel %vm306, %v283, 0
      %v323 = vsel %vm306, %v284, 0
      %v326 = vsel %vm306, %v285, 0
      %v329 = vsel %vm306, %v286, 0
      %v332 = vsel %vm306, %v287, 0
      %v335 = vsel %vm306, %v288, 0
      %v338 = vsel %vm306, %v289, 0
      %v341 = vsel %vm306, %v290, 0
      %v344 = vsel %vm306, %v291, 0
      %v347 = vsel %vm306, %v292, 0
      %v350 = vsel %vm306, %v293, 0
      %v353 = vsel %vm306, %v294, 0
      %vm355 = vcmask 1044480
      %vm356 = vcmask 1045504
      %v357 = vsel %vm355, 4294967295, 65535
      %v358 = vsel %vm356, %v357, 0
      %v360 = vand.u32 %v304, %v358
      %362 = vmatpush.bf16.msra.mxu0 0
      %363 = vmatpush.bf16.msra.mxu0 0
      %364 = vmatpush.bf16.msra.mxu0 0
      %365 = vmatpush.bf16.msra.mxu0 0
      %366 = vmatpush.bf16.msra.mxu0 0
      %367 = vmatpush.bf16.msra.mxu0 0
      %368 = vmatpush.bf16.msra.mxu0 %v360
      %369 = vmatpush.bf16.msra.mxu0 %v303
      %370 = vmatmul.bf16.gmra.mxu0 %v308
      %v371 = vpop.f32.mrf.mxu0
      %v372 = vadd.f32 %v213, %v371
      %v373 = vpop.f32.mrf.mxu0
      %v374 = vadd.f32 %v213, %v373
      %375 = vmatmul.bf16.gmra.mxu0 %v311
      %v376 = vpop.f32.mrf.mxu0
      %v377 = vadd.f32 %v213, %v376
      %v378 = vpop.f32.mrf.mxu0
      %v379 = vadd.f32 %v213, %v378
      %380 = vmatmul.bf16.gmra.mxu0 %v314
      %v381 = vpop.f32.mrf.mxu0
      %v382 = vadd.f32 %v213, %v381
      %v383 = vpop.f32.mrf.mxu0
      %v384 = vadd.f32 %v213, %v383
      %385 = vmatmul.bf16.gmra.mxu0 %v317
      %v386 = vpop.f32.mrf.mxu0
      %v387 = vadd.f32 %v213, %v386
      %v388 = vpop.f32.mrf.mxu0
      %v389 = vadd.f32 %v213, %v388
      %390 = vmatmul.bf16.gmra.mxu0 %v320
      %v391 = vpop.f32.mrf.mxu0
      %v392 = vadd.f32 %v213, %v391
      %v393 = vpop.f32.mrf.mxu0
      %v394 = vadd.f32 %v213, %v393
      %395 = vmatmul.bf16.gmra.mxu0 %v323
      %v396 = vpop.f32.mrf.mxu0
      %v397 = vadd.f32 %v213, %v396
      %v398 = vpop.f32.mrf.mxu0
      %v399 = vadd.f32 %v213, %v398
      %400 = vmatmul.bf16.gmra.mxu0 %v326
      %v401 = vpop.f32.mrf.mxu0
      %v402 = vadd.f32 %v213, %v401
      %v403 = vpop.f32.mrf.mxu0
      %v404 = vadd.f32 %v213, %v403
      %405 = vmatmul.bf16.gmra.mxu0 %v329
      %v406 = vpop.f32.mrf.mxu0
      %v407 = vadd.f32 %v213, %v406
      %v408 = vpop.f32.mrf.mxu0
      %v409 = vadd.f32 %v213, %v408
      %410 = vmatmul.bf16.gmra.mxu0 %v332
      %v411 = vpop.f32.mrf.mxu0
      %v412 = vadd.f32 %v213, %v411
      %v413 = vpop.f32.mrf.mxu0
      %v414 = vadd.f32 %v213, %v413
      %415 = vmatmul.bf16.gmra.mxu0 %v335
      %v416 = vpop.f32.mrf.mxu0
      %v417 = vadd.f32 %v213, %v416
      %v418 = vpop.f32.mrf.mxu0
      %v419 = vadd.f32 %v213, %v418
      %420 = vmatmul.bf16.gmra.mxu0 %v338
      %v421 = vpop.f32.mrf.mxu0
      %v422 = vadd.f32 %v213, %v421
      %v423 = vpop.f32.mrf.mxu0
      %v424 = vadd.f32 %v213, %v423
      %425 = vmatmul.bf16.gmra.mxu0 %v341
      %v426 = vpop.f32.mrf.mxu0
      %v427 = vadd.f32 %v213, %v426
      %v428 = vpop.f32.mrf.mxu0
      %v429 = vadd.f32 %v213, %v428
      %430 = vmatmul.bf16.gmra.mxu0 %v344
      %v431 = vpop.f32.mrf.mxu0
      %v432 = vadd.f32 %v213, %v431
      %v433 = vpop.f32.mrf.mxu0
      %v434 = vadd.f32 %v213, %v433
      %435 = vmatmul.bf16.gmra.mxu0 %v347
      %v436 = vpop.f32.mrf.mxu0
      %v437 = vadd.f32 %v213, %v436
      %v438 = vpop.f32.mrf.mxu0
      %v439 = vadd.f32 %v213, %v438
      %440 = vmatmul.bf16.gmra.mxu0 %v350
      %v441 = vpop.f32.mrf.mxu0
      %v442 = vadd.f32 %v213, %v441
      %v443 = vpop.f32.mrf.mxu0
      %v444 = vadd.f32 %v213, %v443
      %445 = vmatmul.bf16.gmra.mxu0 %v353
      %v446 = vpop.f32.mrf.mxu0
      %v447 = vadd.f32 %v213, %v446
      %v448 = vpop.f32.mrf.mxu0
      %v449 = vadd.f32 %v213, %v448
      %450 = vdwg.mxu0
      %v451 = vxor.u32 %v372, 2147483648
      %v452 = vxor.u32 %v374, 2147483648
      %v453 = vxor.u32 %v377, 2147483648
      %v454 = vxor.u32 %v379, 2147483648
      %v455 = vxor.u32 %v382, 2147483648
      %v456 = vxor.u32 %v384, 2147483648
      %v457 = vxor.u32 %v387, 2147483648
      %v458 = vxor.u32 %v389, 2147483648
      %v459 = vxor.u32 %v392, 2147483648
      %v460 = vxor.u32 %v394, 2147483648
      %v461 = vxor.u32 %v397, 2147483648
      %v462 = vxor.u32 %v399, 2147483648
      %v463 = vxor.u32 %v402, 2147483648
      %v464 = vxor.u32 %v404, 2147483648
      %v465 = vxor.u32 %v407, 2147483648
      %v466 = vxor.u32 %v409, 2147483648
      %v467 = vxor.u32 %v412, 2147483648
      %v468 = vxor.u32 %v414, 2147483648
      %v469 = vxor.u32 %v417, 2147483648
      %v470 = vxor.u32 %v419, 2147483648
      %v471 = vxor.u32 %v422, 2147483648
      %v472 = vxor.u32 %v424, 2147483648
      %v473 = vxor.u32 %v427, 2147483648
      %v474 = vxor.u32 %v429, 2147483648
      %v475 = vxor.u32 %v432, 2147483648
      %v476 = vxor.u32 %v434, 2147483648
      %v477 = vxor.u32 %v437, 2147483648
      %v478 = vxor.u32 %v439, 2147483648
      %v479 = vxor.u32 %v442, 2147483648
      %v480 = vxor.u32 %v444, 2147483648
      %v481 = vxor.u32 %v447, 2147483648
      %v482 = vxor.u32 %v449, 2147483648
      %v483 = vmul.f32 %v451, 1.442695
      %v484 = vpow.pop %v483
      %v485 = vmul.f32 %v452, 1.442695
      %v486 = vpow.pop %v485
      %v487 = vmul.f32 %v453, 1.442695
      %v488 = vpow.pop %v487
      %v489 = vmul.f32 %v454, 1.442695
      %v490 = vpow.pop %v489
      %v491 = vmul.f32 %v455, 1.442695
      %v492 = vpow.pop %v491
      %v493 = vmul.f32 %v456, 1.442695
      %v494 = vpow.pop %v493
      %v495 = vmul.f32 %v457, 1.442695
      %v496 = vpow.pop %v495
      %v497 = vmul.f32 %v458, 1.442695
      %v498 = vpow.pop %v497
      %v499 = vmul.f32 %v459, 1.442695
      %v500 = vpow.pop %v499
      %v501 = vmul.f32 %v460, 1.442695
      %v502 = vpow.pop %v501
      %v503 = vmul.f32 %v461, 1.442695
      %v504 = vpow.pop %v503
      %v505 = vmul.f32 %v462, 1.442695
      %v506 = vpow.pop %v505
      %v507 = vmul.f32 %v463, 1.442695
      %v508 = vpow.pop %v507
      %v509 = vmul.f32 %v464, 1.442695
      %v510 = vpow.pop %v509
      %v511 = vmul.f32 %v465, 1.442695
      %v512 = vpow.pop %v511
      %v513 = vmul.f32 %v466, 1.442695
      %v514 = vpow.pop %v513
      %v515 = vmul.f32 %v467, 1.442695
      %v516 = vpow.pop %v515
      %v517 = vmul.f32 %v468, 1.442695
      %v518 = vpow.pop %v517
      %v519 = vmul.f32 %v469, 1.442695
      %v520 = vpow.pop %v519
      %v521 = vmul.f32 %v470, 1.442695
      %v522 = vpow.pop %v521
      %v523 = vmul.f32 %v471, 1.442695
      %v524 = vpow.pop %v523
      %v525 = vmul.f32 %v472, 1.442695
      %v526 = vpow.pop %v525
      %v527 = vmul.f32 %v473, 1.442695
      %v528 = vpow.pop %v527
      %v529 = vmul.f32 %v474, 1.442695
      %v530 = vpow.pop %v529
      %v531 = vmul.f32 %v475, 1.442695
      %v532 = vpow.pop %v531
      %v533 = vmul.f32 %v476, 1.442695
      %v534 = vpow.pop %v533
      %v535 = vmul.f32 %v477, 1.442695
      %v536 = vpow.pop %v535
      %v537 = vmul.f32 %v478, 1.442695
      %v538 = vpow.pop %v537
      %v539 = vmul.f32 %v479, 1.442695
      %v540 = vpow.pop %v539
      %v541 = vmul.f32 %v480, 1.442695
      %v542 = vpow.pop %v541
      %v543 = vmul.f32 %v481, 1.442695
      %v544 = vpow.pop %v543
      %v545 = vmul.f32 %v482, 1.442695
      %v546 = vpow.pop %v545
      %v547 = vadd.f32 %v484, 1.0
      %v548 = vadd.f32 %v486, 1.0
      %v549 = vadd.f32 %v488, 1.0
      %v550 = vadd.f32 %v490, 1.0
      %v551 = vadd.f32 %v492, 1.0
      %v552 = vadd.f32 %v494, 1.0
      %v553 = vadd.f32 %v496, 1.0
      %v554 = vadd.f32 %v498, 1.0
      %v555 = vadd.f32 %v500, 1.0
      %v556 = vadd.f32 %v502, 1.0
      %v557 = vadd.f32 %v504, 1.0
      %v558 = vadd.f32 %v506, 1.0
      %v559 = vadd.f32 %v508, 1.0
      %v560 = vadd.f32 %v510, 1.0
      %v561 = vadd.f32 %v512, 1.0
      %v562 = vadd.f32 %v514, 1.0
      %v563 = vadd.f32 %v516, 1.0
      %v564 = vadd.f32 %v518, 1.0
      %v565 = vadd.f32 %v520, 1.0
      %v566 = vadd.f32 %v522, 1.0
      %v567 = vadd.f32 %v524, 1.0
      %v568 = vadd.f32 %v526, 1.0
      %v569 = vadd.f32 %v528, 1.0
      %v570 = vadd.f32 %v530, 1.0
      %v571 = vadd.f32 %v532, 1.0
      %v572 = vadd.f32 %v534, 1.0
      %v573 = vadd.f32 %v536, 1.0
      %v574 = vadd.f32 %v538, 1.0
      %v575 = vadd.f32 %v540, 1.0
      %v576 = vadd.f32 %v542, 1.0
      %v577 = vadd.f32 %v544, 1.0
      %v578 = vadd.f32 %v546, 1.0
      %v579 = vrcp.pop %v547
      %v580 = vmul.f32 %v547, %v579
      %v581 = vsub.f32 1.0, %v580
      %v582 = vmul.f32 %v579, %v581
      %v583 = vadd.f32 %v579, %v582
      %vm584 = vweird.f32 %v547
      %vm585 = vweird.f32 %v579
      %vm586 = vmor %vm584, %vm585
      %v587 = vsel %vm586, %v579, %v583
      %v588 = vand.u32 2147483647, %v547
      %vm589 = vcmp.eq.f32.partialorder %v588, 8.507059e+37
      %v590 = vand.u32 %v547, 2147483648
      %v591 = vor.u32 1.1754944e-38, %v590
      %v592 = vsel %vm589, %v591, %v587
      %v593 = vmul.f32 1.0, %v592
      %v594 = vrcp.pop %v548
      %v595 = vmul.f32 %v548, %v594
      %v596 = vsub.f32 1.0, %v595
      %v597 = vmul.f32 %v594, %v596
      %v598 = vadd.f32 %v594, %v597
      %vm599 = vweird.f32 %v548
      %vm600 = vweird.f32 %v594
      %vm601 = vmor %vm599, %vm600
      %v602 = vsel %vm601, %v594, %v598
      %v603 = vand.u32 2147483647, %v548
      %vm604 = vcmp.eq.f32.partialorder %v603, 8.507059e+37
      %v605 = vand.u32 %v548, 2147483648
      %v606 = vor.u32 1.1754944e-38, %v605
      %v607 = vsel %vm604, %v606, %v602
      %v608 = vmul.f32 1.0, %v607
      %v609 = vrcp.pop %v549
      %v610 = vmul.f32 %v549, %v609
      %v611 = vsub.f32 1.0, %v610
      %v612 = vmul.f32 %v609, %v611
      %v613 = vadd.f32 %v609, %v612
      %vm614 = vweird.f32 %v549
      %vm615 = vweird.f32 %v609
      %vm616 = vmor %vm614, %vm615
      %v617 = vsel %vm616, %v609, %v613
      %v618 = vand.u32 2147483647, %v549
      %vm619 = vcmp.eq.f32.partialorder %v618, 8.507059e+37
      %v620 = vand.u32 %v549, 2147483648
      %v621 = vor.u32 1.1754944e-38, %v620
      %v622 = vsel %vm619, %v621, %v617
      %v623 = vmul.f32 1.0, %v622
      %v624 = vrcp.pop %v550
      %v625 = vmul.f32 %v550, %v624
      %v626 = vsub.f32 1.0, %v625
      %v627 = vmul.f32 %v624, %v626
      %v628 = vadd.f32 %v624, %v627
      %vm629 = vweird.f32 %v550
      %vm630 = vweird.f32 %v624
      %vm631 = vmor %vm629, %vm630
      %v632 = vsel %vm631, %v624, %v628
      %v633 = vand.u32 2147483647, %v550
      %vm634 = vcmp.eq.f32.partialorder %v633, 8.507059e+37
      %v635 = vand.u32 %v550, 2147483648
      %v636 = vor.u32 1.1754944e-38, %v635
      %v637 = vsel %vm634, %v636, %v632
      %v638 = vmul.f32 1.0, %v637
      %v639 = vrcp.pop %v551
      %v640 = vmul.f32 %v551, %v639
      %v641 = vsub.f32 1.0, %v640
      %v642 = vmul.f32 %v639, %v641
      %v643 = vadd.f32 %v639, %v642
      %vm644 = vweird.f32 %v551
      %vm645 = vweird.f32 %v639
      %vm646 = vmor %vm644, %vm645
      %v647 = vsel %vm646, %v639, %v643
      %v648 = vand.u32 2147483647, %v551
      %vm649 = vcmp.eq.f32.partialorder %v648, 8.507059e+37
      %v650 = vand.u32 %v551, 2147483648
      %v651 = vor.u32 1.1754944e-38, %v650
      %v652 = vsel %vm649, %v651, %v647
      %v653 = vmul.f32 1.0, %v652
      %v654 = vrcp.pop %v552
      %v655 = vmul.f32 %v552, %v654
      %v656 = vsub.f32 1.0, %v655
      %v657 = vmul.f32 %v654, %v656
      %v658 = vadd.f32 %v654, %v657
      %vm659 = vweird.f32 %v552
      %vm660 = vweird.f32 %v654
      %vm661 = vmor %vm659, %vm660
      %v662 = vsel %vm661, %v654, %v658
      %v663 = vand.u32 2147483647, %v552
      %vm664 = vcmp.eq.f32.partialorder %v663, 8.507059e+37
      %v665 = vand.u32 %v552, 2147483648
      %v666 = vor.u32 1.1754944e-38, %v665
      %v667 = vsel %vm664, %v666, %v662
      %v668 = vmul.f32 1.0, %v667
      %v669 = vrcp.pop %v553
      %v670 = vmul.f32 %v553, %v669
      %v671 = vsub.f32 1.0, %v670
      %v672 = vmul.f32 %v669, %v671
      %v673 = vadd.f32 %v669, %v672
      %vm674 = vweird.f32 %v553
      %vm675 = vweird.f32 %v669
      %vm676 = vmor %vm674, %vm675
      %v677 = vsel %vm676, %v669, %v673
      %v678 = vand.u32 2147483647, %v553
      %vm679 = vcmp.eq.f32.partialorder %v678, 8.507059e+37
      %v680 = vand.u32 %v553, 2147483648
      %v681 = vor.u32 1.1754944e-38, %v680
      %v682 = vsel %vm679, %v681, %v677
      %v683 = vmul.f32 1.0, %v682
      %v684 = vrcp.pop %v554
      %v685 = vmul.f32 %v554, %v684
      %v686 = vsub.f32 1.0, %v685
      %v687 = vmul.f32 %v684, %v686
      %v688 = vadd.f32 %v684, %v687
      %vm689 = vweird.f32 %v554
      %vm690 = vweird.f32 %v684
      %vm691 = vmor %vm689, %vm690
      %v692 = vsel %vm691, %v684, %v688
      %v693 = vand.u32 2147483647, %v554
      %vm694 = vcmp.eq.f32.partialorder %v693, 8.507059e+37
      %v695 = vand.u32 %v554, 2147483648
      %v696 = vor.u32 1.1754944e-38, %v695
      %v697 = vsel %vm694, %v696, %v692
      %v698 = vmul.f32 1.0, %v697
      %v699 = vrcp.pop %v555
      %v700 = vmul.f32 %v555, %v699
      %v701 = vsub.f32 1.0, %v700
      %v702 = vmul.f32 %v699, %v701
      %v703 = vadd.f32 %v699, %v702
      %vm704 = vweird.f32 %v555
      %vm705 = vweird.f32 %v699
      %vm706 = vmor %vm704, %vm705
      %v707 = vsel %vm706, %v699, %v703
      %v708 = vand.u32 2147483647, %v555
      %vm709 = vcmp.eq.f32.partialorder %v708, 8.507059e+37
      %v710 = vand.u32 %v555, 2147483648
      %v711 = vor.u32 1.1754944e-38, %v710
      %v712 = vsel %vm709, %v711, %v707
      %v713 = vmul.f32 1.0, %v712
      %v714 = vrcp.pop %v556
      %v715 = vmul.f32 %v556, %v714
      %v716 = vsub.f32 1.0, %v715
      %v717 = vmul.f32 %v714, %v716
      %v718 = vadd.f32 %v714, %v717
      %vm719 = vweird.f32 %v556
      %vm720 = vweird.f32 %v714
      %vm721 = vmor %vm719, %vm720
      %v722 = vsel %vm721, %v714, %v718
      %v723 = vand.u32 2147483647, %v556
      %vm724 = vcmp.eq.f32.partialorder %v723, 8.507059e+37
      %v725 = vand.u32 %v556, 2147483648
      %v726 = vor.u32 1.1754944e-38, %v725
      %v727 = vsel %vm724, %v726, %v722
      %v728 = vmul.f32 1.0, %v727
      %v729 = vrcp.pop %v557
      %v730 = vmul.f32 %v557, %v729
      %v731 = vsub.f32 1.0, %v730
      %v732 = vmul.f32 %v729, %v731
      %v733 = vadd.f32 %v729, %v732
      %vm734 = vweird.f32 %v557
      %vm735 = vweird.f32 %v729
      %vm736 = vmor %vm734, %vm735
      %v737 = vsel %vm736, %v729, %v733
      %v738 = vand.u32 2147483647, %v557
      %vm739 = vcmp.eq.f32.partialorder %v738, 8.507059e+37
      %v740 = vand.u32 %v557, 2147483648
      %v741 = vor.u32 1.1754944e-38, %v740
      %v742 = vsel %vm739, %v741, %v737
      %v743 = vmul.f32 1.0, %v742
      %v744 = vrcp.pop %v558
      %v745 = vmul.f32 %v558, %v744
      %v746 = vsub.f32 1.0, %v745
      %v747 = vmul.f32 %v744, %v746
      %v748 = vadd.f32 %v744, %v747
      %vm749 = vweird.f32 %v558
      %vm750 = vweird.f32 %v744
      %vm751 = vmor %vm749, %vm750
      %v752 = vsel %vm751, %v744, %v748
      %v753 = vand.u32 2147483647, %v558
      %vm754 = vcmp.eq.f32.partialorder %v753, 8.507059e+37
      %v755 = vand.u32 %v558, 2147483648
      %v756 = vor.u32 1.1754944e-38, %v755
      %v757 = vsel %vm754, %v756, %v752
      %v758 = vmul.f32 1.0, %v757
      %v759 = vrcp.pop %v559
      %v760 = vmul.f32 %v559, %v759
      %v761 = vsub.f32 1.0, %v760
      %v762 = vmul.f32 %v759, %v761
      %v763 = vadd.f32 %v759, %v762
      %vm764 = vweird.f32 %v559
      %vm765 = vweird.f32 %v759
      %vm766 = vmor %vm764, %vm765
      %v767 = vsel %vm766, %v759, %v763
      %v768 = vand.u32 2147483647, %v559
      %vm769 = vcmp.eq.f32.partialorder %v768, 8.507059e+37
      %v770 = vand.u32 %v559, 2147483648
      %v771 = vor.u32 1.1754944e-38, %v770
      %v772 = vsel %vm769, %v771, %v767
      %v773 = vmul.f32 1.0, %v772
      %v774 = vrcp.pop %v560
      %v775 = vmul.f32 %v560, %v774
      %v776 = vsub.f32 1.0, %v775
      %v777 = vmul.f32 %v774, %v776
      %v778 = vadd.f32 %v774, %v777
      %vm779 = vweird.f32 %v560
      %vm780 = vweird.f32 %v774
      %vm781 = vmor %vm779, %vm780
      %v782 = vsel %vm781, %v774, %v778
      %v783 = vand.u32 2147483647, %v560
      %vm784 = vcmp.eq.f32.partialorder %v783, 8.507059e+37
      %v785 = vand.u32 %v560, 2147483648
      %v786 = vor.u32 1.1754944e-38, %v785
      %v787 = vsel %vm784, %v786, %v782
      %v788 = vmul.f32 1.0, %v787
      %v789 = vrcp.pop %v561
      %v790 = vmul.f32 %v561, %v789
      %v791 = vsub.f32 1.0, %v790
      %v792 = vmul.f32 %v789, %v791
      %v793 = vadd.f32 %v789, %v792
      %vm794 = vweird.f32 %v561
      %vm795 = vweird.f32 %v789
      %vm796 = vmor %vm794, %vm795
      %v797 = vsel %vm796, %v789, %v793
      %v798 = vand.u32 2147483647, %v561
      %vm799 = vcmp.eq.f32.partialorder %v798, 8.507059e+37
      %v800 = vand.u32 %v561, 2147483648
      %v801 = vor.u32 1.1754944e-38, %v800
      %v802 = vsel %vm799, %v801, %v797
      %v803 = vmul.f32 1.0, %v802
      %v804 = vrcp.pop %v562
      %v805 = vmul.f32 %v562, %v804
      %v806 = vsub.f32 1.0, %v805
      %v807 = vmul.f32 %v804, %v806
      %v808 = vadd.f32 %v804, %v807
      %vm809 = vweird.f32 %v562
      %vm810 = vweird.f32 %v804
      %vm811 = vmor %vm809, %vm810
      %v812 = vsel %vm811, %v804, %v808
      %v813 = vand.u32 2147483647, %v562
      %vm814 = vcmp.eq.f32.partialorder %v813, 8.507059e+37
      %v815 = vand.u32 %v562, 2147483648
      %v816 = vor.u32 1.1754944e-38, %v815
      %v817 = vsel %vm814, %v816, %v812
      %v818 = vmul.f32 1.0, %v817
      %v819 = vrcp.pop %v563
      %v820 = vmul.f32 %v563, %v819
      %v821 = vsub.f32 1.0, %v820
      %v822 = vmul.f32 %v819, %v821
      %v823 = vadd.f32 %v819, %v822
      %vm824 = vweird.f32 %v563
      %vm825 = vweird.f32 %v819
      %vm826 = vmor %vm824, %vm825
      %v827 = vsel %vm826, %v819, %v823
      %v828 = vand.u32 2147483647, %v563
      %vm829 = vcmp.eq.f32.partialorder %v828, 8.507059e+37
      %v830 = vand.u32 %v563, 2147483648
      %v831 = vor.u32 1.1754944e-38, %v830
      %v832 = vsel %vm829, %v831, %v827
      %v833 = vmul.f32 1.0, %v832
      %v834 = vrcp.pop %v564
      %v835 = vmul.f32 %v564, %v834
      %v836 = vsub.f32 1.0, %v835
      %v837 = vmul.f32 %v834, %v836
      %v838 = vadd.f32 %v834, %v837
      %vm839 = vweird.f32 %v564
      %vm840 = vweird.f32 %v834
      %vm841 = vmor %vm839, %vm840
      %v842 = vsel %vm841, %v834, %v838
      %v843 = vand.u32 2147483647, %v564
      %vm844 = vcmp.eq.f32.partialorder %v843, 8.507059e+37
      %v845 = vand.u32 %v564, 2147483648
      %v846 = vor.u32 1.1754944e-38, %v845
      %v847 = vsel %vm844, %v846, %v842
      %v848 = vmul.f32 1.0, %v847
      %v849 = vrcp.pop %v565
      %v850 = vmul.f32 %v565, %v849
      %v851 = vsub.f32 1.0, %v850
      %v852 = vmul.f32 %v849, %v851
      %v853 = vadd.f32 %v849, %v852
      %vm854 = vweird.f32 %v565
      %vm855 = vweird.f32 %v849
      %vm856 = vmor %vm854, %vm855
      %v857 = vsel %vm856, %v849, %v853
      %v858 = vand.u32 2147483647, %v565
      %vm859 = vcmp.eq.f32.partialorder %v858, 8.507059e+37
      %v860 = vand.u32 %v565, 2147483648
      %v861 = vor.u32 1.1754944e-38, %v860
      %v862 = vsel %vm859, %v861, %v857
      %v863 = vmul.f32 1.0, %v862
      %v864 = vrcp.pop %v566
      %v865 = vmul.f32 %v566, %v864
      %v866 = vsub.f32 1.0, %v865
      %v867 = vmul.f32 %v864, %v866
      %v868 = vadd.f32 %v864, %v867
      %vm869 = vweird.f32 %v566
      %vm870 = vweird.f32 %v864
      %vm871 = vmor %vm869, %vm870
      %v872 = vsel %vm871, %v864, %v868
      %v873 = vand.u32 2147483647, %v566
      %vm874 = vcmp.eq.f32.partialorder %v873, 8.507059e+37
      %v875 = vand.u32 %v566, 2147483648
      %v876 = vor.u32 1.1754944e-38, %v875
      %v877 = vsel %vm874, %v876, %v872
      %v878 = vmul.f32 1.0, %v877
      %v879 = vrcp.pop %v567
      %v880 = vmul.f32 %v567, %v879
      %v881 = vsub.f32 1.0, %v880
      %v882 = vmul.f32 %v879, %v881
      %v883 = vadd.f32 %v879, %v882
      %vm884 = vweird.f32 %v567
      %vm885 = vweird.f32 %v879
      %vm886 = vmor %vm884, %vm885
      %v887 = vsel %vm886, %v879, %v883
      %v888 = vand.u32 2147483647, %v567
      %vm889 = vcmp.eq.f32.partialorder %v888, 8.507059e+37
      %v890 = vand.u32 %v567, 2147483648
      %v891 = vor.u32 1.1754944e-38, %v890
      %v892 = vsel %vm889, %v891, %v887
      %v893 = vmul.f32 1.0, %v892
      %v894 = vrcp.pop %v568
      %v895 = vmul.f32 %v568, %v894
      %v896 = vsub.f32 1.0, %v895
      %v897 = vmul.f32 %v894, %v896
      %v898 = vadd.f32 %v894, %v897
      %vm899 = vweird.f32 %v568
      %vm900 = vweird.f32 %v894
      %vm901 = vmor %vm899, %vm900
      %v902 = vsel %vm901, %v894, %v898
      %v903 = vand.u32 2147483647, %v568
      %vm904 = vcmp.eq.f32.partialorder %v903, 8.507059e+37
      %v905 = vand.u32 %v568, 2147483648
      %v906 = vor.u32 1.1754944e-38, %v905
      %v907 = vsel %vm904, %v906, %v902
      %v908 = vmul.f32 1.0, %v907
      %v909 = vrcp.pop %v569
      %v910 = vmul.f32 %v569, %v909
      %v911 = vsub.f32 1.0, %v910
      %v912 = vmul.f32 %v909, %v911
      %v913 = vadd.f32 %v909, %v912
      %vm914 = vweird.f32 %v569
      %vm915 = vweird.f32 %v909
      %vm916 = vmor %vm914, %vm915
      %v917 = vsel %vm916, %v909, %v913
      %v918 = vand.u32 2147483647, %v569
      %vm919 = vcmp.eq.f32.partialorder %v918, 8.507059e+37
      %v920 = vand.u32 %v569, 2147483648
      %v921 = vor.u32 1.1754944e-38, %v920
      %v922 = vsel %vm919, %v921, %v917
      %v923 = vmul.f32 1.0, %v922
      %v924 = vrcp.pop %v570
      %v925 = vmul.f32 %v570, %v924
      %v926 = vsub.f32 1.0, %v925
      %v927 = vmul.f32 %v924, %v926
      %v928 = vadd.f32 %v924, %v927
      %vm929 = vweird.f32 %v570
      %vm930 = vweird.f32 %v924
      %vm931 = vmor %vm929, %vm930
      %v932 = vsel %vm931, %v924, %v928
      %v933 = vand.u32 2147483647, %v570
      %vm934 = vcmp.eq.f32.partialorder %v933, 8.507059e+37
      %v935 = vand.u32 %v570, 2147483648
      %v936 = vor.u32 1.1754944e-38, %v935
      %v937 = vsel %vm934, %v936, %v932
      %v938 = vmul.f32 1.0, %v937
      %v939 = vrcp.pop %v571
      %v940 = vmul.f32 %v571, %v939
      %v941 = vsub.f32 1.0, %v940
      %v942 = vmul.f32 %v939, %v941
      %v943 = vadd.f32 %v939, %v942
      %vm944 = vweird.f32 %v571
      %vm945 = vweird.f32 %v939
      %vm946 = vmor %vm944, %vm945
      %v947 = vsel %vm946, %v939, %v943
      %v948 = vand.u32 2147483647, %v571
      %vm949 = vcmp.eq.f32.partialorder %v948, 8.507059e+37
      %v950 = vand.u32 %v571, 2147483648
      %v951 = vor.u32 1.1754944e-38, %v950
      %v952 = vsel %vm949, %v951, %v947
      %v953 = vmul.f32 1.0, %v952
      %v954 = vrcp.pop %v572
      %v955 = vmul.f32 %v572, %v954
      %v956 = vsub.f32 1.0, %v955
      %v957 = vmul.f32 %v954, %v956
      %v958 = vadd.f32 %v954, %v957
      %vm959 = vweird.f32 %v572
      %vm960 = vweird.f32 %v954
      %vm961 = vmor %vm959, %vm960
      %v962 = vsel %vm961, %v954, %v958
      %v963 = vand.u32 2147483647, %v572
      %vm964 = vcmp.eq.f32.partialorder %v963, 8.507059e+37
      %v965 = vand.u32 %v572, 2147483648
      %v966 = vor.u32 1.1754944e-38, %v965
      %v967 = vsel %vm964, %v966, %v962
      %v968 = vmul.f32 1.0, %v967
      %v969 = vrcp.pop %v573
      %v970 = vmul.f32 %v573, %v969
      %v971 = vsub.f32 1.0, %v970
      %v972 = vmul.f32 %v969, %v971
      %v973 = vadd.f32 %v969, %v972
      %vm974 = vweird.f32 %v573
      %vm975 = vweird.f32 %v969
      %vm976 = vmor %vm974, %vm975
      %v977 = vsel %vm976, %v969, %v973
      %v978 = vand.u32 2147483647, %v573
      %vm979 = vcmp.eq.f32.partialorder %v978, 8.507059e+37
      %v980 = vand.u32 %v573, 2147483648
      %v981 = vor.u32 1.1754944e-38, %v980
      %v982 = vsel %vm979, %v981, %v977
      %v983 = vmul.f32 1.0, %v982
      %v984 = vrcp.pop %v574
      %v985 = vmul.f32 %v574, %v984
      %v986 = vsub.f32 1.0, %v985
      %v987 = vmul.f32 %v984, %v986
      %v988 = vadd.f32 %v984, %v987
      %vm989 = vweird.f32 %v574
      %vm990 = vweird.f32 %v984
      %vm991 = vmor %vm989, %vm990
      %v992 = vsel %vm991, %v984, %v988
      %v993 = vand.u32 2147483647, %v574
      %vm994 = vcmp.eq.f32.partialorder %v993, 8.507059e+37
      %v995 = vand.u32 %v574, 2147483648
      %v996 = vor.u32 1.1754944e-38, %v995
      %v997 = vsel %vm994, %v996, %v992
      %v998 = vmul.f32 1.0, %v997
      %v999 = vrcp.pop %v575
      %v1000 = vmul.f32 %v575, %v999
      %v1001 = vsub.f32 1.0, %v1000
      %v1002 = vmul.f32 %v999, %v1001
      %v1003 = vadd.f32 %v999, %v1002
      %vm1004 = vweird.f32 %v575
      %vm1005 = vweird.f32 %v999
      %vm1006 = vmor %vm1004, %vm1005
      %v1007 = vsel %vm1006, %v999, %v1003
      %v1008 = vand.u32 2147483647, %v575
      %vm1009 = vcmp.eq.f32.partialorder %v1008, 8.507059e+37
      %v1010 = vand.u32 %v575, 2147483648
      %v1011 = vor.u32 1.1754944e-38, %v1010
      %v1012 = vsel %vm1009, %v1011, %v1007
      %v1013 = vmul.f32 1.0, %v1012
      %v1014 = vrcp.pop %v576
      %v1015 = vmul.f32 %v576, %v1014
      %v1016 = vsub.f32 1.0, %v1015
      %v1017 = vmul.f32 %v1014, %v1016
      %v1018 = vadd.f32 %v1014, %v1017
      %vm1019 = vweird.f32 %v576
      %vm1020 = vweird.f32 %v1014
      %vm1021 = vmor %vm1019, %vm1020
      %v1022 = vsel %vm1021, %v1014, %v1018
      %v1023 = vand.u32 2147483647, %v576
      %vm1024 = vcmp.eq.f32.partialorder %v1023, 8.507059e+37
      %v1025 = vand.u32 %v576, 2147483648
      %v1026 = vor.u32 1.1754944e-38, %v1025
      %v1027 = vsel %vm1024, %v1026, %v1022
      %v1028 = vmul.f32 1.0, %v1027
      %v1029 = vrcp.pop %v577
      %v1030 = vmul.f32 %v577, %v1029
      %v1031 = vsub.f32 1.0, %v1030
      %v1032 = vmul.f32 %v1029, %v1031
      %v1033 = vadd.f32 %v1029, %v1032
      %vm1034 = vweird.f32 %v577
      %vm1035 = vweird.f32 %v1029
      %vm1036 = vmor %vm1034, %vm1035
      %v1037 = vsel %vm1036, %v1029, %v1033
      %v1038 = vand.u32 2147483647, %v577
      %vm1039 = vcmp.eq.f32.partialorder %v1038, 8.507059e+37
      %v1040 = vand.u32 %v577, 2147483648
      %v1041 = vor.u32 1.1754944e-38, %v1040
      %v1042 = vsel %vm1039, %v1041, %v1037
      %v1043 = vmul.f32 1.0, %v1042
      %v1044 = vrcp.pop %v578
      %v1045 = vmul.f32 %v578, %v1044
      %v1046 = vsub.f32 1.0, %v1045
      %v1047 = vmul.f32 %v1044, %v1046
      %v1048 = vadd.f32 %v1044, %v1047
      %vm1049 = vweird.f32 %v578
      %vm1050 = vweird.f32 %v1044
      %vm1051 = vmor %vm1049, %vm1050
      %v1052 = vsel %vm1051, %v1044, %v1048
      %v1053 = vand.u32 2147483647, %v578
      %vm1054 = vcmp.eq.f32.partialorder %v1053, 8.507059e+37
      %v1055 = vand.u32 %v578, 2147483648
      %v1056 = vor.u32 1.1754944e-38, %v1055
      %v1057 = vsel %vm1054, %v1056, %v1052
      %v1058 = vmul.f32 1.0, %v1057
      %v1059 = vmul.f32 %v372, %v593
      %v1060 = vmul.f32 %v374, %v608
      %v1061 = vmul.f32 %v377, %v623
      %v1062 = vmul.f32 %v379, %v638
      %v1063 = vmul.f32 %v382, %v653
      %v1064 = vmul.f32 %v384, %v668
      %v1065 = vmul.f32 %v387, %v683
      %v1066 = vmul.f32 %v389, %v698
      %v1067 = vmul.f32 %v392, %v713
      %v1068 = vmul.f32 %v394, %v728
      %v1069 = vmul.f32 %v397, %v743
      %v1070 = vmul.f32 %v399, %v758
      %v1071 = vmul.f32 %v402, %v773
      %v1072 = vmul.f32 %v404, %v788
      %v1073 = vmul.f32 %v407, %v803
      %v1074 = vmul.f32 %v409, %v818
      %v1075 = vmul.f32 %v412, %v833
      %v1076 = vmul.f32 %v414, %v848
      %v1077 = vmul.f32 %v417, %v863
      %v1078 = vmul.f32 %v419, %v878
      %v1079 = vmul.f32 %v422, %v893
      %v1080 = vmul.f32 %v424, %v908
      %v1081 = vmul.f32 %v427, %v923
      %v1082 = vmul.f32 %v429, %v938
      %v1083 = vmul.f32 %v432, %v953
      %v1084 = vmul.f32 %v434, %v968
      %v1085 = vmul.f32 %v437, %v983
      %v1086 = vmul.f32 %v439, %v998
      %v1087 = vmul.f32 %v442, %v1013
      %v1088 = vmul.f32 %v444, %v1028
      %v1089 = vmul.f32 %v447, %v1043
      %v1090 = vmul.f32 %v449, %v1058
      %vm1091 = vcmask 130048
      %1092 = vst.msk [vmem:[%s172] sm:$0xff] %vm1091, %v1059
      %1093 = vst.msk [vmem:[%s172 + $0x8] sm:$0xff] %vm1091, %v1060
      %1094 = vst.msk [vmem:[%s172 + $0x10] sm:$0xff] %vm1091, %v1061
      %1095 = vst.msk [vmem:[%s172 + $0x18] sm:$0xff] %vm1091, %v1062
      %1096 = vst.msk [vmem:[%s172 + $0x20] sm:$0xff] %vm1091, %v1063
      %1097 = vst.msk [vmem:[%s172 + $0x28] sm:$0xff] %vm1091, %v1064
      %1098 = vst.msk [vmem:[%s172 + $0x30] sm:$0xff] %vm1091, %v1065
      %1099 = vst.msk [vmem:[%s172 + $0x38] sm:$0xff] %vm1091, %v1066
      %1100 = vst.msk [vmem:[%s172 + $0x40] sm:$0xff] %vm1091, %v1067
      %1101 = vst.msk [vmem:[%s172 + $0x48] sm:$0xff] %vm1091, %v1068
      %1102 = vst.msk [vmem:[%s172 + $0x50] sm:$0xff] %vm1091, %v1069
      %1103 = vst.msk [vmem:[%s172 + $0x58] sm:$0xff] %vm1091, %v1070
      %1104 = vst.msk [vmem:[%s172 + $0x60] sm:$0xff] %vm1091, %v1071
      %1105 = vst.msk [vmem:[%s172 + $0x68] sm:$0xff] %vm1091, %v1072
      %1106 = vst.msk [vmem:[%s172 + $0x70] sm:$0xff] %vm1091, %v1073
      %1107 = vst.msk [vmem:[%s172 + $0x78] sm:$0xff] %vm1091, %v1074
      %1108 = vst.msk [vmem:[%s172 + $0x80] sm:$0xff] %vm1091, %v1075
      %1109 = vst.msk [vmem:[%s172 + $0x88] sm:$0xff] %vm1091, %v1076
      %1110 = vst.msk [vmem:[%s172 + $0x90] sm:$0xff] %vm1091, %v1077
      %1111 = vst.msk [vmem:[%s172 + $0x98] sm:$0xff] %vm1091, %v1078
      %1112 = vst.msk [vmem:[%s172 + $0xa0] sm:$0xff] %vm1091, %v1079
      %1113 = vst.msk [vmem:[%s172 + $0xa8] sm:$0xff] %vm1091, %v1080
      %1114 = vst.msk [vmem:[%s172 + $0xb0] sm:$0xff] %vm1091, %v1081
      %1115 = vst.msk [vmem:[%s172 + $0xb8] sm:$0xff] %vm1091, %v1082
      %1116 = vst.msk [vmem:[%s172 + $0xc0] sm:$0xff] %vm1091, %v1083
      %1117 = vst.msk [vmem:[%s172 + $0xc8] sm:$0xff] %vm1091, %v1084
      %1118 = vst.msk [vmem:[%s172 + $0xd0] sm:$0xff] %vm1091, %v1085
      %1119 = vst.msk [vmem:[%s172 + $0xd8] sm:$0xff] %vm1091, %v1086
      %1120 = vst.msk [vmem:[%s172 + $0xe0] sm:$0xff] %vm1091, %v1087
      %1121 = vst.msk [vmem:[%s172 + $0xe8] sm:$0xff] %vm1091, %v1088
      %1122 = vst.msk [vmem:[%s172 + $0xf0] sm:$0xff] %vm1091, %v1089
      %1123 = vst.msk [vmem:[%s172 + $0xf8] sm:$0xff] %vm1091, %v1090
      %s1124 = smul.u32 32, %s14
      %p1125 = scmp.lt.s32.totalorder %s1124, 63
      %s1126 = scalar_select %p1125, %s1124, 63
      %s1127 = smul.addr %s1126, 8
      %s1128 = scalar_lea.vmem %s3, %s1127
      // Predicated region
      $region33: #{vision_tower_forward.6} parent=31 // pred_check
        %p1129 = pneg %p100
      $region34: #{vision_tower_forward.6} parent=31 // pred_check_branch
        %1131 = sbr.rel (%p1129) target = $region36
      $region35: #{vision_tower_forward.6} parent=31 // pred_region
        %s1132 = smul.u32 32, %s14
      $region36: #{vision_tower_forward.6} parent=31 // pred_fallthru
        _
    $region32: #{vision_tower_forward.6} parent=5 // pred_fallthru
      _
    %p1133 = scmp.le.s32.totalorder 2, %s9
    // Predicated region
    $region37: #{vision_tower_forward.6} parent=5 // pred_check
      %p1134 = pneg %p1133
    $region38: #{vision_tower_forward.6} parent=5 // pred_check_branch
      %1136 = sbr.rel (%p1134) target = $region40
    $region39: #{vision_tower_forward.6} parent=5 // pred_region
      %s1137 = ssub.s32 %s9, 2
      // Predicated region
      $region41: #{vision_tower_forward.6} parent=39 // pred_check
        %p1138 = pneg %p106
      $region42: #{vision_tower_forward.6} parent=39 // pred_check_branch
        %1140 = sbr.rel (%p1138) target = $region44
      $region43: #{vision_tower_forward.6} parent=39 // pred_region
        %s1141 = smul.u32 32, %s15
        %p1142 = scmp.lt.s32.totalorder %s1141, 63
        %s1143 = scalar_select %p1142, %s1141, 63
        %s1144 = smul.addr %s1143, 8
        %s1145 = scalar_lea.vmem %s3, %s1144
      $region44: #{vision_tower_forward.6} parent=39 // pred_fallthru
        _
    $region40: #{vision_tower_forward.6} parent=5 // pred_fallthru
      _
  $region6: #{vision_tower_forward.6} parent=0 // loop_footer
    %s13 = sadd.s32 1, %s9
  $region7: #{vision_tower_forward.6} parent=0 // loop_footer_branch
    %8 = sbr.rel target = $region3
  $region8: #{vision_tower_forward.6} parent=0 // loop_exit
    _

// kernel: vision_tower_forward.8
$region0: #{vision_tower_forward.8}
  #allocation0 [shape = 'u32[]', space=smem, size = 0x4, offset = 0x4, fixed_abs, tag = 'smem constant byte address 0x4 - core index']
  #allocation1 [shape = 'u32[72,128]{1,0:T(1,128)}', space=vmem, size = 0x9000, scoped, tag = 'internal scratch']
  %s0 = inlined_call_operand.vmem [shape: f32[2,72,8,32], index: 0, kind: input, shape index: {}]
  %s1 = inlined_call_operand.vmem [shape: f32[9,32], index: 1, kind: input, shape index: {}]
  %s2 = inlined_call_operand.vmem [shape: f32[1,32], index: 2, kind: input, shape index: {}]
  %s3 = inlined_call_operand.vmem [shape: bf16[32,32], index: 3, kind: input, shape index: {}]
  %s4 = inlined_call_operand.vmem [shape: f32[1,32], index: 4, kind: input, shape index: {}]
  %s5 = inlined_call_operand.vmem [shape: f32[2,8,8,32], index: 5, kind: output, shape index: {}]
  %s6 = sld [smem:[#allocation0]]
  $region53: #{vision_tower_forward.8} parent=0
    _
  %s8 = ssub.s32 1, %s6
  %s9 = scalar_select 0, %s8, %s6
  loop: start=0, step=1, limit=4
  $region2: #{vision_tower_forward.8} parent=0 // loop_pre_header
    _
  $region3: #{vision_tower_forward.8} parent=0 // loop_header
    %s11 = sphi 0, %s15
    %p12 = scmp.ge.s32.totalorder %s11, 4
    %s21 = sphi 0, %s23
    %s24 = sphi 0, %s21
    %s25 = sphi 0, %s24
    %s41 = sphi 0, %s25
    %s45 = sphi 0, %s45
    %s47 = sphi 0, %s45
    %s48 = sphi 0, %s47
    %s62 = sphi 0, %s48
    %s66 = sphi 0, %s66
    %s68 = sphi 0, %s66
    %s69 = sphi 0, %s68
    %s83 = sphi 0, %s69
    %s87 = sphi 0, %s87
    %s89 = sphi 0, %s87
    %s90 = sphi 0, %s89
    %s104 = sphi 0, %s90
    %s108 = sphi 0, %s108
    %s110 = sphi 0, %s108
    %s111 = sphi 0, %s110
    %s125 = sphi 0, %s111
    %s131 = sphi 0, %s133
    %s134 = sphi 0, %s131
    %s135 = sphi 0, %s134
    %s151 = sphi 0, %s135
  $region4: #{vision_tower_forward.8} parent=0 // loop_header_branch
    %14 = sbr.rel (%p12) target = $region8
  $region5: #{vision_tower_forward.8} parent=0 // loop_body
    %s16 = ssub.s32 %s11, 1
    %s17 = ssub.s32 %s11, 2
    %s18 = sadd.s32 %s11, 1
    %s19 = ssub.s32 %s11, %s18
    %p20 = scmp.eq.s32.totalorder %s19, 0
    %s22 = sadd.s32 %s21, 1
    %s23 = scalar_select %p20, %s21, %s22
    %p26 = pneg %p20
    %p27 = scmp.eq.s32.totalorder %s11, 1
    %p28 = por %p26, %p27
    %p29 = scmp.ne.s32.totalorder %s21, %s24
    %p30 = scmp.eq.s32.totalorder %s11, 0
    %p31 = por %p29, %p30
    %p32 = scmp.ne.s32.totalorder %s21, %s24
    %p33 = scmp.eq.s32.totalorder %s16, 1
    %p34 = por %p32, %p33
    %p35 = scmp.ne.s32.totalorder %s24, %s25
    %p36 = scmp.eq.s32.totalorder %s16, 0
    %p37 = por %p35, %p36
    %p38 = scmp.ne.s32.totalorder %s24, %s25
    %p39 = scmp.eq.s32.totalorder %s17, 1
    %p40 = por %p38, %p39
    %p42 = scmp.ne.s32.totalorder %s25, %s41
    %p43 = scmp.eq.s32.totalorder %s17, 0
    %p44 = por %p42, %p43
    %s46 = sadd.s32 %s45, 1
    %p49 = scmp.eq.s32.totalorder %s11, 1
    %p50 = scmp.ne.s32.totalorder %s45, %s47
    %p51 = scmp.eq.s32.totalorder %s11, 0
    %p52 = por %p50, %p51
    %p53 = scmp.ne.s32.totalorder %s45, %s47
    %p54 = scmp.eq.s32.totalorder %s16, 1
    %p55 = por %p53, %p54
    %p56 = scmp.ne.s32.totalorder %s47, %s48
    %p57 = scmp.eq.s32.totalorder %s16, 0
    %p58 = por %p56, %p57
    %p59 = scmp.ne.s32.totalorder %s47, %s48
    %p60 = scmp.eq.s32.totalorder %s17, 1
    %p61 = por %p59, %p60
    %p63 = scmp.ne.s32.totalorder %s48, %s62
    %p64 = scmp.eq.s32.totalorder %s17, 0
    %p65 = por %p63, %p64
    %s67 = sadd.s32 %s66, 1
    %p70 = scmp.eq.s32.totalorder %s11, 1
    %p71 = scmp.ne.s32.totalorder %s66, %s68
    %p72 = scmp.eq.s32.totalorder %s11, 0
    %p73 = por %p71, %p72
    %p74 = scmp.ne.s32.totalorder %s66, %s68
    %p75 = scmp.eq.s32.totalorder %s16, 1
    %p76 = por %p74, %p75
    %p77 = scmp.ne.s32.totalorder %s68, %s69
    %p78 = scmp.eq.s32.totalorder %s16, 0
    %p79 = por %p77, %p78
    %p80 = scmp.ne.s32.totalorder %s68, %s69
    %p81 = scmp.eq.s32.totalorder %s17, 1
    %p82 = por %p80, %p81
    %p84 = scmp.ne.s32.totalorder %s69, %s83
    %p85 = scmp.eq.s32.totalorder %s17, 0
    %p86 = por %p84, %p85
    %s88 = sadd.s32 %s87, 1
    %p91 = scmp.eq.s32.totalorder %s11, 1
    %p92 = scmp.ne.s32.totalorder %s87, %s89
    %p93 = scmp.eq.s32.totalorder %s11, 0
    %p94 = por %p92, %p93
    %p95 = scmp.ne.s32.totalorder %s87, %s89
    %p96 = scmp.eq.s32.totalorder %s16, 1
    %p97 = por %p95, %p96
    %p98 = scmp.ne.s32.totalorder %s89, %s90
    %p99 = scmp.eq.s32.totalorder %s16, 0
    %p100 = por %p98, %p99
    %p101 = scmp.ne.s32.totalorder %s89, %s90
    %p102 = scmp.eq.s32.totalorder %s17, 1
    %p103 = por %p101, %p102
    %p105 = scmp.ne.s32.totalorder %s90, %s104
    %p106 = scmp.eq.s32.totalorder %s17, 0
    %p107 = por %p105, %p106
    %s109 = sadd.s32 %s108, 1
    %p112 = scmp.eq.s32.totalorder %s11, 1
    %p113 = scmp.ne.s32.totalorder %s108, %s110
    %p114 = scmp.eq.s32.totalorder %s11, 0
    %p115 = por %p113, %p114
    %p116 = scmp.ne.s32.totalorder %s108, %s110
    %p117 = scmp.eq.s32.totalorder %s16, 1
    %p118 = por %p116, %p117
    %p119 = scmp.ne.s32.totalorder %s110, %s111
    %p120 = scmp.eq.s32.totalorder %s16, 0
    %p121 = por %p119, %p120
    %p122 = scmp.ne.s32.totalorder %s110, %s111
    %p123 = scmp.eq.s32.totalorder %s17, 1
    %p124 = por %p122, %p123
    %p126 = scmp.ne.s32.totalorder %s111, %s125
    %p127 = scmp.eq.s32.totalorder %s17, 0
    %p128 = por %p126, %p127
    %s129 = ssub.s32 %s11, %s18
    %p130 = scmp.eq.s32.totalorder %s129, 0
    %s132 = sadd.s32 %s131, 1
    %s133 = scalar_select %p130, %s131, %s132
    %p136 = pneg %p130
    %p137 = scmp.eq.s32.totalorder %s11, 1
    %p138 = por %p136, %p137
    %p139 = scmp.ne.s32.totalorder %s131, %s134
    %p140 = scmp.eq.s32.totalorder %s11, 0
    %p141 = por %p139, %p140
    %p142 = scmp.ne.s32.totalorder %s131, %s134
    %p143 = scmp.eq.s32.totalorder %s16, 1
    %p144 = por %p142, %p143
    %p145 = scmp.ne.s32.totalorder %s134, %s135
    %p146 = scmp.eq.s32.totalorder %s16, 0
    %p147 = por %p145, %p146
    %p148 = scmp.ne.s32.totalorder %s134, %s135
    %p149 = scmp.eq.s32.totalorder %s17, 1
    %p150 = por %p148, %p149
    %p152 = scmp.ne.s32.totalorder %s135, %s151
    %p153 = scmp.eq.s32.totalorder %s17, 0
    %p154 = por %p152, %p153
    %p155 = scmp.le.s32.totalorder 1, %s11
    %p156 = scmp.lt.s32.totalorder %s11, 3
    %p157 = pnand %p155, %p156
    %p158 = pneg %p157
    // Predicated region
    $region9: #{vision_tower_forward.8} parent=5 // pred_check
      _
    $region10: #{vision_tower_forward.8} parent=5 // pred_check_branch
      %160 = sbr.rel (%p157) target = $region12
    $region11: #{vision_tower_forward.8} parent=5 // pred_region
      %s161 = ssub.s32 %s11, 1
      // Predicated region
      $region13: #{vision_tower_forward.8} parent=11 // pred_check
        %p162 = pneg %p58
      $region14: #{vision_tower_forward.8} parent=11 // pred_check_branch
        %164 = sbr.rel (%p162) target = $region16
      $region15: #{vision_tower_forward.8} parent=11 // pred_region
        _
      $region16: #{vision_tower_forward.8} parent=11 // pred_fallthru
        _
      // Predicated region
      $region17: #{vision_tower_forward.8} parent=11 // pred_check
        %p165 = pneg %p79
      $region18: #{vision_tower_forward.8} parent=11 // pred_check_branch
        %167 = sbr.rel (%p165) target = $region20
      $region19: #{vision_tower_forward.8} parent=11 // pred_region
        _
      $region20: #{vision_tower_forward.8} parent=11 // pred_fallthru
        _
      // Predicated region
      $region21: #{vision_tower_forward.8} parent=11 // pred_check
        %p168 = pneg %p100
      $region22: #{vision_tower_forward.8} parent=11 // pred_check_branch
        %170 = sbr.rel (%p168) target = $region24
      $region23: #{vision_tower_forward.8} parent=11 // pred_region
        _
      $region24: #{vision_tower_forward.8} parent=11 // pred_fallthru
        _
      // Predicated region
      $region25: #{vision_tower_forward.8} parent=11 // pred_check
        %p171 = pneg %p121
      $region26: #{vision_tower_forward.8} parent=11 // pred_check_branch
        %173 = sbr.rel (%p171) target = $region28
      $region27: #{vision_tower_forward.8} parent=11 // pred_region
        _
      $region28: #{vision_tower_forward.8} parent=11 // pred_fallthru
        _
    $region12: #{vision_tower_forward.8} parent=5 // pred_fallthru
      _
    %p174 = scmp.lt.s32.totalorder %s11, 2
    // Predicated region
    $region29: #{vision_tower_forward.8} parent=5 // pred_check
      %p175 = pneg %p174
    $region30: #{vision_tower_forward.8} parent=5 // pred_check_branch
      %177 = sbr.rel (%p175) target = $region32
    $region31: #{vision_tower_forward.8} parent=5 // pred_region
      // Predicated region
      $region33: #{vision_tower_forward.8} parent=31 // pred_check
        %p178 = pneg %p31
      $region34: #{vision_tower_forward.8} parent=31 // pred_check_branch
        %180 = sbr.rel (%p178) target = $region36
      $region35: #{vision_tower_forward.8} parent=31 // pred_region
        %p181 = scmp.lt.s32.totalorder %s11, 1
        %s182 = scalar_select %p181, %s11, 1
        %s183 = smul.addr %s182, 72
        %s184 = smul.addr %s183, 8
        %s185 = scalar_lea.vmem %s0, %s184
      $region36: #{vision_tower_forward.8} parent=31 // pred_fallthru
        _
    $region32: #{vision_tower_forward.8} parent=5 // pred_fallthru
      _
    %p186 = scmp.le.s32.totalorder 1, %s11
    %p187 = scmp.lt.s32.totalorder %s11, 3
    %p188 = pnand %p186, %p187
    %p189 = pneg %p188
    // Predicated region
    $region37: #{vision_tower_forward.8} parent=5 // pred_check
      _
    $region38: #{vision_tower_forward.8} parent=5 // pred_check_branch
      %191 = sbr.rel (%p188) target = $region40
    $region39: #{vision_tower_forward.8} parent=5 // pred_region
      %s192 = ssub.s32 %s11, 1
      %p193 = scmp.lt.s32.totalorder %s16, 1
      %s194 = scalar_select %p193, %s16, 1
      %s195 = smul.addr %s194, 72
      %s196 = smul.addr %s195, 8
      %s197 = scalar_lea.vmem %s0, %s196
      %p198 = pneg %p37
      %p199 = pneg %p34
      %p200 = pneg %p58
      %p201 = pneg %p55
      %p202 = pneg %p79
      %p203 = pneg %p76
      %p204 = pneg %p100
      %p205 = pneg %p97
      %p206 = pneg %p121
      %p207 = pneg %p118
      %p208 = pneg %p147
      %p209 = pneg %p144
      %p210 = scmp.lt.s32.totalorder %s16, 1
      %s211 = scalar_select %p210, %s16, 1
      %s212 = smul.addr %s211, 8
      %s213 = smul.addr %s212, 8
      %s214 = scalar_lea.vmem %s5, %s213
      %p215 = scmp.lt.s32.totalorder %s16, 1
      %s216 = scalar_select %p215, %s16, 1
      %s217 = smul.addr %s216, 72
      %s218 = smul.addr %s217, 8
      %s219 = scalar_lea.vmem %s0, %s218
      %p220 = scmp.lt.s32.totalorder %s16, 1
      %s221 = scalar_select %p220, %s16, 1
      %s222 = smul.addr %s221, 8
      %s223 = smul.addr %s222, 8
      %s224 = scalar_lea.vmem %s5, %s223
      %v226 = vld [vmem:[%s219] sm:$0xff]
      %v227 = vld [vmem:[%s219 + $0x8] sm:$0xff]
      %v228 = vld [vmem:[%s219 + $0x10] sm:$0xff]
      %v229 = vld [vmem:[%s219 + $0x18] sm:$0xff]
      %v230 = vld [vmem:[%s219 + $0x20] sm:$0xff]
      %v231 = vld [vmem:[%s219 + $0x28] sm:$0xff]
      %v232 = vld [vmem:[%s219 + $0x30] sm:$0xff]
      %v233 = vld [vmem:[%s219 + $0x38] sm:$0xff]
      %v234 = vld [vmem:[%s219 + $0x40] sm:$0xff]
      %v235 = vld [vmem:[%s219 + $0x48] sm:$0xff]
      %v236 = vld [vmem:[%s219 + $0x50] sm:$0xff]
      %v237 = vld [vmem:[%s219 + $0x58] sm:$0xff]
      %v238 = vld [vmem:[%s219 + $0x60] sm:$0xff]
      %v239 = vld [vmem:[%s219 + $0x68] sm:$0xff]
      %v240 = vld [vmem:[%s219 + $0x70] sm:$0xff]
      %v241 = vld [vmem:[%s219 + $0x78] sm:$0xff]
      %v242 = vld [vmem:[%s219 + $0x80] sm:$0xff]
      %v243 = vld [vmem:[%s219 + $0x88] sm:$0xff]
      %v244 = vld [vmem:[%s219 + $0x90] sm:$0xff]
      %v245 = vld [vmem:[%s219 + $0x98] sm:$0xff]
      %v246 = vld [vmem:[%s219 + $0xa0] sm:$0xff]
      %v247 = vld [vmem:[%s219 + $0xa8] sm:$0xff]
      %v248 = vld [vmem:[%s219 + $0xb0] sm:$0xff]
      %v249 = vld [vmem:[%s219 + $0xb8] sm:$0xff]
      %v250 = vld [vmem:[%s219 + $0xc0] sm:$0xff]
      %v251 = vld [vmem:[%s219 + $0xc8] sm:$0xff]
      %v252 = vld [vmem:[%s219 + $0xd0] sm:$0xff]
      %v253 = vld [vmem:[%s219 + $0xd8] sm:$0xff]
      %v254 = vld [vmem:[%s219 + $0xe0] sm:$0xff]
      %v255 = vld [vmem:[%s219 + $0xe8] sm:$0xff]
      %v256 = vld [vmem:[%s219 + $0xf0] sm:$0xff]
      %v257 = vld [vmem:[%s219 + $0xf8] sm:$0xff]
      %v258 = vld [vmem:[%s219 + $0x100] sm:$0xff]
      %v259 = vld [vmem:[%s219 + $0x108] sm:$0xff]
      %v260 = vld [vmem:[%s219 + $0x110] sm:$0xff]
      %v261 = vld [vmem:[%s219 + $0x118] sm:$0xff]
      %v262 = vld [vmem:[%s219 + $0x120] sm:$0xff]
      %v263 = vld [vmem:[%s219 + $0x128] sm:$0xff]
      %v264 = vld [vmem:[%s219 + $0x130] sm:$0xff]
      %v265 = vld [vmem:[%s219 + $0x138] sm:$0xff]
      %v266 = vld [vmem:[%s219 + $0x140] sm:$0xff]
      %v267 = vld [vmem:[%s219 + $0x148] sm:$0xff]
      %v268 = vld [vmem:[%s219 + $0x150] sm:$0xff]
      %v269 = vld [vmem:[%s219 + $0x158] sm:$0xff]
      %v270 = vld [vmem:[%s219 + $0x160] sm:$0xff]
      %v271 = vld [vmem:[%s219 + $0x168] sm:$0xff]
      %v272 = vld [vmem:[%s219 + $0x170] sm:$0xff]
      %v273 = vld [vmem:[%s219 + $0x178] sm:$0xff]
      %v274 = vld [vmem:[%s219 + $0x180] sm:$0xff]
      %v275 = vld [vmem:[%s219 + $0x188] sm:$0xff]
      %v276 = vld [vmem:[%s219 + $0x190] sm:$0xff]
      %v277 = vld [vmem:[%s219 + $0x198] sm:$0xff]
      %v278 = vld [vmem:[%s219 + $0x1a0] sm:$0xff]
      %v279 = vld [vmem:[%s219 + $0x1a8] sm:$0xff]
      %v280 = vld [vmem:[%s219 + $0x1b0] sm:$0xff]
      %v281 = vld [vmem:[%s219 + $0x1b8] sm:$0xff]
      %v282 = vld [vmem:[%s219 + $0x1c0] sm:$0xff]
      %v283 = vld [vmem:[%s219 + $0x1c8] sm:$0xff]
      %v284 = vld [vmem:[%s219 + $0x1d0] sm:$0xff]
      %v285 = vld [vmem:[%s219 + $0x1d8] sm:$0xff]
      %v286 = vld [vmem:[%s219 + $0x1e0] sm:$0xff]
      %v287 = vld [vmem:[%s219 + $0x1e8] sm:$0xff]
      %v288 = vld [vmem:[%s219 + $0x1f0] sm:$0xff]
      %v289 = vld [vmem:[%s219 + $0x1f8] sm:$0xff]
      %v290 = vld [vmem:[%s219 + $0x200] sm:$0xff]
      %v291 = vld [vmem:[%s219 + $0x208] sm:$0xff]
      %v292 = vld [vmem:[%s219 + $0x210] sm:$0xff]
      %v293 = vld [vmem:[%s219 + $0x218] sm:$0xff]
      %v294 = vld [vmem:[%s219 + $0x220] sm:$0xff]
      %v295 = vld [vmem:[%s219 + $0x228] sm:$0xff]
      %v296 = vld [vmem:[%s219 + $0x230] sm:$0xff]
      %v297 = vld [vmem:[%s219 + $0x238] sm:$0xff]
      %v298 = vld [vmem:[%s1] sm:$0xff]
      %v299 = vld [vmem:[%s1 + $0x8] sm:$0x1]
      %v300 = vperm.slane %v298, 0
      %v301 = vmul.f32 %v226, %v300
      %v302 = vmul.f32 %v227, %v300
      %v303 = vmul.f32 %v228, %v300
      %v304 = vmul.f32 %v229, %v300
      %v305 = vmul.f32 %v230, %v300
      %v306 = vmul.f32 %v231, %v300
      %v307 = vmul.f32 %v232, %v300
      %v308 = vmul.f32 %v233, %v300
      %v309 = vadd.f32 %v301, 0.0
      %v310 = vadd.f32 %v302, 0.0
      %v311 = vadd.f32 %v303, 0.0
      %v312 = vadd.f32 %v304, 0.0
      %v313 = vadd.f32 %v305, 0.0
      %v314 = vadd.f32 %v306, 0.0
      %v315 = vadd.f32 %v307, 0.0
      %v316 = vadd.f32 %v308, 0.0
      %v317 = vperm.slane %v298, 1
      %v318 = vmul.f32 %v234, %v317
      %v319 = vmul.f32 %v235, %v317
      %v320 = vmul.f32 %v236, %v317
      %v321 = vmul.f32 %v237, %v317
      %v322 = vmul.f32 %v238, %v317
      %v323 = vmul.f32 %v239, %v317
      %v324 = vmul.f32 %v240, %v317
      %v325 = vmul.f32 %v241, %v317
      %v326 = vadd.f32 %v309, %v318
      %v327 = vadd.f32 %v310, %v319
      %v328 = vadd.f32 %v311, %v320
      %v329 = vadd.f32 %v312, %v321
      %v330 = vadd.f32 %v313, %v322
      %v331 = vadd.f32 %v314, %v323
      %v332 = vadd.f32 %v315, %v324
      %v333 = vadd.f32 %v316, %v325
      %v334 = vperm.slane %v298, 2
      %v335 = vmul.f32 %v242, %v334
      %v336 = vmul.f32 %v243, %v334
      %v337 = vmul.f32 %v244, %v334
      %v338 = vmul.f32 %v245, %v334
      %v339 = vmul.f32 %v246, %v334
      %v340 = vmul.f32 %v247, %v334
      %v341 = vmul.f32 %v248, %v334
      %v342 = vmul.f32 %v249, %v334
      %v343 = vadd.f32 %v326, %v335
      %v344 = vadd.f32 %v327, %v336
      %v345 = vadd.f32 %v328, %v337
      %v346 = vadd.f32 %v329, %v338
      %v347 = vadd.f32 %v330, %v339
      %v348 = vadd.f32 %v331, %v340
      %v349 = vadd.f32 %v332, %v341
      %v350 = vadd.f32 %v333, %v342
      %v351 = vperm.slane %v298, 3
      %v352 = vmul.f32 %v250, %v351
      %v353 = vmul.f32 %v251, %v351
      %v354 = vmul.f32 %v252, %v351
      %v355 = vmul.f32 %v253, %v351
      %v356 = vmul.f32 %v254, %v351
      %v357 = vmul.f32 %v255, %v351
      %v358 = vmul.f32 %v256, %v351
      %v359 = vmul.f32 %v257, %v351
      %v360 = vadd.f32 %v343, %v352
      %v361 = vadd.f32 %v344, %v353
      %v362 = vadd.f32 %v345, %v354
      %v363 = vadd.f32 %v346, %v355
      %v364 = vadd.f32 %v347, %v356
      %v365 = vadd.f32 %v348, %v357
      %v366 = vadd.f32 %v349, %v358
      %v367 = vadd.f32 %v350, %v359
      %v368 = vperm.slane %v298, 4
      %v369 = vmul.f32 %v258, %v368
      %v370 = vmul.f32 %v259, %v368
      %v371 = vmul.f32 %v260, %v368
      %v372 = vmul.f32 %v261, %v368
      %v373 = vmul.f32 %v262, %v368
      %v374 = vmul.f32 %v263, %v368
      %v375 = vmul.f32 %v264, %v368
      %v376 = vmul.f32 %v265, %v368
      %v377 = vadd.f32 %v360, %v369
      %v378 = vadd.f32 %v361, %v370
      %v379 = vadd.f32 %v362, %v371
      %v380 = vadd.f32 %v363, %v372
      %v381 = vadd.f32 %v364, %v373
      %v382 = vadd.f32 %v365, %v374
      %v383 = vadd.f32 %v366, %v375
      %v384 = vadd.f32 %v367, %v376
      %v385 = vperm.slane %v298, 5
      %v386 = vmul.f32 %v266, %v385
      %v387 = vmul.f32 %v267, %v385
      %v388 = vmul.f32 %v268, %v385
      %v389 = vmul.f32 %v269, %v385
      %v390 = vmul.f32 %v270, %v385
      %v391 = vmul.f32 %v271, %v385
      %v392 = vmul.f32 %v272, %v385
      %v393 = vmul.f32 %v273, %v385
      %v394 = vadd.f32 %v377, %v386
      %v395 = vadd.f32 %v378, %v387
      %v396 = vadd.f32 %v379, %v388
      %v397 = vadd.f32 %v380, %v389
      %v398 = vadd.f32 %v381, %v390
      %v399 = vadd.f32 %v382, %v391
      %v400 = vadd.f32 %v383, %v392
      %v401 = vadd.f32 %v384, %v393
      %v402 = vperm.slane %v298, 6
      %v403 = vmul.f32 %v274, %v402
      %v404 = vmul.f32 %v275, %v402
      %v405 = vmul.f32 %v276, %v402
      %v406 = vmul.f32 %v277, %v402
      %v407 = vmul.f32 %v278, %v402
      %v408 = vmul.f32 %v279, %v402
      %v409 = vmul.f32 %v280, %v402
      %v410 = vmul.f32 %v281, %v402
      %v411 = vadd.f32 %v394, %v403
      %v412 = vadd.f32 %v395, %v404
      %v413 = vadd.f32 %v396, %v405
      %v414 = vadd.f32 %v397, %v406
      %v415 = vadd.f32 %v398, %v407
      %v416 = vadd.f32 %v399, %v408
      %v417 = vadd.f32 %v400, %v409
      %v418 = vadd.f32 %v401, %v410
      %v419 = vperm.slane %v298, 7
      %v420 = vmul.f32 %v282, %v419
      %v421 = vmul.f32 %v283, %v419
      %v422 = vmul.f32 %v284, %v419
      %v423 = vmul.f32 %v285, %v419
      %v424 = vmul.f32 %v286, %v419
      %v425 = vmul.f32 %v287, %v419
      %v426 = vmul.f32 %v288, %v419
      %v427 = vmul.f32 %v289, %v419
      %v428 = vadd.f32 %v411, %v420
      %v429 = vadd.f32 %v412, %v421
      %v430 = vadd.f32 %v413, %v422
      %v431 = vadd.f32 %v414, %v423
      %v432 = vadd.f32 %v415, %v424
      %v433 = vadd.f32 %v416, %v425
      %v434 = vadd.f32 %v417, %v426
      %v435 = vadd.f32 %v418, %v427
      %v436 = vperm.slane %v299, 0
      %v437 = vmul.f32 %v290, %v436
      %v438 = vmul.f32 %v291, %v436
      %v439 = vmul.f32 %v292, %v436
      %v440 = vmul.f32 %v293, %v436
      %v441 = vmul.f32 %v294, %v436
      %v442 = vmul.f32 %v295, %v436
      %v443 = vmul.f32 %v296, %v436
      %v444 = vmul.f32 %v297, %v436
      %v445 = vadd.f32 %v428, %v437
      %v446 = vadd.f32 %v429, %v438
      %v447 = vadd.f32 %v430, %v439
      %v448 = vadd.f32 %v431, %v440
      %v449 = vadd.f32 %v432, %v441
      %v450 = vadd.f32 %v433, %v442
      %v451 = vadd.f32 %v434, %v443
      %v452 = vadd.f32 %v435, %v444
      %v453 = vld [vmem:[%s2] sm:$0x1]
      %v455 = vperm.slane %v453, 0
      %v457 = vadd.f32 %v445, %v455
      %v458 = vadd.f32 %v446, %v455
      %v459 = vadd.f32 %v447, %v455
      %v460 = vadd.f32 %v448, %v455
      %v461 = vadd.f32 %v449, %v455
      %v462 = vadd.f32 %v450, %v455
      %v463 = vadd.f32 %v451, %v455
      %v464 = vadd.f32 %v452, %v455
      %v465 = vxor.u32 %v457, 2147483648
      %v466 = vxor.u32 %v458, 2147483648
      %v467 = vxor.u32 %v459, 2147483648
      %v468 = vxor.u32 %v460, 2147483648
      %v469 = vxor.u32 %v461, 2147483648
      %v470 = vxor.u32 %v462, 2147483648
      %v471 = vxor.u32 %v463, 2147483648
      %v472 = vxor.u32 %v464, 2147483648
      %v473 = vmul.f32 %v465, 1.442695
      %v474 = vpow.pop %v473
      %v475 = vmul.f32 %v466, 1.442695
      %v476 = vpow.pop %v475
      %v477 = vmul.f32 %v467, 1.442695
      %v478 = vpow.pop %v477
      %v479 = vmul.f32 %v468, 1.442695
      %v480 = vpow.pop %v479
      %v481 = vmul.f32 %v469, 1.442695
      %v482 = vpow.pop %v481
      %v483 = vmul.f32 %v470, 1.442695
      %v484 = vpow.pop %v483
      %v485 = vmul.f32 %v471, 1.442695
      %v486 = vpow.pop %v485
      %v487 = vmul.f32 %v472, 1.442695
      %v488 = vpow.pop %v487
      %v489 = vadd.f32 %v474, 1.0
      %v490 = vadd.f32 %v476, 1.0
      %v491 = vadd.f32 %v478, 1.0
      %v492 = vadd.f32 %v480, 1.0
      %v493 = vadd.f32 %v482, 1.0
      %v494 = vadd.f32 %v484, 1.0
      %v495 = vadd.f32 %v486, 1.0
      %v496 = vadd.f32 %v488, 1.0
      %v497 = vrcp.pop %v489
      %v498 = vmul.f32 %v489, %v497
      %v499 = vsub.f32 1.0, %v498
      %v500 = vmul.f32 %v497, %v499
      %v501 = vadd.f32 %v497, %v500
      %vm502 = vweird.f32 %v489
      %vm503 = vweird.f32 %v497
      %vm504 = vmor %vm502, %vm503
      %v505 = vsel %vm504, %v497, %v501
      %v506 = vand.u32 2147483647, %v489
      %vm507 = vcmp.eq.f32.partialorder %v506, 8.507059e+37
      %v508 = vand.u32 %v489, 2147483648
      %v509 = vor.u32 1.1754944e-38, %v508
      %v510 = vsel %vm507, %v509, %v505
      %v511 = vmul.f32 1.0, %v510
      %v512 = vrcp.pop %v490
      %v513 = vmul.f32 %v490, %v512
      %v514 = vsub.f32 1.0, %v513
      %v515 = vmul.f32 %v512, %v514
      %v516 = vadd.f32 %v512, %v515
      %vm517 = vweird.f32 %v490
      %vm518 = vweird.f32 %v512
      %vm519 = vmor %vm517, %vm518
      %v520 = vsel %vm519, %v512, %v516
      %v521 = vand.u32 2147483647, %v490
      %vm522 = vcmp.eq.f32.partialorder %v521, 8.507059e+37
      %v523 = vand.u32 %v490, 2147483648
      %v524 = vor.u32 1.1754944e-38, %v523
      %v525 = vsel %vm522, %v524, %v520
      %v526 = vmul.f32 1.0, %v525
      %v527 = vrcp.pop %v491
      %v528 = vmul.f32 %v491, %v527
      %v529 = vsub.f32 1.0, %v528
      %v530 = vmul.f32 %v527, %v529
      %v531 = vadd.f32 %v527, %v530
      %vm532 = vweird.f32 %v491
      %vm533 = vweird.f32 %v527
      %vm534 = vmor %vm532, %vm533
      %v535 = vsel %vm534, %v527, %v531
      %v536 = vand.u32 2147483647, %v491
      %vm537 = vcmp.eq.f32.partialorder %v536, 8.507059e+37
      %v538 = vand.u32 %v491, 2147483648
      %v539 = vor.u32 1.1754944e-38, %v538
      %v540 = vsel %vm537, %v539, %v535
      %v541 = vmul.f32 1.0, %v540
      %v542 = vrcp.pop %v492
      %v543 = vmul.f32 %v492, %v542
      %v544 = vsub.f32 1.0, %v543
      %v545 = vmul.f32 %v542, %v544
      %v546 = vadd.f32 %v542, %v545
      %vm547 = vweird.f32 %v492
      %vm548 = vweird.f32 %v542
      %vm549 = vmor %vm547, %vm548
      %v550 = vsel %vm549, %v542, %v546
      %v551 = vand.u32 2147483647, %v492
      %vm552 = vcmp.eq.f32.partialorder %v551, 8.507059e+37
      %v553 = vand.u32 %v492, 2147483648
      %v554 = vor.u32 1.1754944e-38, %v553
      %v555 = vsel %vm552, %v554, %v550
      %v556 = vmul.f32 1.0, %v555
      %v557 = vrcp.pop %v493
      %v558 = vmul.f32 %v493, %v557
      %v559 = vsub.f32 1.0, %v558
      %v560 = vmul.f32 %v557, %v559
      %v561 = vadd.f32 %v557, %v560
      %vm562 = vweird.f32 %v493
      %vm563 = vweird.f32 %v557
      %vm564 = vmor %vm562, %vm563
      %v565 = vsel %vm564, %v557, %v561
      %v566 = vand.u32 2147483647, %v493
      %vm567 = vcmp.eq.f32.partialorder %v566, 8.507059e+37
      %v568 = vand.u32 %v493, 2147483648
      %v569 = vor.u32 1.1754944e-38, %v568
      %v570 = vsel %vm567, %v569, %v565
      %v571 = vmul.f32 1.0, %v570
      %v572 = vrcp.pop %v494
      %v573 = vmul.f32 %v494, %v572
      %v574 = vsub.f32 1.0, %v573
      %v575 = vmul.f32 %v572, %v574
      %v576 = vadd.f32 %v572, %v575
      %vm577 = vweird.f32 %v494
      %vm578 = vweird.f32 %v572
      %vm579 = vmor %vm577, %vm578
      %v580 = vsel %vm579, %v572, %v576
      %v581 = vand.u32 2147483647, %v494
      %vm582 = vcmp.eq.f32.partialorder %v581, 8.507059e+37
      %v583 = vand.u32 %v494, 2147483648
      %v584 = vor.u32 1.1754944e-38, %v583
      %v585 = vsel %vm582, %v584, %v580
      %v586 = vmul.f32 1.0, %v585
      %v587 = vrcp.pop %v495
      %v588 = vmul.f32 %v495, %v587
      %v589 = vsub.f32 1.0, %v588
      %v590 = vmul.f32 %v587, %v589
      %v591 = vadd.f32 %v587, %v590
      %vm592 = vweird.f32 %v495
      %vm593 = vweird.f32 %v587
      %vm594 = vmor %vm592, %vm593
      %v595 = vsel %vm594, %v587, %v591
      %v596 = vand.u32 2147483647, %v495
      %vm597 = vcmp.eq.f32.partialorder %v596, 8.507059e+37
      %v598 = vand.u32 %v495, 2147483648
      %v599 = vor.u32 1.1754944e-38, %v598
      %v600 = vsel %vm597, %v599, %v595
      %v601 = vmul.f32 1.0, %v600
      %v602 = vrcp.pop %v496
      %v603 = vmul.f32 %v496, %v602
      %v604 = vsub.f32 1.0, %v603
      %v605 = vmul.f32 %v602, %v604
      %v606 = vadd.f32 %v602, %v605
      %vm607 = vweird.f32 %v496
      %vm608 = vweird.f32 %v602
      %vm609 = vmor %vm607, %vm608
      %v610 = vsel %vm609, %v602, %v606
      %v611 = vand.u32 2147483647, %v496
      %vm612 = vcmp.eq.f32.partialorder %v611, 8.507059e+37
      %v613 = vand.u32 %v496, 2147483648
      %v614 = vor.u32 1.1754944e-38, %v613
      %v615 = vsel %vm612, %v614, %v610
      %v616 = vmul.f32 1.0, %v615
      %v617 = vmul.f32 %v457, %v511
      %v618 = vmul.f32 %v458, %v526
      %v619 = vmul.f32 %v459, %v541
      %v620 = vmul.f32 %v460, %v556
      %v621 = vmul.f32 %v461, %v571
      %v622 = vmul.f32 %v462, %v586
      %v623 = vmul.f32 %v463, %v601
      %v624 = vmul.f32 %v464, %v616
      %v625 = vpack.c.bf16 %v618, %v617
      %v626 = vpack.c.bf16 %v620, %v619
      %v627 = vpack.c.bf16 %v622, %v621
      %v628 = vpack.c.bf16 %v624, %v623
      %v629 = vld [vmem:[%s3] sm:$0xf]
      %v630 = vld [vmem:[%s3 + $0x4] sm:$0xf]
      %v631 = vld [vmem:[%s3 + $0x8] sm:$0xf]
      %v632 = vld [vmem:[%s3 + $0xc] sm:$0xf]
      %v633 = vld [vmem:[%s4] sm:$0x1]
      %v635 = vperm.slane %v633, 0
      %v641 = vunpack.c.l.b16 %v629
      %v642 = vunpack.c.l.b16 %v630
      %v643 = vunpack.c.l.b16 %v631
      %v644 = vunpack.c.l.b16 %v632
      %v645 = vpack.c.b16 %v642, %v641
      %v646 = vpack.c.b16 %v644, %v643
      %vm649 = vcmask 261120
      %v651 = vsel %vm649, %v625, 0
      %v654 = vsel %vm649, %v626, 0
      %v657 = vsel %vm649, %v627, 0
      %v660 = vsel %vm649, %v628, 0
      %662 = vmatpush.bf16.msra.mxu0 0
      %663 = vmatpush.bf16.msra.mxu0 0
      %664 = vmatpush.bf16.msra.mxu0 0
      %665 = vmatpush.bf16.msra.mxu0 0
      %666 = vmatpush.bf16.msra.mxu0 0
      %667 = vmatpush.bf16.msra.mxu0 0
      %668 = vmatpush.bf16.msra.mxu0 %v646
      %669 = vmatpush.bf16.msra.mxu0 %v645
      %670 = vmatmul.bf16.gmra.mxu0 %v651
      %v671 = vpop.f32.mrf.mxu0
      %v672 = vadd.f32 %v635, %v671
      %v673 = vpop.f32.mrf.mxu0
      %v674 = vadd.f32 %v635, %v673
      %675 = vmatmul.bf16.gmra.mxu0 %v654
      %v676 = vpop.f32.mrf.mxu0
      %v677 = vadd.f32 %v635, %v676
      %v678 = vpop.f32.mrf.mxu0
      %v679 = vadd.f32 %v635, %v678
      %680 = vmatmul.bf16.gmra.mxu0 %v657
      %v681 = vpop.f32.mrf.mxu0
      %v682 = vadd.f32 %v635, %v681
      %v683 = vpop.f32.mrf.mxu0
      %v684 = vadd.f32 %v635, %v683
      %685 = vmatmul.bf16.gmra.mxu0 %v660
      %v686 = vpop.f32.mrf.mxu0
      %v687 = vadd.f32 %v635, %v686
      %v688 = vpop.f32.mrf.mxu0
      %v689 = vadd.f32 %v635, %v688
      %690 = vdwg.mxu0
      %691 = vst.msk [vmem:[%s224] sm:$0xff] %vm649, %v672
      %692 = vst.msk [vmem:[%s224 + $0x8] sm:$0xff] %vm649, %v674
      %693 = vst.msk [vmem:[%s224 + $0x10] sm:$0xff] %vm649, %v677
      %694 = vst.msk [vmem:[%s224 + $0x18] sm:$0xff] %vm649, %v679
      %695 = vst.msk [vmem:[%s224 + $0x20] sm:$0xff] %vm649, %v682
      %696 = vst.msk [vmem:[%s224 + $0x28] sm:$0xff] %vm649, %v684
      %697 = vst.msk [vmem:[%s224 + $0x30] sm:$0xff] %vm649, %v687
      %698 = vst.msk [vmem:[%s224 + $0x38] sm:$0xff] %vm649, %v689
      %p699 = scmp.lt.s32.totalorder %s16, 1
      %s700 = scalar_select %p699, %s16, 1
      %s701 = smul.addr %s700, 8
      %s702 = smul.addr %s701, 8
      %s703 = scalar_lea.vmem %s5, %s702
      // Predicated region
      $region41: #{vision_tower_forward.8} parent=39 // pred_check
        %p704 = pneg %p144
      $region42: #{vision_tower_forward.8} parent=39 // pred_check_branch
        %706 = sbr.rel (%p704) target = $region44
      $region43: #{vision_tower_forward.8} parent=39 // pred_region
        _
      $region44: #{vision_tower_forward.8} parent=39 // pred_fallthru
        _
    $region40: #{vision_tower_forward.8} parent=5 // pred_fallthru
      _
    %p707 = scmp.le.s32.totalorder 2, %s11
    // Predicated region
    $region45: #{vision_tower_forward.8} parent=5 // pred_check
      %p708 = pneg %p707
    $region46: #{vision_tower_forward.8} parent=5 // pred_check_branch
      %710 = sbr.rel (%p708) target = $region48
    $region47: #{vision_tower_forward.8} parent=5 // pred_region
      %s711 = ssub.s32 %s11, 2
      // Predicated region
      $region49: #{vision_tower_forward.8} parent=47 // pred_check
        %p712 = pneg %p150
      $region50: #{vision_tower_forward.8} parent=47 // pred_check_branch
        %714 = sbr.rel (%p712) target = $region52
      $region51: #{vision_tower_forward.8} parent=47 // pred_region
        %p715 = scmp.lt.s32.totalorder %s17, 1
        %s716 = scalar_select %p715, %s17, 1
        %s717 = smul.addr %s716, 8
        %s718 = smul.addr %s717, 8
        %s719 = scalar_lea.vmem %s5, %s718
      $region52: #{vision_tower_forward.8} parent=47 // pred_fallthru
        _
    $region48: #{vision_tower_forward.8} parent=5 // pred_fallthru
      _
  $region6: #{vision_tower_forward.8} parent=0 // loop_footer
    %s15 = sadd.s32 1, %s11
  $region7: #{vision_tower_forward.8} parent=0 // loop_footer_branch
    %10 = sbr.rel target = $region3
  $region8: #{vision_tower_forward.8} parent=0 // loop_exit
    _

// kernel: vision_tower_forward.11
$region0: #{vision_tower_forward.11}
  #allocation0 [shape = 'u32[]', space=smem, size = 0x4, offset = 0x4, fixed_abs, tag = 'smem constant byte address 0x4 - core index']
  #allocation1 [shape = 'u32[72,128]{1,0:T(1,128)}', space=vmem, size = 0x9000, scoped, tag = 'internal scratch']
  %s0 = inlined_call_operand.vmem [shape: bf16[128,32], index: 0, kind: input, shape index: {}]
  %s1 = inlined_call_operand.vmem [shape: bf16[32,64], index: 1, kind: input, shape index: {}]
  %s2 = inlined_call_operand.vmem [shape: f32[1,64], index: 2, kind: input, shape index: {}]
  %s3 = inlined_call_operand.hbm [shape: f32[128,64], index: 3, kind: output, shape index: {}]
  %s4 = sld [smem:[#allocation0]]
  $region22: #{vision_tower_forward.11} parent=0
    _
  %s6 = ssub.s32 1, %s4
  %s7 = scalar_select 0, %s6, %s4
  $region1: #{vision_tower_forward.11} parent=0
    #allocation2 [shape = 'u8[65536]{0}', space=vmem, size = 0x10000, scoped, tag = 'output window, operand 0, single buffered']
    #allocation3 [shape = 's32[1]{0}', space=sflag, size = 0x4, scoped, tag = 'scoped memory for vision_tower_forward.11']
    %8 = vsyncpa [#allocation3], 0
    // Predicated region
    $region2: #{vision_tower_forward.11} parent=1 // pred_check
      _
    $region3: #{vision_tower_forward.11} parent=1 // pred_check_branch
      %10 = sbr.rel (0) target = $region5
    $region4: #{vision_tower_forward.11} parent=1 // pred_region
      _
    $region5: #{vision_tower_forward.11} parent=1 // pred_fallthru
      _
    // Predicated region
    $region6: #{vision_tower_forward.11} parent=1 // pred_check
      _
    $region7: #{vision_tower_forward.11} parent=1 // pred_check_branch
      %12 = sbr.rel (0) target = $region9
    $region8: #{vision_tower_forward.11} parent=1 // pred_region
      _
    $region9: #{vision_tower_forward.11} parent=1 // pred_fallthru
      _
    // Predicated region
    $region10: #{vision_tower_forward.11} parent=1 // pred_check
      _
    $region11: #{vision_tower_forward.11} parent=1 // pred_check_branch
      %14 = sbr.rel (0) target = $region13
    $region12: #{vision_tower_forward.11} parent=1 // pred_region
      _
    $region13: #{vision_tower_forward.11} parent=1 // pred_fallthru
      _
    %v16 = vld [vmem:[%s0] sm:$0xf]
    %v17 = vld [vmem:[%s0 + $0x4] sm:$0xf]
    %v18 = vld [vmem:[%s0 + $0x8] sm:$0xf]
    %v19 = vld [vmem:[%s0 + $0xc] sm:$0xf]
    %v20 = vld [vmem:[%s0 + $0x10] sm:$0xf]
    %v21 = vld [vmem:[%s0 + $0x14] sm:$0xf]
    %v22 = vld [vmem:[%s0 + $0x18] sm:$0xf]
    %v23 = vld [vmem:[%s0 + $0x1c] sm:$0xf]
    %v24 = vld [vmem:[%s0 + $0x20] sm:$0xf]
    %v25 = vld [vmem:[%s0 + $0x24] sm:$0xf]
    %v26 = vld [vmem:[%s0 + $0x28] sm:$0xf]
    %v27 = vld [vmem:[%s0 + $0x2c] sm:$0xf]
    %v28 = vld [vmem:[%s0 + $0x30] sm:$0xf]
    %v29 = vld [vmem:[%s0 + $0x34] sm:$0xf]
    %v30 = vld [vmem:[%s0 + $0x38] sm:$0xf]
    %v31 = vld [vmem:[%s0 + $0x3c] sm:$0xf]
    %v32 = vld [vmem:[%s1] sm:$0xf]
    %v33 = vld [vmem:[%s1 + $0x4] sm:$0xf]
    %v34 = vld [vmem:[%s1 + $0x8] sm:$0xf]
    %v35 = vld [vmem:[%s1 + $0xc] sm:$0xf]
    %v36 = vld [vmem:[%s2] sm:$0x1]
    %v38 = vperm.slane %v36, 0
    %v56 = vunpack.c.l.b16 %v16
    %v57 = vunpack.c.l.b16 %v17
    %v58 = vunpack.c.l.b16 %v18
    %v59 = vunpack.c.l.b16 %v19
    %v60 = vunpack.c.l.b16 %v20
    %v61 = vunpack.c.l.b16 %v21
    %v62 = vunpack.c.l.b16 %v22
    %v63 = vunpack.c.l.b16 %v23
    %v64 = vunpack.c.l.b16 %v24
    %v65 = vunpack.c.l.b16 %v25
    %v66 = vunpack.c.l.b16 %v26
    %v67 = vunpack.c.l.b16 %v27
    %v68 = vunpack.c.l.b16 %v28
    %v69 = vunpack.c.l.b16 %v29
    %v70 = vunpack.c.l.b16 %v30
    %v71 = vunpack.c.l.b16 %v31
    %v72 = vpack.c.b16 %v57, %v56
    %v73 = vpack.c.b16 %v59, %v58
    %v74 = vpack.c.b16 %v61, %v60
    %v75 = vpack.c.b16 %v63, %v62
    %v76 = vpack.c.b16 %v65, %v64
    %v77 = vpack.c.b16 %v67, %v66
    %v78 = vpack.c.b16 %v69, %v68
    %v79 = vpack.c.b16 %v71, %v70
    %v84 = vunpack.c.l.b16 %v32
    %v85 = vunpack.c.l.b16 %v33
    %v86 = vunpack.c.l.b16 %v34
    %v87 = vunpack.c.l.b16 %v35
    %v88 = vpack.c.b16 %v85, %v84
    %v89 = vpack.c.b16 %v87, %v86
    %vm92 = vcmask 261120
    %v94 = vsel %vm92, %v72, 0
    %v97 = vsel %vm92, %v73, 0
    %v100 = vsel %vm92, %v74, 0
    %v103 = vsel %vm92, %v75, 0
    %v106 = vsel %vm92, %v76, 0
    %v109 = vsel %vm92, %v77, 0
    %v112 = vsel %vm92, %v78, 0
    %v115 = vsel %vm92, %v79, 0
    %117 = vmatpush.bf16.msra.mxu0 0
    %118 = vmatpush.bf16.msra.mxu0 0
    %119 = vmatpush.bf16.msra.mxu0 0
    %120 = vmatpush.bf16.msra.mxu0 0
    %121 = vmatpush.bf16.msra.mxu0 0
    %122 = vmatpush.bf16.msra.mxu0 0
    %123 = vmatpush.bf16.msra.mxu0 %v89
    %124 = vmatpush.bf16.msra.mxu0 %v88
    %125 = vmatmul.bf16.gmra.mxu0 %v94
    %v126 = vpop.f32.mrf.mxu0
    %v127 = vadd.f32 %v38, %v126
    %v128 = vpop.f32.mrf.mxu0
    %v129 = vadd.f32 %v38, %v128
    %130 = vmatmul.bf16.gmra.mxu0 %v97
    %v131 = vpop.f32.mrf.mxu0
    %v132 = vadd.f32 %v38, %v131
    %v133 = vpop.f32.mrf.mxu0
    %v134 = vadd.f32 %v38, %v133
    %135 = vmatmul.bf16.gmra.mxu0 %v100
    %v136 = vpop.f32.mrf.mxu0
    %v137 = vadd.f32 %v38, %v136
    %v138 = vpop.f32.mrf.mxu0
    %v139 = vadd.f32 %v38, %v138
    %140 = vmatmul.bf16.gmra.mxu0 %v103
    %v141 = vpop.f32.mrf.mxu0
    %v142 = vadd.f32 %v38, %v141
    %v143 = vpop.f32.mrf.mxu0
    %v144 = vadd.f32 %v38, %v143
    %145 = vmatmul.bf16.gmra.mxu0 %v106
    %v146 = vpop.f32.mrf.mxu0
    %v147 = vadd.f32 %v38, %v146
    %v148 = vpop.f32.mrf.mxu0
    %v149 = vadd.f32 %v38, %v148
    %150 = vmatmul.bf16.gmra.mxu0 %v109
    %v151 = vpop.f32.mrf.mxu0
    %v152 = vadd.f32 %v38, %v151
    %v153 = vpop.f32.mrf.mxu0
    %v154 = vadd.f32 %v38, %v153
    %155 = vmatmul.bf16.gmra.mxu0 %v112
    %v156 = vpop.f32.mrf.mxu0
    %v157 = vadd.f32 %v38, %v156
    %v158 = vpop.f32.mrf.mxu0
    %v159 = vadd.f32 %v38, %v158
    %160 = vmatmul.bf16.gmra.mxu0 %v115
    %v161 = vpop.f32.mrf.mxu0
    %v162 = vadd.f32 %v38, %v161
    %v163 = vpop.f32.mrf.mxu0
    %v164 = vadd.f32 %v38, %v163
    %165 = vdwg.mxu0
    %vm166 = vcmask 523264
    %167 = vst.msk [vmem:[#allocation2] sm:$0xff] %vm166, %v127
    %168 = vst.msk [vmem:[#allocation2 + $0x8] sm:$0xff] %vm166, %v129
    %169 = vst.msk [vmem:[#allocation2 + $0x10] sm:$0xff] %vm166, %v132
    %170 = vst.msk [vmem:[#allocation2 + $0x18] sm:$0xff] %vm166, %v134
    %171 = vst.msk [vmem:[#allocation2 + $0x20] sm:$0xff] %vm166, %v137
    %172 = vst.msk [vmem:[#allocation2 + $0x28] sm:$0xff] %vm166, %v139
    %173 = vst.msk [vmem:[#allocation2 + $0x30] sm:$0xff] %vm166, %v142
    %174 = vst.msk [vmem:[#allocation2 + $0x38] sm:$0xff] %vm166, %v144
    %175 = vst.msk [vmem:[#allocation2 + $0x40] sm:$0xff] %vm166, %v147
    %176 = vst.msk [vmem:[#allocation2 + $0x48] sm:$0xff] %vm166, %v149
    %177 = vst.msk [vmem:[#allocation2 + $0x50] sm:$0xff] %vm166, %v152
    %178 = vst.msk [vmem:[#allocation2 + $0x58] sm:$0xff] %vm166, %v154
    %179 = vst.msk [vmem:[#allocation2 + $0x60] sm:$0xff] %vm166, %v157
    %180 = vst.msk [vmem:[#allocation2 + $0x68] sm:$0xff] %vm166, %v159
    %181 = vst.msk [vmem:[#allocation2 + $0x70] sm:$0xff] %vm166, %v162
    %182 = vst.msk [vmem:[#allocation2 + $0x78] sm:$0xff] %vm166, %v164
    // Predicated region
    $region14: #{vision_tower_forward.11} parent=1 // pred_check
      _
    $region15: #{vision_tower_forward.11} parent=1 // pred_check_branch
      %184 = sbr.rel (0) target = $region17
    $region16: #{vision_tower_forward.11} parent=1 // pred_region
      %186 = vsyncadd [#allocation3], 0
      %s187 = sshll.u32 [#allocation2], 4
      %s188 = int_to_ptr.vmem [resolvable:$true] %s187
      %s189 = sshll.u32 %s3, 4
      %s190 = int_to_ptr.hbm [resolvable:$true] %s189
      %195 = dma.vmem_to_hbm [thread:$0]  %s188, 2048, %s190, [#allocation3], 128, 128, 8
    $region17: #{vision_tower_forward.11} parent=1 // pred_fallthru
      _
    // Predicated region
    $region18: #{vision_tower_forward.11} parent=1 // pred_check
      _
    $region19: #{vision_tower_forward.11} parent=1 // pred_check_branch
      %197 = sbr.rel (0) target = $region21
    $region20: #{vision_tower_forward.11} parent=1 // pred_region
      %199 = dma.done [#allocation3], 2048
    $region21: #{vision_tower_forward.11} parent=1 // pred_fallthru
      _
    %200 = vsyncpa [#allocation3], 1

// kernel: vision_tower_forward.10
$region0: #{vision_tower_forward.10}
  #allocation0 [shape = 'u32[]', space=smem, size = 0x4, offset = 0x4, fixed_abs, tag = 'smem constant byte address 0x4 - core index']
  #allocation1 [shape = 'u32[72,128]{1,0:T(1,128)}', space=vmem, size = 0x9000, scoped, tag = 'internal scratch']
  #allocation2 [shape = 'f32[1,1]{1,0:T(1,128)S(1)}', space=vmem, size = 0x200, scoped, tag = 'scoped memory for vision_tower_forward.10']
  %s0 = inlined_call_operand.vmem [shape: f32[2,4,16,32], index: 0, kind: input, shape index: {}]
  %s1 = inlined_call_operand.vmem [shape: f32[1,32], index: 1, kind: input, shape index: {}]
  %s2 = inlined_call_operand.vmem [shape: f32[1,32], index: 2, kind: input, shape index: {}]
  %s3 = inlined_call_operand.vmem [shape: f32[1,32], index: 3, kind: input, shape index: {}]
  %s4 = inlined_call_operand.<no memory space> [shape: f32[1,1], index: 4, kind: input, shape index: {}]
  %s5 = inlined_call_operand.vmem [shape: bf16[32,32], index: 5, kind: input, shape index: {}]
  %s6 = inlined_call_operand.vmem [shape: f32[1,32], index: 6, kind: input, shape index: {}]
  %s7 = inlined_call_operand.vmem [shape: bf16[32,32], index: 7, kind: input, shape index: {}]
  %s8 = inlined_call_operand.vmem [shape: f32[1,32], index: 8, kind: input, shape index: {}]
  %s9 = inlined_call_operand.vmem [shape: bf16[32,32], index: 9, kind: input, shape index: {}]
  %s10 = inlined_call_operand.vmem [shape: f32[1,32], index: 10, kind: input, shape index: {}]
  %s11 = inlined_call_operand.vmem [shape: f32[1,32], index: 11, kind: input, shape index: {}]
  %s12 = inlined_call_operand.vmem [shape: f32[1,32], index: 12, kind: input, shape index: {}]
  %s13 = inlined_call_operand.vmem [shape: bf16[32,64], index: 13, kind: input, shape index: {}]
  %s14 = inlined_call_operand.vmem [shape: f32[1,64], index: 14, kind: input, shape index: {}]
  %s15 = inlined_call_operand.vmem [shape: bf16[64,32], index: 15, kind: input, shape index: {}]
  %s16 = inlined_call_operand.vmem [shape: f32[1,32], index: 16, kind: input, shape index: {}]
  %s17 = inlined_call_operand.vmem [shape: f32[1,32], index: 17, kind: input, shape index: {}]
  %s18 = inlined_call_operand.vmem [shape: f32[1,32], index: 18, kind: input, shape index: {}]
  %s19 = inlined_call_operand.vmem [shape: f32[2,4,16,32], index: 19, kind: output, shape index: {}]
  %s20 = sld [smem:[#allocation0]]
  $region109: #{vision_tower_forward.10} parent=0
    _
  %s22 = ssub.s32 1, %s20
  %s23 = scalar_select 0, %s22, %s20
  %v24 = vstv %s4
  %25 = vst [vmem:[#allocation2] sm:$0x1] %v24
  loop: start=0, step=1, limit=4
  $region2: #{vision_tower_forward.10} parent=0 // loop_pre_header
    _
  $region3: #{vision_tower_forward.10} parent=0 // loop_header
    %s27 = sphi 0, %s31
    %p28 = scmp.ge.s32.totalorder %s27, 4
    %s37 = sphi 0, %s39
    %s40 = sphi 0, %s37
    %s41 = sphi 0, %s40
    %s57 = sphi 0, %s41
    %s61 = sphi 0, %s61
    %s63 = sphi 0, %s61
    %s64 = sphi 0, %s63
    %s78 = sphi 0, %s64
    %s82 = sphi 0, %s82
    %s84 = sphi 0, %s82
    %s85 = sphi 0, %s84
    %s99 = sphi 0, %s85
    %s103 = sphi 0, %s103
    %s105 = sphi 0, %s103
    %s106 = sphi 0, %s105
    %s120 = sphi 0, %s106
    %s124 = sphi 0, %s124
    %s126 = sphi 0, %s124
    %s127 = sphi 0, %s126
    %s141 = sphi 0, %s127
    %s145 = sphi 0, %s145
    %s147 = sphi 0, %s145
    %s148 = sphi 0, %s147
    %s162 = sphi 0, %s148
    %s166 = sphi 0, %s166
    %s168 = sphi 0, %s166
    %s169 = sphi 0, %s168
    %s183 = sphi 0, %s169
    %s187 = sphi 0, %s187
    %s189 = sphi 0, %s187
    %s190 = sphi 0, %s189
    %s204 = sphi 0, %s190
    %s208 = sphi 0, %s208
    %s210 = sphi 0, %s208
    %s211 = sphi 0, %s210
    %s225 = sphi 0, %s211
    %s229 = sphi 0, %s229
    %s231 = sphi 0, %s229
    %s232 = sphi 0, %s231
    %s246 = sphi 0, %s232
    %s250 = sphi 0, %s250
    %s252 = sphi 0, %s250
    %s253 = sphi 0, %s252
    %s267 = sphi 0, %s253
    %s271 = sphi 0, %s271
    %s273 = sphi 0, %s271
    %s274 = sphi 0, %s273
    %s288 = sphi 0, %s274
    %s292 = sphi 0, %s292
    %s294 = sphi 0, %s292
    %s295 = sphi 0, %s294
    %s309 = sphi 0, %s295
    %s313 = sphi 0, %s313
    %s315 = sphi 0, %s313
    %s316 = sphi 0, %s315
    %s330 = sphi 0, %s316
    %s334 = sphi 0, %s334
    %s336 = sphi 0, %s334
    %s337 = sphi 0, %s336
    %s351 = sphi 0, %s337
    %s355 = sphi 0, %s355
    %s357 = sphi 0, %s355
    %s358 = sphi 0, %s357
    %s372 = sphi 0, %s358
    %s376 = sphi 0, %s376
    %s378 = sphi 0, %s376
    %s379 = sphi 0, %s378
    %s393 = sphi 0, %s379
    %s397 = sphi 0, %s397
    %s399 = sphi 0, %s397
    %s400 = sphi 0, %s399
    %s414 = sphi 0, %s400
    %s418 = sphi 0, %s418
    %s420 = sphi 0, %s418
    %s421 = sphi 0, %s420
    %s435 = sphi 0, %s421
    %s441 = sphi 0, %s443
    %s444 = sphi 0, %s441
    %s445 = sphi 0, %s444
    %s461 = sphi 0, %s445
  $region4: #{vision_tower_forward.10} parent=0 // loop_header_branch
    %30 = sbr.rel (%p28) target = $region8
  $region5: #{vision_tower_forward.10} parent=0 // loop_body
    %s32 = ssub.s32 %s27, 1
    %s33 = ssub.s32 %s27, 2
    %s34 = sadd.s32 %s27, 1
    %s35 = ssub.s32 %s27, %s34
    %p36 = scmp.eq.s32.totalorder %s35, 0
    %s38 = sadd.s32 %s37, 1
    %s39 = scalar_select %p36, %s37, %s38
    %p42 = pneg %p36
    %p43 = scmp.eq.s32.totalorder %s27, 1
    %p44 = por %p42, %p43
    %p45 = scmp.ne.s32.totalorder %s37, %s40
    %p46 = scmp.eq.s32.totalorder %s27, 0
    %p47 = por %p45, %p46
    %p48 = scmp.ne.s32.totalorder %s37, %s40
    %p49 = scmp.eq.s32.totalorder %s32, 1
    %p50 = por %p48, %p49
    %p51 = scmp.ne.s32.totalorder %s40, %s41
    %p52 = scmp.eq.s32.totalorder %s32, 0
    %p53 = por %p51, %p52
    %p54 = scmp.ne.s32.totalorder %s40, %s41
    %p55 = scmp.eq.s32.totalorder %s33, 1
    %p56 = por %p54, %p55
    %p58 = scmp.ne.s32.totalorder %s41, %s57
    %p59 = scmp.eq.s32.totalorder %s33, 0
    %p60 = por %p58, %p59
    %s62 = sadd.s32 %s61, 1
    %p65 = scmp.eq.s32.totalorder %s27, 1
    %p66 = scmp.ne.s32.totalorder %s61, %s63
    %p67 = scmp.eq.s32.totalorder %s27, 0
    %p68 = por %p66, %p67
    %p69 = scmp.ne.s32.totalorder %s61, %s63
    %p70 = scmp.eq.s32.totalorder %s32, 1
    %p71 = por %p69, %p70
    %p72 = scmp.ne.s32.totalorder %s63, %s64
    %p73 = scmp.eq.s32.totalorder %s32, 0
    %p74 = por %p72, %p73
    %p75 = scmp.ne.s32.totalorder %s63, %s64
    %p76 = scmp.eq.s32.totalorder %s33, 1
    %p77 = por %p75, %p76
    %p79 = scmp.ne.s32.totalorder %s64, %s78
    %p80 = scmp.eq.s32.totalorder %s33, 0
    %p81 = por %p79, %p80
    %s83 = sadd.s32 %s82, 1
    %p86 = scmp.eq.s32.totalorder %s27, 1
    %p87 = scmp.ne.s32.totalorder %s82, %s84
    %p88 = scmp.eq.s32.totalorder %s27, 0
    %p89 = por %p87, %p88
    %p90 = scmp.ne.s32.totalorder %s82, %s84
    %p91 = scmp.eq.s32.totalorder %s32, 1
    %p92 = por %p90, %p91
    %p93 = scmp.ne.s32.totalorder %s84, %s85
    %p94 = scmp.eq.s32.totalorder %s32, 0
    %p95 = por %p93, %p94
    %p96 = scmp.ne.s32.totalorder %s84, %s85
    %p97 = scmp.eq.s32.totalorder %s33, 1
    %p98 = por %p96, %p97
    %p100 = scmp.ne.s32.totalorder %s85, %s99
    %p101 = scmp.eq.s32.totalorder %s33, 0
    %p102 = por %p100, %p101
    %s104 = sadd.s32 %s103, 1
    %p107 = scmp.eq.s32.totalorder %s27, 1
    %p108 = scmp.ne.s32.totalorder %s103, %s105
    %p109 = scmp.eq.s32.totalorder %s27, 0
    %p110 = por %p108, %p109
    %p111 = scmp.ne.s32.totalorder %s103, %s105
    %p112 = scmp.eq.s32.totalorder %s32, 1
    %p113 = por %p111, %p112
    %p114 = scmp.ne.s32.totalorder %s105, %s106
    %p115 = scmp.eq.s32.totalorder %s32, 0
    %p116 = por %p114, %p115
    %p117 = scmp.ne.s32.totalorder %s105, %s106
    %p118 = scmp.eq.s32.totalorder %s33, 1
    %p119 = por %p117, %p118
    %p121 = scmp.ne.s32.totalorder %s106, %s120
    %p122 = scmp.eq.s32.totalorder %s33, 0
    %p123 = por %p121, %p122
    %s125 = sadd.s32 %s124, 1
    %p128 = scmp.eq.s32.totalorder %s27, 1
    %p129 = scmp.ne.s32.totalorder %s124, %s126
    %p130 = scmp.eq.s32.totalorder %s27, 0
    %p131 = por %p129, %p130
    %p132 = scmp.ne.s32.totalorder %s124, %s126
    %p133 = scmp.eq.s32.totalorder %s32, 1
    %p134 = por %p132, %p133
    %p135 = scmp.ne.s32.totalorder %s126, %s127
    %p136 = scmp.eq.s32.totalorder %s32, 0
    %p137 = por %p135, %p136
    %p138 = scmp.ne.s32.totalorder %s126, %s127
    %p139 = scmp.eq.s32.totalorder %s33, 1
    %p140 = por %p138, %p139
    %p142 = scmp.ne.s32.totalorder %s127, %s141
    %p143 = scmp.eq.s32.totalorder %s33, 0
    %p144 = por %p142, %p143
    %s146 = sadd.s32 %s145, 1
    %p149 = scmp.eq.s32.totalorder %s27, 1
    %p150 = scmp.ne.s32.totalorder %s145, %s147
    %p151 = scmp.eq.s32.totalorder %s27, 0
    %p152 = por %p150, %p151
    %p153 = scmp.ne.s32.totalorder %s145, %s147
    %p154 = scmp.eq.s32.totalorder %s32, 1
    %p155 = por %p153, %p154
    %p156 = scmp.ne.s32.totalorder %s147, %s148
    %p157 = scmp.eq.s32.totalorder %s32, 0
    %p158 = por %p156, %p157
    %p159 = scmp.ne.s32.totalorder %s147, %s148
    %p160 = scmp.eq.s32.totalorder %s33, 1
    %p161 = por %p159, %p160
    %p163 = scmp.ne.s32.totalorder %s148, %s162
    %p164 = scmp.eq.s32.totalorder %s33, 0
    %p165 = por %p163, %p164
    %s167 = sadd.s32 %s166, 1
    %p170 = scmp.eq.s32.totalorder %s27, 1
    %p171 = scmp.ne.s32.totalorder %s166, %s168
    %p172 = scmp.eq.s32.totalorder %s27, 0
    %p173 = por %p171, %p172
    %p174 = scmp.ne.s32.totalorder %s166, %s168
    %p175 = scmp.eq.s32.totalorder %s32, 1
    %p176 = por %p174, %p175
    %p177 = scmp.ne.s32.totalorder %s168, %s169
    %p178 = scmp.eq.s32.totalorder %s32, 0
    %p179 = por %p177, %p178
    %p180 = scmp.ne.s32.totalorder %s168, %s169
    %p181 = scmp.eq.s32.totalorder %s33, 1
    %p182 = por %p180, %p181
    %p184 = scmp.ne.s32.totalorder %s169, %s183
    %p185 = scmp.eq.s32.totalorder %s33, 0
    %p186 = por %p184, %p185
    %s188 = sadd.s32 %s187, 1
    %p191 = scmp.eq.s32.totalorder %s27, 1
    %p192 = scmp.ne.s32.totalorder %s187, %s189
    %p193 = scmp.eq.s32.totalorder %s27, 0
    %p194 = por %p192, %p193
    %p195 = scmp.ne.s32.totalorder %s187, %s189
    %p196 = scmp.eq.s32.totalorder %s32, 1
    %p197 = por %p195, %p196
    %p198 = scmp.ne.s32.totalorder %s189, %s190
    %p199 = scmp.eq.s32.totalorder %s32, 0
    %p200 = por %p198, %p199
    %p201 = scmp.ne.s32.totalorder %s189, %s190
    %p202 = scmp.eq.s32.totalorder %s33, 1
    %p203 = por %p201, %p202
    %p205 = scmp.ne.s32.totalorder %s190, %s204
    %p206 = scmp.eq.s32.totalorder %s33, 0
    %p207 = por %p205, %p206
    %s209 = sadd.s32 %s208, 1
    %p212 = scmp.eq.s32.totalorder %s27, 1
    %p213 = scmp.ne.s32.totalorder %s208, %s210
    %p214 = scmp.eq.s32.totalorder %s27, 0
    %p215 = por %p213, %p214
    %p216 = scmp.ne.s32.totalorder %s208, %s210
    %p217 = scmp.eq.s32.totalorder %s32, 1
    %p218 = por %p216, %p217
    %p219 = scmp.ne.s32.totalorder %s210, %s211
    %p220 = scmp.eq.s32.totalorder %s32, 0
    %p221 = por %p219, %p220
    %p222 = scmp.ne.s32.totalorder %s210, %s211
    %p223 = scmp.eq.s32.totalorder %s33, 1
    %p224 = por %p222, %p223
    %p226 = scmp.ne.s32.totalorder %s211, %s225
    %p227 = scmp.eq.s32.totalorder %s33, 0
    %p228 = por %p226, %p227
    %s230 = sadd.s32 %s229, 1
    %p233 = scmp.eq.s32.totalorder %s27, 1
    %p234 = scmp.ne.s32.totalorder %s229, %s231
    %p235 = scmp.eq.s32.totalorder %s27, 0
    %p236 = por %p234, %p235
    %p237 = scmp.ne.s32.totalorder %s229, %s231
    %p238 = scmp.eq.s32.totalorder %s32, 1
    %p239 = por %p237, %p238
    %p240 = scmp.ne.s32.totalorder %s231, %s232
    %p241 = scmp.eq.s32.totalorder %s32, 0
    %p242 = por %p240, %p241
    %p243 = scmp.ne.s32.totalorder %s231, %s232
    %p244 = scmp.eq.s32.totalorder %s33, 1
    %p245 = por %p243, %p244
    %p247 = scmp.ne.s32.totalorder %s232, %s246
    %p248 = scmp.eq.s32.totalorder %s33, 0
    %p249 = por %p247, %p248
    %s251 = sadd.s32 %s250, 1
    %p254 = scmp.eq.s32.totalorder %s27, 1
    %p255 = scmp.ne.s32.totalorder %s250, %s252
    %p256 = scmp.eq.s32.totalorder %s27, 0
    %p257 = por %p255, %p256
    %p258 = scmp.ne.s32.totalorder %s250, %s252
    %p259 = scmp.eq.s32.totalorder %s32, 1
    %p260 = por %p258, %p259
    %p261 = scmp.ne.s32.totalorder %s252, %s253
    %p262 = scmp.eq.s32.totalorder %s32, 0
    %p263 = por %p261, %p262
    %p264 = scmp.ne.s32.totalorder %s252, %s253
    %p265 = scmp.eq.s32.totalorder %s33, 1
    %p266 = por %p264, %p265
    %p268 = scmp.ne.s32.totalorder %s253, %s267
    %p269 = scmp.eq.s32.totalorder %s33, 0
    %p270 = por %p268, %p269
    %s272 = sadd.s32 %s271, 1
    %p275 = scmp.eq.s32.totalorder %s27, 1
    %p276 = scmp.ne.s32.totalorder %s271, %s273
    %p277 = scmp.eq.s32.totalorder %s27, 0
    %p278 = por %p276, %p277
    %p279 = scmp.ne.s32.totalorder %s271, %s273
    %p280 = scmp.eq.s32.totalorder %s32, 1
    %p281 = por %p279, %p280
    %p282 = scmp.ne.s32.totalorder %s273, %s274
    %p283 = scmp.eq.s32.totalorder %s32, 0
    %p284 = por %p282, %p283
    %p285 = scmp.ne.s32.totalorder %s273, %s274
    %p286 = scmp.eq.s32.totalorder %s33, 1
    %p287 = por %p285, %p286
    %p289 = scmp.ne.s32.totalorder %s274, %s288
    %p290 = scmp.eq.s32.totalorder %s33, 0
    %p291 = por %p289, %p290
    %s293 = sadd.s32 %s292, 1
    %p296 = scmp.eq.s32.totalorder %s27, 1
    %p297 = scmp.ne.s32.totalorder %s292, %s294
    %p298 = scmp.eq.s32.totalorder %s27, 0
    %p299 = por %p297, %p298
    %p300 = scmp.ne.s32.totalorder %s292, %s294
    %p301 = scmp.eq.s32.totalorder %s32, 1
    %p302 = por %p300, %p301
    %p303 = scmp.ne.s32.totalorder %s294, %s295
    %p304 = scmp.eq.s32.totalorder %s32, 0
    %p305 = por %p303, %p304
    %p306 = scmp.ne.s32.totalorder %s294, %s295
    %p307 = scmp.eq.s32.totalorder %s33, 1
    %p308 = por %p306, %p307
    %p310 = scmp.ne.s32.totalorder %s295, %s309
    %p311 = scmp.eq.s32.totalorder %s33, 0
    %p312 = por %p310, %p311
    %s314 = sadd.s32 %s313, 1
    %p317 = scmp.eq.s32.totalorder %s27, 1
    %p318 = scmp.ne.s32.totalorder %s313, %s315
    %p319 = scmp.eq.s32.totalorder %s27, 0
    %p320 = por %p318, %p319
    %p321 = scmp.ne.s32.totalorder %s313, %s315
    %p322 = scmp.eq.s32.totalorder %s32, 1
    %p323 = por %p321, %p322
    %p324 = scmp.ne.s32.totalorder %s315, %s316
    %p325 = scmp.eq.s32.totalorder %s32, 0
    %p326 = por %p324, %p325
    %p327 = scmp.ne.s32.totalorder %s315, %s316
    %p328 = scmp.eq.s32.totalorder %s33, 1
    %p329 = por %p327, %p328
    %p331 = scmp.ne.s32.totalorder %s316, %s330
    %p332 = scmp.eq.s32.totalorder %s33, 0
    %p333 = por %p331, %p332
    %s335 = sadd.s32 %s334, 1
    %p338 = scmp.eq.s32.totalorder %s27, 1
    %p339 = scmp.ne.s32.totalorder %s334, %s336
    %p340 = scmp.eq.s32.totalorder %s27, 0
    %p341 = por %p339, %p340
    %p342 = scmp.ne.s32.totalorder %s334, %s336
    %p343 = scmp.eq.s32.totalorder %s32, 1
    %p344 = por %p342, %p343
    %p345 = scmp.ne.s32.totalorder %s336, %s337
    %p346 = scmp.eq.s32.totalorder %s32, 0
    %p347 = por %p345, %p346
    %p348 = scmp.ne.s32.totalorder %s336, %s337
    %p349 = scmp.eq.s32.totalorder %s33, 1
    %p350 = por %p348, %p349
    %p352 = scmp.ne.s32.totalorder %s337, %s351
    %p353 = scmp.eq.s32.totalorder %s33, 0
    %p354 = por %p352, %p353
    %s356 = sadd.s32 %s355, 1
    %p359 = scmp.eq.s32.totalorder %s27, 1
    %p360 = scmp.ne.s32.totalorder %s355, %s357
    %p361 = scmp.eq.s32.totalorder %s27, 0
    %p362 = por %p360, %p361
    %p363 = scmp.ne.s32.totalorder %s355, %s357
    %p364 = scmp.eq.s32.totalorder %s32, 1
    %p365 = por %p363, %p364
    %p366 = scmp.ne.s32.totalorder %s357, %s358
    %p367 = scmp.eq.s32.totalorder %s32, 0
    %p368 = por %p366, %p367
    %p369 = scmp.ne.s32.totalorder %s357, %s358
    %p370 = scmp.eq.s32.totalorder %s33, 1
    %p371 = por %p369, %p370
    %p373 = scmp.ne.s32.totalorder %s358, %s372
    %p374 = scmp.eq.s32.totalorder %s33, 0
    %p375 = por %p373, %p374
    %s377 = sadd.s32 %s376, 1
    %p380 = scmp.eq.s32.totalorder %s27, 1
    %p381 = scmp.ne.s32.totalorder %s376, %s378
    %p382 = scmp.eq.s32.totalorder %s27, 0
    %p383 = por %p381, %p382
    %p384 = scmp.ne.s32.totalorder %s376, %s378
    %p385 = scmp.eq.s32.totalorder %s32, 1
    %p386 = por %p384, %p385
    %p387 = scmp.ne.s32.totalorder %s378, %s379
    %p388 = scmp.eq.s32.totalorder %s32, 0
    %p389 = por %p387, %p388
    %p390 = scmp.ne.s32.totalorder %s378, %s379
    %p391 = scmp.eq.s32.totalorder %s33, 1
    %p392 = por %p390, %p391
    %p394 = scmp.ne.s32.totalorder %s379, %s393
    %p395 = scmp.eq.s32.totalorder %s33, 0
    %p396 = por %p394, %p395
    %s398 = sadd.s32 %s397, 1
    %p401 = scmp.eq.s32.totalorder %s27, 1
    %p402 = scmp.ne.s32.totalorder %s397, %s399
    %p403 = scmp.eq.s32.totalorder %s27, 0
    %p404 = por %p402, %p403
    %p405 = scmp.ne.s32.totalorder %s397, %s399
    %p406 = scmp.eq.s32.totalorder %s32, 1
    %p407 = por %p405, %p406
    %p408 = scmp.ne.s32.totalorder %s399, %s400
    %p409 = scmp.eq.s32.totalorder %s32, 0
    %p410 = por %p408, %p409
    %p411 = scmp.ne.s32.totalorder %s399, %s400
    %p412 = scmp.eq.s32.totalorder %s33, 1
    %p413 = por %p411, %p412
    %p415 = scmp.ne.s32.totalorder %s400, %s414
    %p416 = scmp.eq.s32.totalorder %s33, 0
    %p417 = por %p415, %p416
    %s419 = sadd.s32 %s418, 1
    %p422 = scmp.eq.s32.totalorder %s27, 1
    %p423 = scmp.ne.s32.totalorder %s418, %s420
    %p424 = scmp.eq.s32.totalorder %s27, 0
    %p425 = por %p423, %p424
    %p426 = scmp.ne.s32.totalorder %s418, %s420
    %p427 = scmp.eq.s32.totalorder %s32, 1
    %p428 = por %p426, %p427
    %p429 = scmp.ne.s32.totalorder %s420, %s421
    %p430 = scmp.eq.s32.totalorder %s32, 0
    %p431 = por %p429, %p430
    %p432 = scmp.ne.s32.totalorder %s420, %s421
    %p433 = scmp.eq.s32.totalorder %s33, 1
    %p434 = por %p432, %p433
    %p436 = scmp.ne.s32.totalorder %s421, %s435
    %p437 = scmp.eq.s32.totalorder %s33, 0
    %p438 = por %p436, %p437
    %s439 = ssub.s32 %s27, %s34
    %p440 = scmp.eq.s32.totalorder %s439, 0
    %s442 = sadd.s32 %s441, 1
    %s443 = scalar_select %p440, %s441, %s442
    %p446 = pneg %p440
    %p447 = scmp.eq.s32.totalorder %s27, 1
    %p448 = por %p446, %p447
    %p449 = scmp.ne.s32.totalorder %s441, %s444
    %p450 = scmp.eq.s32.totalorder %s27, 0
    %p451 = por %p449, %p450
    %p452 = scmp.ne.s32.totalorder %s441, %s444
    %p453 = scmp.eq.s32.totalorder %s32, 1
    %p454 = por %p452, %p453
    %p455 = scmp.ne.s32.totalorder %s444, %s445
    %p456 = scmp.eq.s32.totalorder %s32, 0
    %p457 = por %p455, %p456
    %p458 = scmp.ne.s32.totalorder %s444, %s445
    %p459 = scmp.eq.s32.totalorder %s33, 1
    %p460 = por %p458, %p459
    %p462 = scmp.ne.s32.totalorder %s445, %s461
    %p463 = scmp.eq.s32.totalorder %s33, 0
    %p464 = por %p462, %p463
    %p465 = scmp.le.s32.totalorder 1, %s27
    %p466 = scmp.lt.s32.totalorder %s27, 3
    %p467 = pnand %p465, %p466
    %p468 = pneg %p467
    // Predicated region
    $region9: #{vision_tower_forward.10} parent=5 // pred_check
      _
    $region10: #{vision_tower_forward.10} parent=5 // pred_check_branch
      %470 = sbr.rel (%p467) target = $region12
    $region11: #{vision_tower_forward.10} parent=5 // pred_region
      %s471 = ssub.s32 %s27, 1
      // Predicated region
      $region13: #{vision_tower_forward.10} parent=11 // pred_check
        %p472 = pneg %p74
      $region14: #{vision_tower_forward.10} parent=11 // pred_check_branch
        %474 = sbr.rel (%p472) target = $region16
      $region15: #{vision_tower_forward.10} parent=11 // pred_region
        _
      $region16: #{vision_tower_forward.10} parent=11 // pred_fallthru
        _
      // Predicated region
      $region17: #{vision_tower_forward.10} parent=11 // pred_check
        %p475 = pneg %p95
      $region18: #{vision_tower_forward.10} parent=11 // pred_check_branch
        %477 = sbr.rel (%p475) target = $region20
      $region19: #{vision_tower_forward.10} parent=11 // pred_region
        _
      $region20: #{vision_tower_forward.10} parent=11 // pred_fallthru
        _
      // Predicated region
      $region21: #{vision_tower_forward.10} parent=11 // pred_check
        %p478 = pneg %p116
      $region22: #{vision_tower_forward.10} parent=11 // pred_check_branch
        %480 = sbr.rel (%p478) target = $region24
      $region23: #{vision_tower_forward.10} parent=11 // pred_region
        _
      $region24: #{vision_tower_forward.10} parent=11 // pred_fallthru
        _
      // Predicated region
      $region25: #{vision_tower_forward.10} parent=11 // pred_check
        %p481 = pneg %p137
      $region26: #{vision_tower_forward.10} parent=11 // pred_check_branch
        %483 = sbr.rel (%p481) target = $region28
      $region27: #{vision_tower_forward.10} parent=11 // pred_region
        _
      $region28: #{vision_tower_forward.10} parent=11 // pred_fallthru
        _
      // Predicated region
      $region29: #{vision_tower_forward.10} parent=11 // pred_check
        %p484 = pneg %p158
      $region30: #{vision_tower_forward.10} parent=11 // pred_check_branch
        %486 = sbr.rel (%p484) target = $region32
      $region31: #{vision_tower_forward.10} parent=11 // pred_region
        _
      $region32: #{vision_tower_forward.10} parent=11 // pred_fallthru
        _
      // Predicated region
      $region33: #{vision_tower_forward.10} parent=11 // pred_check
        %p487 = pneg %p179
      $region34: #{vision_tower_forward.10} parent=11 // pred_check_branch
        %489 = sbr.rel (%p487) target = $region36
      $region35: #{vision_tower_forward.10} parent=11 // pred_region
        _
      $region36: #{vision_tower_forward.10} parent=11 // pred_fallthru
        _
      // Predicated region
      $region37: #{vision_tower_forward.10} parent=11 // pred_check
        %p490 = pneg %p200
      $region38: #{vision_tower_forward.10} parent=11 // pred_check_branch
        %492 = sbr.rel (%p490) target = $region40
      $region39: #{vision_tower_forward.10} parent=11 // pred_region
        _
      $region40: #{vision_tower_forward.10} parent=11 // pred_fallthru
        _
      // Predicated region
      $region41: #{vision_tower_forward.10} parent=11 // pred_check
        %p493 = pneg %p221
      $region42: #{vision_tower_forward.10} parent=11 // pred_check_branch
        %495 = sbr.rel (%p493) target = $region44
      $region43: #{vision_tower_forward.10} parent=11 // pred_region
        _
      $region44: #{vision_tower_forward.10} parent=11 // pred_fallthru
        _
      // Predicated region
      $region45: #{vision_tower_forward.10} parent=11 // pred_check
        %p496 = pneg %p242
      $region46: #{vision_tower_forward.10} parent=11 // pred_check_branch
        %498 = sbr.rel (%p496) target = $region48
      $region47: #{vision_tower_forward.10} parent=11 // pred_region
        _
      $region48: #{vision_tower_forward.10} parent=11 // pred_fallthru
        _
      // Predicated region
      $region49: #{vision_tower_forward.10} parent=11 // pred_check
        %p499 = pneg %p263
      $region50: #{vision_tower_forward.10} parent=11 // pred_check_branch
        %501 = sbr.rel (%p499) target = $region52
      $region51: #{vision_tower_forward.10} parent=11 // pred_region
        _
      $region52: #{vision_tower_forward.10} parent=11 // pred_fallthru
        _
      // Predicated region
      $region53: #{vision_tower_forward.10} parent=11 // pred_check
        %p502 = pneg %p284
      $region54: #{vision_tower_forward.10} parent=11 // pred_check_branch
        %504 = sbr.rel (%p502) target = $region56
      $region55: #{vision_tower_forward.10} parent=11 // pred_region
        _
      $region56: #{vision_tower_forward.10} parent=11 // pred_fallthru
        _
      // Predicated region
      $region57: #{vision_tower_forward.10} parent=11 // pred_check
        %p505 = pneg %p305
      $region58: #{vision_tower_forward.10} parent=11 // pred_check_branch
        %507 = sbr.rel (%p505) target = $region60
      $region59: #{vision_tower_forward.10} parent=11 // pred_region
        _
      $region60: #{vision_tower_forward.10} parent=11 // pred_fallthru
        _
      // Predicated region
      $region61: #{vision_tower_forward.10} parent=11 // pred_check
        %p508 = pneg %p326
      $region62: #{vision_tower_forward.10} parent=11 // pred_check_branch
        %510 = sbr.rel (%p508) target = $region64
      $region63: #{vision_tower_forward.10} parent=11 // pred_region
        _
      $region64: #{vision_tower_forward.10} parent=11 // pred_fallthru
        _
      // Predicated region
      $region65: #{vision_tower_forward.10} parent=11 // pred_check
        %p511 = pneg %p347
      $region66: #{vision_tower_forward.10} parent=11 // pred_check_branch
        %513 = sbr.rel (%p511) target = $region68
      $region67: #{vision_tower_forward.10} parent=11 // pred_region
        _
      $region68: #{vision_tower_forward.10} parent=11 // pred_fallthru
        _
      // Predicated region
      $region69: #{vision_tower_forward.10} parent=11 // pred_check
        %p514 = pneg %p368
      $region70: #{vision_tower_forward.10} parent=11 // pred_check_branch
        %516 = sbr.rel (%p514) target = $region72
      $region71: #{vision_tower_forward.10} parent=11 // pred_region
        _
      $region72: #{vision_tower_forward.10} parent=11 // pred_fallthru
        _
      // Predicated region
      $region73: #{vision_tower_forward.10} parent=11 // pred_check
        %p517 = pneg %p389
      $region74: #{vision_tower_forward.10} parent=11 // pred_check_branch
        %519 = sbr.rel (%p517) target = $region76
      $region75: #{vision_tower_forward.10} parent=11 // pred_region
        _
      $region76: #{vision_tower_forward.10} parent=11 // pred_fallthru
        _
      // Predicated region
      $region77: #{vision_tower_forward.10} parent=11 // pred_check
        %p520 = pneg %p410
      $region78: #{vision_tower_forward.10} parent=11 // pred_check_branch
        %522 = sbr.rel (%p520) target = $region80
      $region79: #{vision_tower_forward.10} parent=11 // pred_region
        _
      $region80: #{vision_tower_forward.10} parent=11 // pred_fallthru
        _
      // Predicated region
      $region81: #{vision_tower_forward.10} parent=11 // pred_check
        %p523 = pneg %p431
      $region82: #{vision_tower_forward.10} parent=11 // pred_check_branch
        %525 = sbr.rel (%p523) target = $region84
      $region83: #{vision_tower_forward.10} parent=11 // pred_region
        _
      $region84: #{vision_tower_forward.10} parent=11 // pred_fallthru
        _
    $region12: #{vision_tower_forward.10} parent=5 // pred_fallthru
      _
    %p526 = scmp.lt.s32.totalorder %s27, 2
    // Predicated region
    $region85: #{vision_tower_forward.10} parent=5 // pred_check
      %p527 = pneg %p526
    $region86: #{vision_tower_forward.10} parent=5 // pred_check_branch
      %529 = sbr.rel (%p527) target = $region88
    $region87: #{vision_tower_forward.10} parent=5 // pred_region
      // Predicated region
      $region89: #{vision_tower_forward.10} parent=87 // pred_check
        %p530 = pneg %p47
      $region90: #{vision_tower_forward.10} parent=87 // pred_check_branch
        %532 = sbr.rel (%p530) target = $region92
      $region91: #{vision_tower_forward.10} parent=87 // pred_region
        %p533 = scmp.lt.s32.totalorder %s27, 1
        %s534 = scalar_select %p533, %s27, 1
        %s535 = smul.addr %s534, 8
        %s536 = smul.addr %s535, 8
        %s537 = scalar_lea.vmem %s0, %s536
      $region92: #{vision_tower_forward.10} parent=87 // pred_fallthru
        _
    $region88: #{vision_tower_forward.10} parent=5 // pred_fallthru
      _
    %p538 = scmp.le.s32.totalorder 1, %s27
    %p539 = scmp.lt.s32.totalorder %s27, 3
    %p540 = pnand %p538, %p539
    %p541 = pneg %p540
    // Predicated region
    $region93: #{vision_tower_forward.10} parent=5 // pred_check
      _
    $region94: #{vision_tower_forward.10} parent=5 // pred_check_branch
      %543 = sbr.rel (%p540) target = $region96
    $region95: #{vision_tower_forward.10} parent=5 // pred_region
      %s544 = ssub.s32 %s27, 1
      %p545 = scmp.lt.s32.totalorder %s32, 1
      %s546 = scalar_select %p545, %s32, 1
      %s547 = smul.addr %s546, 8
      %s548 = smul.addr %s547, 8
      %s549 = scalar_lea.vmem %s0, %s548
      %p550 = pneg %p53
      %p551 = pneg %p50
      %p552 = pneg %p74
      %p553 = pneg %p71
      %p554 = pneg %p95
      %p555 = pneg %p92
      %p556 = pneg %p116
      %p557 = pneg %p113
      %p558 = pneg %p137
      %p559 = pneg %p134
      %p560 = pneg %p158
      %p561 = pneg %p155
      %p562 = pneg %p179
      %p563 = pneg %p176
      %p564 = pneg %p200
      %p565 = pneg %p197
      %p566 = pneg %p221
      %p567 = pneg %p218
      %p568 = pneg %p242
      %p569 = pneg %p239
      %p570 = pneg %p263
      %p571 = pneg %p260
      %p572 = pneg %p284
      %p573 = pneg %p281
      %p574 = pneg %p305
      %p575 = pneg %p302
      %p576 = pneg %p326
      %p577 = pneg %p323
      %p578 = pneg %p347
      %p579 = pneg %p344
      %p580 = pneg %p368
      %p581 = pneg %p365
      %p582 = pneg %p389
      %p583 = pneg %p386
      %p584 = pneg %p410
      %p585 = pneg %p407
      %p586 = pneg %p431
      %p587 = pneg %p428
      %p588 = pneg %p457
      %p589 = pneg %p454
      %p590 = scmp.lt.s32.totalorder %s32, 1
      %s591 = scalar_select %p590, %s32, 1
      %s592 = smul.addr %s591, 8
      %s593 = smul.addr %s592, 8
      %s594 = scalar_lea.vmem %s19, %s593
      %p595 = scmp.lt.s32.totalorder %s32, 1
      %s596 = scalar_select %p595, %s32, 1
      %s597 = smul.addr %s596, 8
      %s598 = smul.addr %s597, 8
      %s599 = scalar_lea.vmem %s0, %s598
      %p600 = scmp.lt.s32.totalorder %s32, 1
      %s601 = scalar_select %p600, %s32, 1
      %s602 = smul.addr %s601, 8
      %s603 = smul.addr %s602, 8
      %s604 = scalar_lea.vmem %s19, %s603
      %v606 = vld [vmem:[%s599] sm:$0xff]
      %v607 = vld [vmem:[%s599 + $0x8] sm:$0xff]
      %v608 = vld [vmem:[%s599 + $0x10] sm:$0xff]
      %v609 = vld [vmem:[%s599 + $0x18] sm:$0xff]
      %v610 = vld [vmem:[%s599 + $0x20] sm:$0xff]
      %v611 = vld [vmem:[%s599 + $0x28] sm:$0xff]
      %v612 = vld [vmem:[%s599 + $0x30] sm:$0xff]
      %v613 = vld [vmem:[%s599 + $0x38] sm:$0xff]
      %vm614 = vcmask 261120
      %v615 = vsel %vm614, %v606, 0.0
      %v616 = vsel %vm614, %v607, 0.0
      %v617 = vadd.f32 %v615, %v616
      %v618 = vsel %vm614, %v608, 0.0
      %v619 = vadd.f32 %v617, %v618
      %v620 = vsel %vm614, %v609, 0.0
      %v621 = vadd.f32 %v619, %v620
      %v622 = vsel %vm614, %v610, 0.0
      %v623 = vadd.f32 %v621, %v622
      %v624 = vsel %vm614, %v611, 0.0
      %v625 = vadd.f32 %v623, %v624
      %v626 = vsel %vm614, %v612, 0.0
      %v627 = vadd.f32 %v625, %v626
      %v628 = vsel %vm614, %v613, 0.0
      %v629 = vadd.f32 %v627, %v628
      %630 = vadd.xlane.f32.xlu0 %v629
      %v631 = vpop.xlane.xlu0 %630
      %v632 = vrot.slane %v631, 4
      %v633 = vadd.f32 %v631, %v632
      %v634 = vrot.slane %v633, 2
      %v635 = vadd.f32 %v633, %v634
      %v636 = vrot.slane %v635, 1
      %v637 = vadd.f32 %v635, %v636
      %s638 = vtos %v637
      %v639 = vrcp.pop 2048.0
      %v640 = vmul.f32 2048.0, %v639
      %v641 = vsub.f32 1.0, %v640
      %v642 = vmul.f32 %v639, %v641
      %v643 = vadd.f32 %v639, %v642
      %vm644 = vweird.f32 %v639
      %v645 = vsel %vm644, %v639, %v643
      %s646 = vtos %v645
      %s647 = smul.f32 %s638, %s646
      %v648 = vstv %s647
      %v649 = vsub.f32 %v606, %v648
      %v650 = vsub.f32 %v607, %v648
      %v651 = vsub.f32 %v608, %v648
      %v652 = vsub.f32 %v609, %v648
      %v653 = vsub.f32 %v610, %v648
      %v654 = vsub.f32 %v611, %v648
      %v655 = vsub.f32 %v612, %v648
      %v656 = vsub.f32 %v613, %v648
      %v657 = vmul.f32 %v649, %v649
      %v658 = vmul.f32 %v650, %v650
      %v659 = vmul.f32 %v651, %v651
      %v660 = vmul.f32 %v652, %v652
      %v661 = vmul.f32 %v653, %v653
      %v662 = vmul.f32 %v654, %v654
      %v663 = vmul.f32 %v655, %v655
      %v664 = vmul.f32 %v656, %v656
      %v665 = vsel %vm614, %v657, 0.0
      %v666 = vsel %vm614, %v658, 0.0
      %v667 = vadd.f32 %v665, %v666
      %v668 = vsel %vm614, %v659, 0.0
      %v669 = vadd.f32 %v667, %v668
      %v670 = vsel %vm614, %v660, 0.0
      %v671 = vadd.f32 %v669, %v670
      %v672 = vsel %vm614, %v661, 0.0
      %v673 = vadd.f32 %v671, %v672
      %v674 = vsel %vm614, %v662, 0.0
      %v675 = vadd.f32 %v673, %v674
      %v676 = vsel %vm614, %v663, 0.0
      %v677 = vadd.f32 %v675, %v676
      %v678 = vsel %vm614, %v664, 0.0
      %v679 = vadd.f32 %v677, %v678
      %680 = vadd.xlane.f32.xlu0 %v679
      %v681 = vpop.xlane.xlu0 %680
      %v682 = vrot.slane %v681, 4
      %v683 = vadd.f32 %v681, %v682
      %v684 = vrot.slane %v683, 2
      %v685 = vadd.f32 %v683, %v684
      %v686 = vrot.slane %v685, 1
      %v687 = vadd.f32 %v685, %v686
      %s688 = vtos %v687
      %v689 = vrcp.pop 2048.0
      %v690 = vmul.f32 2048.0, %v689
      %v691 = vsub.f32 1.0, %v690
      %v692 = vmul.f32 %v689, %v691
      %v693 = vadd.f32 %v689, %v692
      %vm694 = vweird.f32 %v689
      %v695 = vsel %vm694, %v689, %v693
      %s696 = vtos %v695
      %s697 = smul.f32 %s688, %s696
      %s698 = sadd.f32 %s697, 1e-05
      %v699 = vstv %s698
      %v700 = vrsqrt.pop %v699
      %v701 = vmul.f32 %v700, %v699
      %v702 = vmul.f32 %v701, %v700
      %v703 = vmul.f32 0.5, %v702
      %v704 = vsub.f32 1.5, %v703
      %v705 = vmul.f32 %v700, %v704
      %vm706 = vweird.f32 %v699
      %vm707 = vweird.f32 %v700
      %vm708 = vmor %vm706, %vm707
      %v709 = vsel %vm708, %v700, %v705
      %s710 = vtos %v709
      %v711 = vstv %s710
      %v712 = vmul.f32 %v649, %v711
      %v713 = vmul.f32 %v650, %v711
      %v714 = vmul.f32 %v651, %v711
      %v715 = vmul.f32 %v652, %v711
      %v716 = vmul.f32 %v653, %v711
      %v717 = vmul.f32 %v654, %v711
      %v718 = vmul.f32 %v655, %v711
      %v719 = vmul.f32 %v656, %v711
      %v720 = vld [vmem:[%s1] sm:$0x1]
      %v722 = vperm.slane %v720, 0
      %v724 = vmul.f32 %v712, %v722
      %v725 = vmul.f32 %v713, %v722
      %v726 = vmul.f32 %v714, %v722
      %v727 = vmul.f32 %v715, %v722
      %v728 = vmul.f32 %v716, %v722
      %v729 = vmul.f32 %v717, %v722
      %v730 = vmul.f32 %v718, %v722
      %v731 = vmul.f32 %v719, %v722
      %v732 = vld [vmem:[%s2] sm:$0x1]
      %v734 = vperm.slane %v732, 0
      %v736 = vadd.f32 %v724, %v734
      %v737 = vadd.f32 %v725, %v734
      %v738 = vadd.f32 %v726, %v734
      %v739 = vadd.f32 %v727, %v734
      %v740 = vadd.f32 %v728, %v734
      %v741 = vadd.f32 %v729, %v734
      %v742 = vadd.f32 %v730, %v734
      %v743 = vadd.f32 %v731, %v734
      %v744 = vpack.c.bf16 %v737, %v736
      %v745 = vpack.c.bf16 %v739, %v738
      %v746 = vpack.c.bf16 %v741, %v740
      %v747 = vpack.c.bf16 %v743, %v742
      %v748 = vld [vmem:[%s3] sm:$0x1]
      %v750 = vperm.slane %v748, 0
      %v752 = vmul.f32 %v736, %v750
      %v753 = vmul.f32 %v737, %v750
      %v754 = vmul.f32 %v738, %v750
      %v755 = vmul.f32 %v739, %v750
      %v756 = vmul.f32 %v740, %v750
      %v757 = vmul.f32 %v741, %v750
      %v758 = vmul.f32 %v742, %v750
      %v759 = vmul.f32 %v743, %v750
      %v760 = vsel %vm614, %v752, 0.0
      %761 = vadd.xlane.f32.xlu0 %v760
      %v762 = vpop.xlane.xlu0 %761
      %v763 = vsel %vm614, %v753, 0.0
      %764 = vadd.xlane.f32.xlu0 %v763
      %v765 = vpop.xlane.xlu0 %764
      %v766 = vsel %vm614, %v754, 0.0
      %767 = vadd.xlane.f32.xlu0 %v766
      %v768 = vpop.xlane.xlu0 %767
      %v769 = vsel %vm614, %v755, 0.0
      %770 = vadd.xlane.f32.xlu0 %v769
      %v771 = vpop.xlane.xlu0 %770
      %v772 = vsel %vm614, %v756, 0.0
      %773 = vadd.xlane.f32.xlu0 %v772
      %v774 = vpop.xlane.xlu0 %773
      %v775 = vsel %vm614, %v757, 0.0
      %776 = vadd.xlane.f32.xlu0 %v775
      %v777 = vpop.xlane.xlu0 %776
      %v778 = vsel %vm614, %v758, 0.0
      %779 = vadd.xlane.f32.xlu0 %v778
      %v780 = vpop.xlane.xlu0 %779
      %v781 = vsel %vm614, %v759, 0.0
      %782 = vadd.xlane.f32.xlu0 %v781
      %v783 = vpop.xlane.xlu0 %782
      %v784 = vld [vmem:[#allocation2] sm:$0x1]
      %v786 = vperm.slane %v784, 0
      %v788 = vadd.f32 %v762, %v786
      %v789 = vadd.f32 %v765, %v786
      %v790 = vadd.f32 %v768, %v786
      %v791 = vadd.f32 %v771, %v786
      %v792 = vadd.f32 %v774, %v786
      %v793 = vadd.f32 %v777, %v786
      %v794 = vadd.f32 %v780, %v786
      %v795 = vadd.f32 %v783, %v786
      %v796 = vld [vmem:[%s5] sm:$0xf]
      %v797 = vld [vmem:[%s5 + $0x4] sm:$0xf]
      %v798 = vld [vmem:[%s5 + $0x8] sm:$0xf]
      %v799 = vld [vmem:[%s5 + $0xc] sm:$0xf]
      %v800 = vld [vmem:[%s6] sm:$0x1]
      %v802 = vperm.slane %v800, 0
      %v808 = vunpack.c.l.b16 %v796
      %v809 = vunpack.c.l.b16 %v797
      %v810 = vunpack.c.l.b16 %v798
      %v811 = vunpack.c.l.b16 %v799
      %v812 = vpack.c.b16 %v809, %v808
      %v813 = vpack.c.b16 %v811, %v810
      %v817 = vsel %vm614, %v744, 0
      %v820 = vsel %vm614, %v745, 0
      %v823 = vsel %vm614, %v746, 0
      %v826 = vsel %vm614, %v747, 0
      %828 = vmatpush.bf16.msra.mxu0 0
      %829 = vmatpush.bf16.msra.mxu0 0
      %830 = vmatpush.bf16.msra.mxu0 0
      %831 = vmatpush.bf16.msra.mxu0 0
      %832 = vmatpush.bf16.msra.mxu0 0
      %833 = vmatpush.bf16.msra.mxu0 0
      %834 = vmatpush.bf16.msra.mxu0 %v813
      %835 = vmatpush.bf16.msra.mxu0 %v812
      %836 = vmatmul.bf16.gmra.mxu0 %v817
      %v837 = vpop.f32.mrf.mxu0
      %v838 = vadd.f32 %v802, %v837
      %v839 = vpop.f32.mrf.mxu0
      %v840 = vadd.f32 %v802, %v839
      %841 = vmatmul.bf16.gmra.mxu0 %v820
      %v842 = vpop.f32.mrf.mxu0
      %v843 = vadd.f32 %v802, %v842
      %v844 = vpop.f32.mrf.mxu0
      %v845 = vadd.f32 %v802, %v844
      %846 = vmatmul.bf16.gmra.mxu0 %v823
      %v847 = vpop.f32.mrf.mxu0
      %v848 = vadd.f32 %v802, %v847
      %v849 = vpop.f32.mrf.mxu0
      %v850 = vadd.f32 %v802, %v849
      %851 = vmatmul.bf16.gmra.mxu0 %v826
      %v852 = vpop.f32.mrf.mxu0
      %v853 = vadd.f32 %v802, %v852
      %v854 = vpop.f32.mrf.mxu0
      %v855 = vadd.f32 %v802, %v854
      %856 = vdwg.mxu0
      %v857 = vld [vmem:[%s7] sm:$0xf]
      %v858 = vld [vmem:[%s7 + $0x4] sm:$0xf]
      %v859 = vld [vmem:[%s7 + $0x8] sm:$0xf]
      %v860 = vld [vmem:[%s7 + $0xc] sm:$0xf]
      %v861 = vld [vmem:[%s8] sm:$0x1]
      %v863 = vperm.slane %v861, 0
      %v869 = vunpack.c.l.b16 %v857
      %v870 = vunpack.c.l.b16 %v858
      %v871 = vunpack.c.l.b16 %v859
      %v872 = vunpack.c.l.b16 %v860
      %v873 = vpack.c.b16 %v870, %v869
      %v874 = vpack.c.b16 %v872, %v871
      %877 = vmatpush.bf16.msra.mxu0 0
      %878 = vmatpush.bf16.msra.mxu0 0
      %879 = vmatpush.bf16.msra.mxu0 0
      %880 = vmatpush.bf16.msra.mxu0 0
      %881 = vmatpush.bf16.msra.mxu0 0
      %882 = vmatpush.bf16.msra.mxu0 0
      %883 = vmatpush.bf16.msra.mxu0 %v874
      %884 = vmatpush.bf16.msra.mxu0 %v873
      %885 = vmatmul.bf16.gmra.mxu0 %v817
      %v886 = vpop.f32.mrf.mxu0
      %v887 = vadd.f32 %v863, %v886
      %v888 = vpop.f32.mrf.mxu0
      %v889 = vadd.f32 %v863, %v888
      %890 = vmatmul.bf16.gmra.mxu0 %v820
      %v891 = vpop.f32.mrf.mxu0
      %v892 = vadd.f32 %v863, %v891
      %v893 = vpop.f32.mrf.mxu0
      %v894 = vadd.f32 %v863, %v893
      %895 = vmatmul.bf16.gmra.mxu0 %v823
      %v896 = vpop.f32.mrf.mxu0
      %v897 = vadd.f32 %v863, %v896
      %v898 = vpop.f32.mrf.mxu0
      %v899 = vadd.f32 %v863, %v898
      %900 = vmatmul.bf16.gmra.mxu0 %v826
      %v901 = vpop.f32.mrf.mxu0
      %v902 = vadd.f32 %v863, %v901
      %v903 = vpop.f32.mrf.mxu0
      %v904 = vadd.f32 %v863, %v903
      %905 = vdwg.mxu0
      %vm906 = vcmask 7168
      %v907 = vsel %vm906, %v788, -inf
      %v908 = vsel %vm906, %v789, -inf
      %v909 = vmax.f32 %v907, %v908
      %v910 = vrot.slane %v909, 4
      %v911 = vmax.f32 %v909, %v910
      %v912 = vrot.slane %v911, 2
      %v913 = vmax.f32 %v911, %v912
      %v914 = vrot.slane %v913, 1
      %v915 = vmax.f32 %v913, %v914
      %v916 = vsel %vm906, %v790, -inf
      %v917 = vsel %vm906, %v791, -inf
      %v918 = vmax.f32 %v916, %v917
      %v919 = vrot.slane %v918, 4
      %v920 = vmax.f32 %v918, %v919
      %v921 = vrot.slane %v920, 2
      %v922 = vmax.f32 %v920, %v921
      %v923 = vrot.slane %v922, 1
      %v924 = vmax.f32 %v922, %v923
      %v925 = vsel %vm906, %v792, -inf
      %v926 = vsel %vm906, %v793, -inf
      %v927 = vmax.f32 %v925, %v926
      %v928 = vrot.slane %v927, 4
      %v929 = vmax.f32 %v927, %v928
      %v930 = vrot.slane %v929, 2
      %v931 = vmax.f32 %v929, %v930
      %v932 = vrot.slane %v931, 1
      %v933 = vmax.f32 %v931, %v932
      %v934 = vsel %vm906, %v794, -inf
      %v935 = vsel %vm906, %v795, -inf
      %v936 = vmax.f32 %v934, %v935
      %v937 = vrot.slane %v936, 4
      %v938 = vmax.f32 %v936, %v937
      %v939 = vrot.slane %v938, 2
      %v940 = vmax.f32 %v938, %v939
      %v941 = vrot.slane %v940, 1
      %v942 = vmax.f32 %v940, %v941
      %v943 = vsub.f32 %v788, %v915
      %v944 = vsub.f32 %v789, %v915
      %v945 = vsub.f32 %v790, %v924
      %v946 = vsub.f32 %v791, %v924
      %v947 = vsub.f32 %v792, %v933
      %v948 = vsub.f32 %v793, %v933
      %v949 = vsub.f32 %v794, %v942
      %v950 = vsub.f32 %v795, %v942
      %v951 = vmul.f32 %v943, 1.442695
      %v952 = vpow.pop %v951
      %v953 = vmul.f32 %v944, 1.442695
      %v954 = vpow.pop %v953
      %v955 = vmul.f32 %v945, 1.442695
      %v956 = vpow.pop %v955
      %v957 = vmul.f32 %v946, 1.442695
      %v958 = vpow.pop %v957
      %v959 = vmul.f32 %v947, 1.442695
      %v960 = vpow.pop %v959
      %v961 = vmul.f32 %v948, 1.442695
      %v962 = vpow.pop %v961
      %v963 = vmul.f32 %v949, 1.442695
      %v964 = vpow.pop %v963
      %v965 = vmul.f32 %v950, 1.442695
      %v966 = vpow.pop %v965
      %v967 = vsel %vm906, %v952, 0.0
      %v968 = vsel %vm906, %v954, 0.0
      %v969 = vadd.f32 %v967, %v968
      %v970 = vrot.slane %v969, 4
      %v971 = vadd.f32 %v969, %v970
      %v972 = vrot.slane %v971, 2
      %v973 = vadd.f32 %v971, %v972
      %v974 = vrot.slane %v973, 1
      %v975 = vadd.f32 %v973, %v974
      %v976 = vsel %vm906, %v956, 0.0
      %v977 = vsel %vm906, %v958, 0.0
      %v978 = vadd.f32 %v976, %v977
      %v979 = vrot.slane %v978, 4
      %v980 = vadd.f32 %v978, %v979
      %v981 = vrot.slane %v980, 2
      %v982 = vadd.f32 %v980, %v981
      %v983 = vrot.slane %v982, 1
      %v984 = vadd.f32 %v982, %v983
      %v985 = vsel %vm906, %v960, 0.0
      %v986 = vsel %vm906, %v962, 0.0
      %v987 = vadd.f32 %v985, %v986
      %v988 = vrot.slane %v987, 4
      %v989 = vadd.f32 %v987, %v988
      %v990 = vrot.slane %v989, 2
      %v991 = vadd.f32 %v989, %v990
      %v992 = vrot.slane %v991, 1
      %v993 = vadd.f32 %v991, %v992
      %v994 = vsel %vm906, %v964, 0.0
      %v995 = vsel %vm906, %v966, 0.0
      %v996 = vadd.f32 %v994, %v995
      %v997 = vrot.slane %v996, 4
      %v998 = vadd.f32 %v996, %v997
      %v999 = vrot.slane %v998, 2
      %v1000 = vadd.f32 %v998, %v999
      %v1001 = vrot.slane %v1000, 1
      %v1002 = vadd.f32 %v1000, %v1001
      %v1003 = vrcp.pop %v975
      %v1004 = vmul.f32 %v975, %v1003
      %v1005 = vsub.f32 1.0, %v1004
      %v1006 = vmul.f32 %v1003, %v1005
      %v1007 = vadd.f32 %v1003, %v1006
      %vm1008 = vweird.f32 %v975
      %vm1009 = vweird.f32 %v1003
      %vm1010 = vmor %vm1008, %vm1009
      %v1011 = vsel %vm1010, %v1003, %v1007
      %v1012 = vand.u32 2147483647, %v975
      %vm1013 = vcmp.eq.f32.partialorder %v1012, 8.507059e+37
      %v1014 = vand.u32 %v975, 2147483648
      %v1015 = vor.u32 1.1754944e-38, %v1014
      %v1016 = vsel %vm1013, %v1015, %v1011
      %v1017 = vmul.f32 %v952, %v1016
      %v1018 = vmul.f32 %v954, %v1016
      %v1019 = vrcp.pop %v984
      %v1020 = vmul.f32 %v984, %v1019
      %v1021 = vsub.f32 1.0, %v1020
      %v1022 = vmul.f32 %v1019, %v1021
      %v1023 = vadd.f32 %v1019, %v1022
      %vm1024 = vweird.f32 %v984
      %vm1025 = vweird.f32 %v1019
      %vm1026 = vmor %vm1024, %vm1025
      %v1027 = vsel %vm1026, %v1019, %v1023
      %v1028 = vand.u32 2147483647, %v984
      %vm1029 = vcmp.eq.f32.partialorder %v1028, 8.507059e+37
      %v1030 = vand.u32 %v984, 2147483648
      %v1031 = vor.u32 1.1754944e-38, %v1030
      %v1032 = vsel %vm1029, %v1031, %v1027
      %v1033 = vmul.f32 %v956, %v1032
      %v1034 = vmul.f32 %v958, %v1032
      %v1035 = vrcp.pop %v993
      %v1036 = vmul.f32 %v993, %v1035
      %v1037 = vsub.f32 1.0, %v1036
      %v1038 = vmul.f32 %v1035, %v1037
      %v1039 = vadd.f32 %v1035, %v1038
      %vm1040 = vweird.f32 %v993
      %vm1041 = vweird.f32 %v1035
      %vm1042 = vmor %vm1040, %vm1041
      %v1043 = vsel %vm1042, %v1035, %v1039
      %v1044 = vand.u32 2147483647, %v993
      %vm1045 = vcmp.eq.f32.partialorder %v1044, 8.507059e+37
      %v1046 = vand.u32 %v993, 2147483648
      %v1047 = vor.u32 1.1754944e-38, %v1046
      %v1048 = vsel %vm1045, %v1047, %v1043
      %v1049 = vmul.f32 %v960, %v1048
      %v1050 = vmul.f32 %v962, %v1048
      %v1051 = vrcp.pop %v1002
      %v1052 = vmul.f32 %v1002, %v1051
      %v1053 = vsub.f32 1.0, %v1052
      %v1054 = vmul.f32 %v1051, %v1053
      %v1055 = vadd.f32 %v1051, %v1054
      %vm1056 = vweird.f32 %v1002
      %vm1057 = vweird.f32 %v1051
      %vm1058 = vmor %vm1056, %vm1057
      %v1059 = vsel %vm1058, %v1051, %v1055
      %v1060 = vand.u32 2147483647, %v1002
      %vm1061 = vcmp.eq.f32.partialorder %v1060, 8.507059e+37
      %v1062 = vand.u32 %v1002, 2147483648
      %v1063 = vor.u32 1.1754944e-38, %v1062
      %v1064 = vsel %vm1061, %v1063, %v1059
      %v1065 = vmul.f32 %v964, %v1064
      %v1066 = vmul.f32 %v966, %v1064
      %1068 = vset.pattern.permute.xlu0 0
      %1069 = vperm.xlu0 %1068, %v1017
      %v1070 = vpop.permute.xlu0 %1069
      %1073 = vset.pattern.permute.xlu0 0
      %1074 = vperm.xlu0 %1073, %v1018
      %v1075 = vpop.permute.xlu0 %1074
      %1078 = vset.pattern.permute.xlu0 0
      %1079 = vperm.xlu0 %1078, %v1033
      %v1080 = vpop.permute.xlu0 %1079
      %1083 = vset.pattern.permute.xlu0 0
      %1084 = vperm.xlu0 %1083, %v1034
      %v1085 = vpop.permute.xlu0 %1084
      %1088 = vset.pattern.permute.xlu0 0
      %1089 = vperm.xlu0 %1088, %v1049
      %v1090 = vpop.permute.xlu0 %1089
      %1093 = vset.pattern.permute.xlu0 0
      %1094 = vperm.xlu0 %1093, %v1050
      %v1095 = vpop.permute.xlu0 %1094
      %1098 = vset.pattern.permute.xlu0 0
      %1099 = vperm.xlu0 %1098, %v1065
      %v1100 = vpop.permute.xlu0 %1099
      %1103 = vset.pattern.permute.xlu0 0
      %1104 = vperm.xlu0 %1103, %v1066
      %v1105 = vpop.permute.xlu0 %1104
      %v1107 = vmul.f32 %v838, %v1070
      %v1108 = vmul.f32 %v840, %v1075
      %v1109 = vmul.f32 %v843, %v1080
      %v1110 = vmul.f32 %v845, %v1085
      %v1111 = vmul.f32 %v848, %v1090
      %v1112 = vmul.f32 %v850, %v1095
      %v1113 = vmul.f32 %v853, %v1100
      %v1114 = vmul.f32 %v855, %v1105
      %v1115 = vsel %vm614, %v1107, 0.0
      %v1116 = vsel %vm614, %v1108, 0.0
      %v1117 = vadd.f32 %v1115, %v1116
      %v1118 = vrot.slane %v1117, 4
      %v1119 = vadd.f32 %v1117, %v1118
      %v1120 = vrot.slane %v1119, 2
      %v1121 = vadd.f32 %v1119, %v1120
      %v1122 = vrot.slane %v1121, 1
      %v1123 = vadd.f32 %v1121, %v1122
      %v1124 = vsel %vm614, %v1109, 0.0
      %v1125 = vsel %vm614, %v1110, 0.0
      %v1126 = vadd.f32 %v1124, %v1125
      %v1127 = vrot.slane %v1126, 4
      %v1128 = vadd.f32 %v1126, %v1127
      %v1129 = vrot.slane %v1128, 2
      %v1130 = vadd.f32 %v1128, %v1129
      %v1131 = vrot.slane %v1130, 1
      %v1132 = vadd.f32 %v1130, %v1131
      %v1133 = vsel %vm614, %v1111, 0.0
      %v1134 = vsel %vm614, %v1112, 0.0
      %v1135 = vadd.f32 %v1133, %v1134
      %v1136 = vrot.slane %v1135, 4
      %v1137 = vadd.f32 %v1135, %v1136
      %v1138 = vrot.slane %v1137, 2
      %v1139 = vadd.f32 %v1137, %v1138
      %v1140 = vrot.slane %v1139, 1
      %v1141 = vadd.f32 %v1139, %v1140
      %v1142 = vsel %vm614, %v1113, 0.0
      %v1143 = vsel %vm614, %v1114, 0.0
      %v1144 = vadd.f32 %v1142, %v1143
      %v1145 = vrot.slane %v1144, 4
      %v1146 = vadd.f32 %v1144, %v1145
      %v1147 = vrot.slane %v1146, 2
      %v1148 = vadd.f32 %v1146, %v1147
      %v1149 = vrot.slane %v1148, 1
      %v1150 = vadd.f32 %v1148, %v1149
      %v1151 = vmax.f32 %v887, 0.0
      %v1152 = vmax.f32 %v889, 0.0
      %v1153 = vmax.f32 %v892, 0.0
      %v1154 = vmax.f32 %v894, 0.0
      %v1155 = vmax.f32 %v897, 0.0
      %v1156 = vmax.f32 %v899, 0.0
      %v1157 = vmax.f32 %v902, 0.0
      %v1158 = vmax.f32 %v904, 0.0
      %v1159 = vmul.f32 %v1151, %v1123
      %v1160 = vmul.f32 %v1152, %v1123
      %v1161 = vmul.f32 %v1153, %v1132
      %v1162 = vmul.f32 %v1154, %v1132
      %v1163 = vmul.f32 %v1155, %v1141
      %v1164 = vmul.f32 %v1156, %v1141
      %v1165 = vmul.f32 %v1157, %v1150
      %v1166 = vmul.f32 %v1158, %v1150
      %v1167 = vpack.c.bf16 %v1160, %v1159
      %v1168 = vpack.c.bf16 %v1162, %v1161
      %v1169 = vpack.c.bf16 %v1164, %v1163
      %v1170 = vpack.c.bf16 %v1166, %v1165
      %v1171 = vld [vmem:[%s9] sm:$0xf]
      %v1172 = vld [vmem:[%s9 + $0x4] sm:$0xf]
      %v1173 = vld [vmem:[%s9 + $0x8] sm:$0xf]
      %v1174 = vld [vmem:[%s9 + $0xc] sm:$0xf]
      %v1175 = vld [vmem:[%s10] sm:$0x1]
      %v1177 = vperm.slane %v1175, 0
      %v1183 = vunpack.c.l.b16 %v1171
      %v1184 = vunpack.c.l.b16 %v1172
      %v1185 = vunpack.c.l.b16 %v1173
      %v1186 = vunpack.c.l.b16 %v1174
      %v1187 = vpack.c.b16 %v1184, %v1183
      %v1188 = vpack.c.b16 %v1186, %v1185
      %v1192 = vsel %vm614, %v1167, 0
      %v1195 = vsel %vm614, %v1168, 0
      %v1198 = vsel %vm614, %v1169, 0
      %v1201 = vsel %vm614, %v1170, 0
      %1203 = vmatpush.bf16.msra.mxu0 0
      %1204 = vmatpush.bf16.msra.mxu0 0
      %1205 = vmatpush.bf16.msra.mxu0 0
      %1206 = vmatpush.bf16.msra.mxu0 0
      %1207 = vmatpush.bf16.msra.mxu0 0
      %1208 = vmatpush.bf16.msra.mxu0 0
      %1209 = vmatpush.bf16.msra.mxu0 %v1188
      %1210 = vmatpush.bf16.msra.mxu0 %v1187
      %1211 = vmatmul.bf16.gmra.mxu0 %v1192
      %v1212 = vpop.f32.mrf.mxu0
      %v1213 = vadd.f32 %v1177, %v1212
      %v1214 = vpop.f32.mrf.mxu0
      %v1215 = vadd.f32 %v1177, %v1214
      %1216 = vmatmul.bf16.gmra.mxu0 %v1195
      %v1217 = vpop.f32.mrf.mxu0
      %v1218 = vadd.f32 %v1177, %v1217
      %v1219 = vpop.f32.mrf.mxu0
      %v1220 = vadd.f32 %v1177, %v1219
      %1221 = vmatmul.bf16.gmra.mxu0 %v1198
      %v1222 = vpop.f32.mrf.mxu0
      %v1223 = vadd.f32 %v1177, %v1222
      %v1224 = vpop.f32.mrf.mxu0
      %v1225 = vadd.f32 %v1177, %v1224
      %1226 = vmatmul.bf16.gmra.mxu0 %v1201
      %v1227 = vpop.f32.mrf.mxu0
      %v1228 = vadd.f32 %v1177, %v1227
      %v1229 = vpop.f32.mrf.mxu0
      %v1230 = vadd.f32 %v1177, %v1229
      %1231 = vdwg.mxu0
      %v1232 = vadd.f32 %v606, %v1213
      %v1233 = vadd.f32 %v607, %v1215
      %v1234 = vadd.f32 %v608, %v1218
      %v1235 = vadd.f32 %v609, %v1220
      %v1236 = vadd.f32 %v610, %v1223
      %v1237 = vadd.f32 %v611, %v1225
      %v1238 = vadd.f32 %v612, %v1228
      %v1239 = vadd.f32 %v613, %v1230
      %v1240 = vsel %vm614, %v1232, 0.0
      %v1241 = vsel %vm614, %v1233, 0.0
      %v1242 = vadd.f32 %v1240, %v1241
      %v1243 = vsel %vm614, %v1234, 0.0
      %v1244 = vadd.f32 %v1242, %v1243
      %v1245 = vsel %vm614, %v1235, 0.0
      %v1246 = vadd.f32 %v1244, %v1245
      %v1247 = vsel %vm614, %v1236, 0.0
      %v1248 = vadd.f32 %v1246, %v1247
      %v1249 = vsel %vm614, %v1237, 0.0
      %v1250 = vadd.f32 %v1248, %v1249
      %v1251 = vsel %vm614, %v1238, 0.0
      %v1252 = vadd.f32 %v1250, %v1251
      %v1253 = vsel %vm614, %v1239, 0.0
      %v1254 = vadd.f32 %v1252, %v1253
      %1255 = vadd.xlane.f32.xlu0 %v1254
      %v1256 = vpop.xlane.xlu0 %1255
      %v1257 = vrot.slane %v1256, 4
      %v1258 = vadd.f32 %v1256, %v1257
      %v1259 = vrot.slane %v1258, 2
      %v1260 = vadd.f32 %v1258, %v1259
      %v1261 = vrot.slane %v1260, 1
      %v1262 = vadd.f32 %v1260, %v1261
      %s1263 = vtos %v1262
      %v1264 = vrcp.pop 2048.0
      %v1265 = vmul.f32 2048.0, %v1264
      %v1266 = vsub.f32 1.0, %v1265
      %v1267 = vmul.f32 %v1264, %v1266
      %v1268 = vadd.f32 %v1264, %v1267
      %vm1269 = vweird.f32 %v1264
      %v1270 = vsel %vm1269, %v1264, %v1268
      %s1271 = vtos %v1270
      %s1272 = smul.f32 %s1263, %s1271
      %v1273 = vstv %s1272
      %v1274 = vsub.f32 %v1232, %v1273
      %v1275 = vsub.f32 %v1233, %v1273
      %v1276 = vsub.f32 %v1234, %v1273
      %v1277 = vsub.f32 %v1235, %v1273
      %v1278 = vsub.f32 %v1236, %v1273
      %v1279 = vsub.f32 %v1237, %v1273
      %v1280 = vsub.f32 %v1238, %v1273
      %v1281 = vsub.f32 %v1239, %v1273
      %v1282 = vmul.f32 %v1274, %v1274
      %v1283 = vmul.f32 %v1275, %v1275
      %v1284 = vmul.f32 %v1276, %v1276
      %v1285 = vmul.f32 %v1277, %v1277
      %v1286 = vmul.f32 %v1278, %v1278
      %v1287 = vmul.f32 %v1279, %v1279
      %v1288 = vmul.f32 %v1280, %v1280
      %v1289 = vmul.f32 %v1281, %v1281
      %v1290 = vsel %vm614, %v1282, 0.0
      %v1291 = vsel %vm614, %v1283, 0.0
      %v1292 = vadd.f32 %v1290, %v1291
      %v1293 = vsel %vm614, %v1284, 0.0
      %v1294 = vadd.f32 %v1292, %v1293
      %v1295 = vsel %vm614, %v1285, 0.0
      %v1296 = vadd.f32 %v1294, %v1295
      %v1297 = vsel %vm614, %v1286, 0.0
      %v1298 = vadd.f32 %v1296, %v1297
      %v1299 = vsel %vm614, %v1287, 0.0
      %v1300 = vadd.f32 %v1298, %v1299
      %v1301 = vsel %vm614, %v1288, 0.0
      %v1302 = vadd.f32 %v1300, %v1301
      %v1303 = vsel %vm614, %v1289, 0.0
      %v1304 = vadd.f32 %v1302, %v1303
      %1305 = vadd.xlane.f32.xlu0 %v1304
      %v1306 = vpop.xlane.xlu0 %1305
      %v1307 = vrot.slane %v1306, 4
      %v1308 = vadd.f32 %v1306, %v1307
      %v1309 = vrot.slane %v1308, 2
      %v1310 = vadd.f32 %v1308, %v1309
      %v1311 = vrot.slane %v1310, 1
      %v1312 = vadd.f32 %v1310, %v1311
      %s1313 = vtos %v1312
      %v1314 = vrcp.pop 2048.0
      %v1315 = vmul.f32 2048.0, %v1314
      %v1316 = vsub.f32 1.0, %v1315
      %v1317 = vmul.f32 %v1314, %v1316
      %v1318 = vadd.f32 %v1314, %v1317
      %vm1319 = vweird.f32 %v1314
      %v1320 = vsel %vm1319, %v1314, %v1318
      %s1321 = vtos %v1320
      %s1322 = smul.f32 %s1313, %s1321
      %s1323 = sadd.f32 %s1322, 1e-05
      %v1324 = vstv %s1323
      %v1325 = vrsqrt.pop %v1324
      %v1326 = vmul.f32 %v1325, %v1324
      %v1327 = vmul.f32 %v1326, %v1325
      %v1328 = vmul.f32 0.5, %v1327
      %v1329 = vsub.f32 1.5, %v1328
      %v1330 = vmul.f32 %v1325, %v1329
      %vm1331 = vweird.f32 %v1324
      %vm1332 = vweird.f32 %v1325
      %vm1333 = vmor %vm1331, %vm1332
      %v1334 = vsel %vm1333, %v1325, %v1330
      %s1335 = vtos %v1334
      %v1336 = vstv %s1335
      %v1337 = vmul.f32 %v1274, %v1336
      %v1338 = vmul.f32 %v1275, %v1336
      %v1339 = vmul.f32 %v1276, %v1336
      %v1340 = vmul.f32 %v1277, %v1336
      %v1341 = vmul.f32 %v1278, %v1336
      %v1342 = vmul.f32 %v1279, %v1336
      %v1343 = vmul.f32 %v1280, %v1336
      %v1344 = vmul.f32 %v1281, %v1336
      %v1345 = vld [vmem:[%s11] sm:$0x1]
      %v1347 = vperm.slane %v1345, 0
      %v1349 = vmul.f32 %v1337, %v1347
      %v1350 = vmul.f32 %v1338, %v1347
      %v1351 = vmul.f32 %v1339, %v1347
      %v1352 = vmul.f32 %v1340, %v1347
      %v1353 = vmul.f32 %v1341, %v1347
      %v1354 = vmul.f32 %v1342, %v1347
      %v1355 = vmul.f32 %v1343, %v1347
      %v1356 = vmul.f32 %v1344, %v1347
      %v1357 = vld [vmem:[%s12] sm:$0x1]
      %v1359 = vperm.slane %v1357, 0
      %v1361 = vadd.f32 %v1349, %v1359
      %v1362 = vadd.f32 %v1350, %v1359
      %v1363 = vadd.f32 %v1351, %v1359
      %v1364 = vadd.f32 %v1352, %v1359
      %v1365 = vadd.f32 %v1353, %v1359
      %v1366 = vadd.f32 %v1354, %v1359
      %v1367 = vadd.f32 %v1355, %v1359
      %v1368 = vadd.f32 %v1356, %v1359
      %v1369 = vpack.c.bf16 %v1362, %v1361
      %v1370 = vpack.c.bf16 %v1364, %v1363
      %v1371 = vpack.c.bf16 %v1366, %v1365
      %v1372 = vpack.c.bf16 %v1368, %v1367
      %v1373 = vld [vmem:[%s13] sm:$0xf]
      %v1374 = vld [vmem:[%s13 + $0x4] sm:$0xf]
      %v1375 = vld [vmem:[%s13 + $0x8] sm:$0xf]
      %v1376 = vld [vmem:[%s13 + $0xc] sm:$0xf]
      %v1377 = vld [vmem:[%s14] sm:$0x1]
      %v1379 = vperm.slane %v1377, 0
      %v1385 = vunpack.c.l.b16 %v1373
      %v1386 = vunpack.c.l.b16 %v1374
      %v1387 = vunpack.c.l.b16 %v1375
      %v1388 = vunpack.c.l.b16 %v1376
      %v1389 = vpack.c.b16 %v1386, %v1385
      %v1390 = vpack.c.b16 %v1388, %v1387
      %v1394 = vsel %vm614, %v1369, 0
      %v1397 = vsel %vm614, %v1370, 0
      %v1400 = vsel %vm614, %v1371, 0
      %v1403 = vsel %vm614, %v1372, 0
      %1405 = vmatpush.bf16.msra.mxu0 0
      %1406 = vmatpush.bf16.msra.mxu0 0
      %1407 = vmatpush.bf16.msra.mxu0 0
      %1408 = vmatpush.bf16.msra.mxu0 0
      %1409 = vmatpush.bf16.msra.mxu0 0
      %1410 = vmatpush.bf16.msra.mxu0 0
      %1411 = vmatpush.bf16.msra.mxu0 %v1390
      %1412 = vmatpush.bf16.msra.mxu0 %v1389
      %1413 = vmatmul.bf16.gmra.mxu0 %v1394
      %v1414 = vpop.f32.mrf.mxu0
      %v1415 = vadd.f32 %v1379, %v1414
      %v1416 = vpop.f32.mrf.mxu0
      %v1417 = vadd.f32 %v1379, %v1416
      %1418 = vmatmul.bf16.gmra.mxu0 %v1397
      %v1419 = vpop.f32.mrf.mxu0
      %v1420 = vadd.f32 %v1379, %v1419
      %v1421 = vpop.f32.mrf.mxu0
      %v1422 = vadd.f32 %v1379, %v1421
      %1423 = vmatmul.bf16.gmra.mxu0 %v1400
      %v1424 = vpop.f32.mrf.mxu0
      %v1425 = vadd.f32 %v1379, %v1424
      %v1426 = vpop.f32.mrf.mxu0
      %v1427 = vadd.f32 %v1379, %v1426
      %1428 = vmatmul.bf16.gmra.mxu0 %v1403
      %v1429 = vpop.f32.mrf.mxu0
      %v1430 = vadd.f32 %v1379, %v1429
      %v1431 = vpop.f32.mrf.mxu0
      %v1432 = vadd.f32 %v1379, %v1431
      %1433 = vdwg.mxu0
      %v1434 = vxor.u32 %v1415, 2147483648
      %v1435 = vxor.u32 %v1417, 2147483648
      %v1436 = vxor.u32 %v1420, 2147483648
      %v1437 = vxor.u32 %v1422, 2147483648
      %v1438 = vxor.u32 %v1425, 2147483648
      %v1439 = vxor.u32 %v1427, 2147483648
      %v1440 = vxor.u32 %v1430, 2147483648
      %v1441 = vxor.u32 %v1432, 2147483648
      %v1442 = vmul.f32 %v1434, 1.442695
      %v1443 = vpow.pop %v1442
      %v1444 = vmul.f32 %v1435, 1.442695
      %v1445 = vpow.pop %v1444
      %v1446 = vmul.f32 %v1436, 1.442695
      %v1447 = vpow.pop %v1446
      %v1448 = vmul.f32 %v1437, 1.442695
      %v1449 = vpow.pop %v1448
      %v1450 = vmul.f32 %v1438, 1.442695
      %v1451 = vpow.pop %v1450
      %v1452 = vmul.f32 %v1439, 1.442695
      %v1453 = vpow.pop %v1452
      %v1454 = vmul.f32 %v1440, 1.442695
      %v1455 = vpow.pop %v1454
      %v1456 = vmul.f32 %v1441, 1.442695
      %v1457 = vpow.pop %v1456
      %v1458 = vadd.f32 %v1443, 1.0
      %v1459 = vadd.f32 %v1445, 1.0
      %v1460 = vadd.f32 %v1447, 1.0
      %v1461 = vadd.f32 %v1449, 1.0
      %v1462 = vadd.f32 %v1451, 1.0
      %v1463 = vadd.f32 %v1453, 1.0
      %v1464 = vadd.f32 %v1455, 1.0
      %v1465 = vadd.f32 %v1457, 1.0
      %v1466 = vrcp.pop %v1458
      %v1467 = vmul.f32 %v1458, %v1466
      %v1468 = vsub.f32 1.0, %v1467
      %v1469 = vmul.f32 %v1466, %v1468
      %v1470 = vadd.f32 %v1466, %v1469
      %vm1471 = vweird.f32 %v1458
      %vm1472 = vweird.f32 %v1466
      %vm1473 = vmor %vm1471, %vm1472
      %v1474 = vsel %vm1473, %v1466, %v1470
      %v1475 = vand.u32 2147483647, %v1458
      %vm1476 = vcmp.eq.f32.partialorder %v1475, 8.507059e+37
      %v1477 = vand.u32 %v1458, 2147483648
      %v1478 = vor.u32 1.1754944e-38, %v1477
      %v1479 = vsel %vm1476, %v1478, %v1474
      %v1480 = vmul.f32 1.0, %v1479
      %v1481 = vrcp.pop %v1459
      %v1482 = vmul.f32 %v1459, %v1481
      %v1483 = vsub.f32 1.0, %v1482
      %v1484 = vmul.f32 %v1481, %v1483
      %v1485 = vadd.f32 %v1481, %v1484
      %vm1486 = vweird.f32 %v1459
      %vm1487 = vweird.f32 %v1481
      %vm1488 = vmor %vm1486, %vm1487
      %v1489 = vsel %vm1488, %v1481, %v1485
      %v1490 = vand.u32 2147483647, %v1459
      %vm1491 = vcmp.eq.f32.partialorder %v1490, 8.507059e+37
      %v1492 = vand.u32 %v1459, 2147483648
      %v1493 = vor.u32 1.1754944e-38, %v1492
      %v1494 = vsel %vm1491, %v1493, %v1489
      %v1495 = vmul.f32 1.0, %v1494
      %v1496 = vrcp.pop %v1460
      %v1497 = vmul.f32 %v1460, %v1496
      %v1498 = vsub.f32 1.0, %v1497
      %v1499 = vmul.f32 %v1496, %v1498
      %v1500 = vadd.f32 %v1496, %v1499
      %vm1501 = vweird.f32 %v1460
      %vm1502 = vweird.f32 %v1496
      %vm1503 = vmor %vm1501, %vm1502
      %v1504 = vsel %vm1503, %v1496, %v1500
      %v1505 = vand.u32 2147483647, %v1460
      %vm1506 = vcmp.eq.f32.partialorder %v1505, 8.507059e+37
      %v1507 = vand.u32 %v1460, 2147483648
      %v1508 = vor.u32 1.1754944e-38, %v1507
      %v1509 = vsel %vm1506, %v1508, %v1504
      %v1510 = vmul.f32 1.0, %v1509
      %v1511 = vrcp.pop %v1461
      %v1512 = vmul.f32 %v1461, %v1511
      %v1513 = vsub.f32 1.0, %v1512
      %v1514 = vmul.f32 %v1511, %v1513
      %v1515 = vadd.f32 %v1511, %v1514
      %vm1516 = vweird.f32 %v1461
      %vm1517 = vweird.f32 %v1511
      %vm1518 = vmor %vm1516, %vm1517
      %v1519 = vsel %vm1518, %v1511, %v1515
      %v1520 = vand.u32 2147483647, %v1461
      %vm1521 = vcmp.eq.f32.partialorder %v1520, 8.507059e+37
      %v1522 = vand.u32 %v1461, 2147483648
      %v1523 = vor.u32 1.1754944e-38, %v1522
      %v1524 = vsel %vm1521, %v1523, %v1519
      %v1525 = vmul.f32 1.0, %v1524
      %v1526 = vrcp.pop %v1462
      %v1527 = vmul.f32 %v1462, %v1526
      %v1528 = vsub.f32 1.0, %v1527
      %v1529 = vmul.f32 %v1526, %v1528
      %v1530 = vadd.f32 %v1526, %v1529
      %vm1531 = vweird.f32 %v1462
      %vm1532 = vweird.f32 %v1526
      %vm1533 = vmor %vm1531, %vm1532
      %v1534 = vsel %vm1533, %v1526, %v1530
      %v1535 = vand.u32 2147483647, %v1462
      %vm1536 = vcmp.eq.f32.partialorder %v1535, 8.507059e+37
      %v1537 = vand.u32 %v1462, 2147483648
      %v1538 = vor.u32 1.1754944e-38, %v1537
      %v1539 = vsel %vm1536, %v1538, %v1534
      %v1540 = vmul.f32 1.0, %v1539
      %v1541 = vrcp.pop %v1463
      %v1542 = vmul.f32 %v1463, %v1541
      %v1543 = vsub.f32 1.0, %v1542
      %v1544 = vmul.f32 %v1541, %v1543
      %v1545 = vadd.f32 %v1541, %v1544
      %vm1546 = vweird.f32 %v1463
      %vm1547 = vweird.f32 %v1541
      %vm1548 = vmor %vm1546, %vm1547
      %v1549 = vsel %vm1548, %v1541, %v1545
      %v1550 = vand.u32 2147483647, %v1463
      %vm1551 = vcmp.eq.f32.partialorder %v1550, 8.507059e+37
      %v1552 = vand.u32 %v1463, 2147483648
      %v1553 = vor.u32 1.1754944e-38, %v1552
      %v1554 = vsel %vm1551, %v1553, %v1549
      %v1555 = vmul.f32 1.0, %v1554
      %v1556 = vrcp.pop %v1464
      %v1557 = vmul.f32 %v1464, %v1556
      %v1558 = vsub.f32 1.0, %v1557
      %v1559 = vmul.f32 %v1556, %v1558
      %v1560 = vadd.f32 %v1556, %v1559
      %vm1561 = vweird.f32 %v1464
      %vm1562 = vweird.f32 %v1556
      %vm1563 = vmor %vm1561, %vm1562
      %v1564 = vsel %vm1563, %v1556, %v1560
      %v1565 = vand.u32 2147483647, %v1464
      %vm1566 = vcmp.eq.f32.partialorder %v1565, 8.507059e+37
      %v1567 = vand.u32 %v1464, 2147483648
      %v1568 = vor.u32 1.1754944e-38, %v1567
      %v1569 = vsel %vm1566, %v1568, %v1564
      %v1570 = vmul.f32 1.0, %v1569
      %v1571 = vrcp.pop %v1465
      %v1572 = vmul.f32 %v1465, %v1571
      %v1573 = vsub.f32 1.0, %v1572
      %v1574 = vmul.f32 %v1571, %v1573
      %v1575 = vadd.f32 %v1571, %v1574
      %vm1576 = vweird.f32 %v1465
      %vm1577 = vweird.f32 %v1571
      %vm1578 = vmor %vm1576, %vm1577
      %v1579 = vsel %vm1578, %v1571, %v1575
      %v1580 = vand.u32 2147483647, %v1465
      %vm1581 = vcmp.eq.f32.partialorder %v1580, 8.507059e+37
      %v1582 = vand.u32 %v1465, 2147483648
      %v1583 = vor.u32 1.1754944e-38, %v1582
      %v1584 = vsel %vm1581, %v1583, %v1579
      %v1585 = vmul.f32 1.0, %v1584
      %v1586 = vmul.f32 %v1415, %v1480
      %v1587 = vmul.f32 %v1417, %v1495
      %v1588 = vmul.f32 %v1420, %v1510
      %v1589 = vmul.f32 %v1422, %v1525
      %v1590 = vmul.f32 %v1425, %v1540
      %v1591 = vmul.f32 %v1427, %v1555
      %v1592 = vmul.f32 %v1430, %v1570
      %v1593 = vmul.f32 %v1432, %v1585
      %v1594 = vpack.c.bf16 %v1587, %v1586
      %v1595 = vpack.c.bf16 %v1589, %v1588
      %v1596 = vpack.c.bf16 %v1591, %v1590
      %v1597 = vpack.c.bf16 %v1593, %v1592
      %v1598 = vld [vmem:[%s15] sm:$0xf]
      %v1599 = vld [vmem:[%s15 + $0x4] sm:$0xf]
      %v1600 = vld [vmem:[%s15 + $0x8] sm:$0xf]
      %v1601 = vld [vmem:[%s15 + $0xc] sm:$0xf]
      %v1602 = vld [vmem:[%s15 + $0x10] sm:$0xf]
      %v1603 = vld [vmem:[%s15 + $0x14] sm:$0xf]
      %v1604 = vld [vmem:[%s15 + $0x18] sm:$0xf]
      %v1605 = vld [vmem:[%s15 + $0x1c] sm:$0xf]
      %v1606 = vld [vmem:[%s16] sm:$0x1]
      %v1608 = vperm.slane %v1606, 0
      %v1618 = vunpack.c.l.b16 %v1598
      %v1619 = vunpack.c.l.b16 %v1599
      %v1620 = vunpack.c.l.b16 %v1600
      %v1621 = vunpack.c.l.b16 %v1601
      %v1622 = vunpack.c.l.b16 %v1602
      %v1623 = vunpack.c.l.b16 %v1603
      %v1624 = vunpack.c.l.b16 %v1604
      %v1625 = vunpack.c.l.b16 %v1605
      %v1626 = vpack.c.b16 %v1619, %v1618
      %v1627 = vpack.c.b16 %v1621, %v1620
      %v1628 = vpack.c.b16 %v1623, %v1622
      %v1629 = vpack.c.b16 %v1625, %v1624
      %vm1634 = vcmask 523264
      %v1636 = vsel %vm1634, %v1594, 0
      %v1639 = vsel %vm1634, %v1595, 0
      %v1642 = vsel %vm1634, %v1596, 0
      %v1645 = vsel %vm1634, %v1597, 0
      %1647 = vmatpush.bf16.msra.mxu0 0
      %1648 = vmatpush.bf16.msra.mxu0 0
      %1649 = vmatpush.bf16.msra.mxu0 0
      %1650 = vmatpush.bf16.msra.mxu0 0
      %1651 = vmatpush.bf16.msra.mxu0 %v1629
      %1652 = vmatpush.bf16.msra.mxu0 %v1628
      %1653 = vmatpush.bf16.msra.mxu0 %v1627
      %1654 = vmatpush.bf16.msra.mxu0 %v1626
      %1655 = vmatmul.bf16.gmra.mxu0 %v1636
      %v1656 = vpop.f32.mrf.mxu0
      %v1657 = vadd.f32 %v1608, %v1656
      %v1658 = vpop.f32.mrf.mxu0
      %v1659 = vadd.f32 %v1608, %v1658
      %1660 = vmatmul.bf16.gmra.mxu0 %v1639
      %v1661 = vpop.f32.mrf.mxu0
      %v1662 = vadd.f32 %v1608, %v1661
      %v1663 = vpop.f32.mrf.mxu0
      %v1664 = vadd.f32 %v1608, %v1663
      %1665 = vmatmul.bf16.gmra.mxu0 %v1642
      %v1666 = vpop.f32.mrf.mxu0
      %v1667 = vadd.f32 %v1608, %v1666
      %v1668 = vpop.f32.mrf.mxu0
      %v1669 = vadd.f32 %v1608, %v1668
      %1670 = vmatmul.bf16.gmra.mxu0 %v1645
      %v1671 = vpop.f32.mrf.mxu0
      %v1672 = vadd.f32 %v1608, %v1671
      %v1673 = vpop.f32.mrf.mxu0
      %v1674 = vadd.f32 %v1608, %v1673
      %1675 = vdwg.mxu0
      %v1676 = vadd.f32 %v1232, %v1657
      %v1677 = vadd.f32 %v1233, %v1659
      %v1678 = vadd.f32 %v1234, %v1662
      %v1679 = vadd.f32 %v1235, %v1664
      %v1680 = vadd.f32 %v1236, %v1667
      %v1681 = vadd.f32 %v1237, %v1669
      %v1682 = vadd.f32 %v1238, %v1672
      %v1683 = vadd.f32 %v1239, %v1674
      %v1684 = vsel %vm614, %v1676, 0.0
      %v1685 = vsel %vm614, %v1677, 0.0
      %v1686 = vadd.f32 %v1684, %v1685
      %v1687 = vsel %vm614, %v1678, 0.0
      %v1688 = vadd.f32 %v1686, %v1687
      %v1689 = vsel %vm614, %v1679, 0.0
      %v1690 = vadd.f32 %v1688, %v1689
      %v1691 = vsel %vm614, %v1680, 0.0
      %v1692 = vadd.f32 %v1690, %v1691
      %v1693 = vsel %vm614, %v1681, 0.0
      %v1694 = vadd.f32 %v1692, %v1693
      %v1695 = vsel %vm614, %v1682, 0.0
      %v1696 = vadd.f32 %v1694, %v1695
      %v1697 = vsel %vm614, %v1683, 0.0
      %v1698 = vadd.f32 %v1696, %v1697
      %1699 = vadd.xlane.f32.xlu0 %v1698
      %v1700 = vpop.xlane.xlu0 %1699
      %v1701 = vrot.slane %v1700, 4
      %v1702 = vadd.f32 %v1700, %v1701
      %v1703 = vrot.slane %v1702, 2
      %v1704 = vadd.f32 %v1702, %v1703
      %v1705 = vrot.slane %v1704, 1
      %v1706 = vadd.f32 %v1704, %v1705
      %s1707 = vtos %v1706
      %v1708 = vrcp.pop 2048.0
      %v1709 = vmul.f32 2048.0, %v1708
      %v1710 = vsub.f32 1.0, %v1709
      %v1711 = vmul.f32 %v1708, %v1710
      %v1712 = vadd.f32 %v1708, %v1711
      %vm1713 = vweird.f32 %v1708
      %v1714 = vsel %vm1713, %v1708, %v1712
      %s1715 = vtos %v1714
      %s1716 = smul.f32 %s1707, %s1715
      %v1717 = vstv %s1716
      %v1718 = vsub.f32 %v1676, %v1717
      %v1719 = vsub.f32 %v1677, %v1717
      %v1720 = vsub.f32 %v1678, %v1717
      %v1721 = vsub.f32 %v1679, %v1717
      %v1722 = vsub.f32 %v1680, %v1717
      %v1723 = vsub.f32 %v1681, %v1717
      %v1724 = vsub.f32 %v1682, %v1717
      %v1725 = vsub.f32 %v1683, %v1717
      %v1726 = vmul.f32 %v1718, %v1718
      %v1727 = vmul.f32 %v1719, %v1719
      %v1728 = vmul.f32 %v1720, %v1720
      %v1729 = vmul.f32 %v1721, %v1721
      %v1730 = vmul.f32 %v1722, %v1722
      %v1731 = vmul.f32 %v1723, %v1723
      %v1732 = vmul.f32 %v1724, %v1724
      %v1733 = vmul.f32 %v1725, %v1725
      %v1734 = vsel %vm614, %v1726, 0.0
      %v1735 = vsel %vm614, %v1727, 0.0
      %v1736 = vadd.f32 %v1734, %v1735
      %v1737 = vsel %vm614, %v1728, 0.0
      %v1738 = vadd.f32 %v1736, %v1737
      %v1739 = vsel %vm614, %v1729, 0.0
      %v1740 = vadd.f32 %v1738, %v1739
      %v1741 = vsel %vm614, %v1730, 0.0
      %v1742 = vadd.f32 %v1740, %v1741
      %v1743 = vsel %vm614, %v1731, 0.0
      %v1744 = vadd.f32 %v1742, %v1743
      %v1745 = vsel %vm614, %v1732, 0.0
      %v1746 = vadd.f32 %v1744, %v1745
      %v1747 = vsel %vm614, %v1733, 0.0
      %v1748 = vadd.f32 %v1746, %v1747
      %1749 = vadd.xlane.f32.xlu0 %v1748
      %v1750 = vpop.xlane.xlu0 %1749
      %v1751 = vrot.slane %v1750, 4
      %v1752 = vadd.f32 %v1750, %v1751
      %v1753 = vrot.slane %v1752, 2
      %v1754 = vadd.f32 %v1752, %v1753
      %v1755 = vrot.slane %v1754, 1
      %v1756 = vadd.f32 %v1754, %v1755
      %s1757 = vtos %v1756
      %v1758 = vrcp.pop 2048.0
      %v1759 = vmul.f32 2048.0, %v1758
      %v1760 = vsub.f32 1.0, %v1759
      %v1761 = vmul.f32 %v1758, %v1760
      %v1762 = vadd.f32 %v1758, %v1761
      %vm1763 = vweird.f32 %v1758
      %v1764 = vsel %vm1763, %v1758, %v1762
      %s1765 = vtos %v1764
      %s1766 = smul.f32 %s1757, %s1765
      %s1767 = sadd.f32 %s1766, 1e-05
      %v1768 = vstv %s1767
      %v1769 = vrsqrt.pop %v1768
      %v1770 = vmul.f32 %v1769, %v1768
      %v1771 = vmul.f32 %v1770, %v1769
      %v1772 = vmul.f32 0.5, %v1771
      %v1773 = vsub.f32 1.5, %v1772
      %v1774 = vmul.f32 %v1769, %v1773
      %vm1775 = vweird.f32 %v1768
      %vm1776 = vweird.f32 %v1769
      %vm1777 = vmor %vm1775, %vm1776
      %v1778 = vsel %vm1777, %v1769, %v1774
      %s1779 = vtos %v1778
      %v1780 = vstv %s1779
      %v1781 = vmul.f32 %v1718, %v1780
      %v1782 = vmul.f32 %v1719, %v1780
      %v1783 = vmul.f32 %v1720, %v1780
      %v1784 = vmul.f32 %v1721, %v1780
      %v1785 = vmul.f32 %v1722, %v1780
      %v1786 = vmul.f32 %v1723, %v1780
      %v1787 = vmul.f32 %v1724, %v1780
      %v1788 = vmul.f32 %v1725, %v1780
      %v1789 = vld [vmem:[%s17] sm:$0x1]
      %v1791 = vperm.slane %v1789, 0
      %v1793 = vmul.f32 %v1781, %v1791
      %v1794 = vmul.f32 %v1782, %v1791
      %v1795 = vmul.f32 %v1783, %v1791
      %v1796 = vmul.f32 %v1784, %v1791
      %v1797 = vmul.f32 %v1785, %v1791
      %v1798 = vmul.f32 %v1786, %v1791
      %v1799 = vmul.f32 %v1787, %v1791
      %v1800 = vmul.f32 %v1788, %v1791
      %v1801 = vld [vmem:[%s18] sm:$0x1]
      %v1803 = vperm.slane %v1801, 0
      %v1805 = vadd.f32 %v1793, %v1803
      %v1806 = vadd.f32 %v1794, %v1803
      %v1807 = vadd.f32 %v1795, %v1803
      %v1808 = vadd.f32 %v1796, %v1803
      %v1809 = vadd.f32 %v1797, %v1803
      %v1810 = vadd.f32 %v1798, %v1803
      %v1811 = vadd.f32 %v1799, %v1803
      %v1812 = vadd.f32 %v1800, %v1803
      %1813 = vst.msk [vmem:[%s604] sm:$0xff] %vm614, %v1805
      %1814 = vst.msk [vmem:[%s604 + $0x8] sm:$0xff] %vm614, %v1806
      %1815 = vst.msk [vmem:[%s604 + $0x10] sm:$0xff] %vm614, %v1807
      %1816 = vst.msk [vmem:[%s604 + $0x18] sm:$0xff] %vm614, %v1808
      %1817 = vst.msk [vmem:[%s604 + $0x20] sm:$0xff] %vm614, %v1809
      %1818 = vst.msk [vmem:[%s604 + $0x28] sm:$0xff] %vm614, %v1810
      %1819 = vst.msk [vmem:[%s604 + $0x30] sm:$0xff] %vm614, %v1811
      %1820 = vst.msk [vmem:[%s604 + $0x38] sm:$0xff] %vm614, %v1812
      %p1821 = scmp.lt.s32.totalorder %s32, 1
      %s1822 = scalar_select %p1821, %s32, 1
      %s1823 = smul.addr %s1822, 8
      %s1824 = smul.addr %s1823, 8
      %s1825 = scalar_lea.vmem %s19, %s1824
      // Predicated region
      $region97: #{vision_tower_forward.10} parent=95 // pred_check
        %p1826 = pneg %p454
      $region98: #{vision_tower_forward.10} parent=95 // pred_check_branch
        %1828 = sbr.rel (%p1826) target = $region100
      $region99: #{vision_tower_forward.10} parent=95 // pred_region
        _
      $region100: #{vision_tower_forward.10} parent=95 // pred_fallthru
        _
    $region96: #{vision_tower_forward.10} parent=5 // pred_fallthru
      _
    %p1829 = scmp.le.s32.totalorder 2, %s27
    // Predicated region
    $region101: #{vision_tower_forward.10} parent=5 // pred_check
      %p1830 = pneg %p1829
    $region102: #{vision_tower_forward.10} parent=5 // pred_check_branch
      %1832 = sbr.rel (%p1830) target = $region104
    $region103: #{vision_tower_forward.10} parent=5 // pred_region
      %s1833 = ssub.s32 %s27, 2
      // Predicated region
      $region105: #{vision_tower_forward.10} parent=103 // pred_check
        %p1834 = pneg %p460
      $region106: #{vision_tower_forward.10} parent=103 // pred_check_branch
        %1836 = sbr.rel (%p1834) target = $region108
      $region107: #{vision_tower_forward.10} parent=103 // pred_region
        %p1837 = scmp.lt.s32.totalorder %s33, 1
        %s1838 = scalar_select %p1837, %s33, 1
        %s1839 = smul.addr %s1838, 8
        %s1840 = smul.addr %s1839, 8
        %s1841 = scalar_lea.vmem %s19, %s1840
      $region108: #{vision_tower_forward.10} parent=103 // pred_fallthru
        _
    $region104: #{vision_tower_forward.10} parent=5 // pred_fallthru
      _
  $region6: #{vision_tower_forward.10} parent=0 // loop_footer
    %s31 = sadd.s32 1, %s27
  $region7: #{vision_tower_forward.10} parent=0 // loop_footer_branch
    %26 = sbr.rel target = $region3
  $region8: #{vision_tower_forward.10} parent=0 // loop_exit
    _

</llo_original>
